<compile_context>
chip_gen: v5e
topology: v5e:2x2
jax: 0.10.0
libtpu: 0.0.40
codegen_flags: <defaults>
</compile_context>

<pallas_src>
import functools

import jax
import jax.numpy as jnp
from jax import lax
from jax.experimental import pallas as pl
from jax.experimental.pallas import tpu as pltpu

NEG_SLOPE = 0.01  # torch.nn.functional.leaky_relu default


def _round_up(v, m):
    return (v + m - 1) // m * m


def _choose_wp(H, W):
    """Smallest padded row width >= W+2 with H*Wp % 128 == 0 (lane-dense
    stores); falls back to W+2 (still correct, just masked stores)."""
    base = W + 2
    for wp in range(base, base + 33):
        if (H * wp) % 128 == 0:
            return wp
    return base


def _residual_block_kernel(x_ref, mask_ref, w1_ref, b1_ref, w2_ref, b2_ref,
                           w3_ref, b3_ref, o_ref, h1_ref, h2_ref, slab_ref,
                           *, H, Wp):
    # x_ref : (D+2, Cin_p,  (H+3)*Wp)  zero-padded bf16 input, one batch elem
    # w*_ref: (Cout_p, 27*Cs)          im2col-packed bf16 weights
    # b*_ref: (Cout_p, L) f32          pre-broadcast biases
    # mask  : (Cout_p, L) f32          1.0 valid columns, 0.0 wrap/pad columns
    # o_ref : (D, Cout_p, L) f32       flattened output (wrap cols = garbage)
    # h1/h2 : (D+2, Cout_p, (H+3)*Wp)  padded bf16 VMEM scratch
    # slab  : (27*(Cin_p+Cout_p), L)   bf16 im2col scratch
    Dp2, Cin_p, Pflat = x_ref.shape
    D = Dp2 - 2
    Cout_p = o_ref.shape[1]
    L = H * Wp
    K1 = 27 * Cin_p
    K2 = 27 * Cout_p
    pad_lo = Wp + 1                       # leading halo lanes of a plane
    pad_hi = Pflat - pad_lo - L           # trailing halo lanes of a plane

    f32 = jnp.float32

    # Hoisted loop invariants (no per-iteration broadcast_in_dim).
    interior = mask_ref[...]
    b1 = b1_ref[...]
    b2 = b2_ref[...]
    b3 = b3_ref[...]

    def leaky(v):
        return jnp.where(v >= 0, v, NEG_SLOPE * v)

    # Zero ONLY the scratch halo (never touched by the stage stores below).
    # Re-done every grid step: scratch persists across steps and the batch
    # axis may be split across TensorCores.
    zplane = jnp.zeros((Cout_p, Pflat), h1_ref.dtype)
    h1_ref[0] = zplane
    h1_ref[Dp2 - 1] = zplane
    h2_ref[0] = zplane
    h2_ref[Dp2 - 1] = zplane
    zlo = jnp.zeros((Cout_p, pad_lo), h1_ref.dtype)
    zhi = jnp.zeros((Cout_p, pad_hi), h1_ref.dtype)

    def build_slab(src_ref, d, cs, row0):
        # im2col: copy the 27 shifted (cs, L) windows of planes d..d+2 into
        # slab rows [row0, row0 + 27*cs); tap order t = (kd*3+kh)*3+kw.
        for kd in range(3):
            for kh in range(3):
                for kw in range(3):
                    t = (kd * 3 + kh) * 3 + kw
                    slab_ref[pl.ds(row0 + t * cs, cs), :] = (
                        src_ref[d + kd, :, pl.ds(kh * Wp + kw, L)])

    def store_padded(dst_ref, d, val):
        # Interior (masked) store plus the per-plane halo zeroing.
        dst_ref[1 + d, :, pl.ds(0, pad_lo)] = zlo
        dst_ref[1 + d, :, pl.ds(pad_lo, L)] = val.astype(dst_ref.dtype)
        dst_ref[1 + d, :, pl.ds(pad_lo + L, pad_hi)] = zhi

    # Stage 1: h1 = leaky_relu(conv1(x))          -> zero-padded scratch
    @pl.loop(0, D)
    def _(d):
        build_slab(x_ref, d, Cin_p, 0)
        acc = jnp.dot(w1_ref[...], slab_ref[pl.ds(0, K1), :],
                      preferred_element_type=f32)
        store_padded(h1_ref, d, leaky(acc + b1) * interior)

    # Stage 2: h2 = conv2(h1)  (no activation)    -> zero-padded scratch
    @pl.loop(0, D)
    def _(d):
        build_slab(h1_ref, d, Cout_p, 0)
        acc = jnp.dot(w2_ref[...], slab_ref[pl.ds(0, K2), :],
                      preferred_element_type=f32)
        store_padded(h2_ref, d, (acc + b2) * interior)

    # Stage 3: out = leaky_relu(conv3(concat([x, h2])))
    # (concat folded into the stacked slab + stacked weight w3)
    @pl.loop(0, D)
    def _(d):
        build_slab(x_ref, d, Cin_p, 0)
        build_slab(h2_ref, d, Cout_p, K1)
        acc = jnp.dot(w3_ref[...], slab_ref[...],
                      preferred_element_type=f32)
        o_ref[d] = leaky(acc + b3).astype(o_ref.dtype)


def residual_block(x, params):
    """ResidualBlock forward.  x: (N, Cin, D, H, W) NCDHW (PyTorch layout)."""
    N, Cin, D, H, W = x.shape
    Cout = params["conv1_w"].shape[0]
    Cin_p = _round_up(Cin, 8)
    Cout_p = _round_up(Cout, 8)
    Wp = _choose_wp(H, W)
    Pflat = (H + 3) * Wp
    L = H * Wp
    K1, K2 = 27 * Cin_p, 27 * Cout_p

    # ---- XLA-side layout glue: NCDHW -> (N, D+2, Cin_p, (H+3)*Wp) bf16.
    # TODO(synk): on HBM-bound chips (v5e) fold this pad/transpose and the
    # final un-pad into the kernel (memory_space=pl.ANY + in-kernel relayout).
    xt = jnp.transpose(x, (0, 2, 1, 3, 4))                     # (N, D, Cin, H, W)
    xp = jnp.pad(xt, ((0, 0), (1, 1), (0, Cin_p - Cin),
                      (1, 2), (1, Wp - W - 1))).astype(jnp.bfloat16)
    xp = xp.reshape(N, D + 2, Cin_p, Pflat)

    # ---- weights: (Co, Ci, 3,3,3) -> (Cout_p, 27*Ci_p) bf16 in the slab row
    # order (tap-major t = (kd*3+kh)*3+kw, channel-minor).
    def taps(w, co_p, ci_p):
        co, ci = w.shape[0], w.shape[1]
        w = jnp.pad(w, ((0, co_p - co), (0, ci_p - ci)) + ((0, 0),) * 3)
        return jnp.transpose(w, (0, 2, 3, 4, 1)).reshape(co_p, 27 * ci_p)

    w1 = taps(params["conv1_w"], Cout_p, Cin_p).astype(jnp.bfloat16)
    w2 = taps(params["conv2_w"], Cout_p, Cout_p).astype(jnp.bfloat16)
    wa = params["addition_w"]
    w3 = jnp.concatenate([taps(wa[:, :Cin], Cout_p, Cin_p),    # concat([x, h2])
                          taps(wa[:, Cin:], Cout_p, Cout_p)],  # folded into w3
                         axis=1).astype(jnp.bfloat16)

    def bias_full(b):  # pre-broadcast so the kernel never broadcasts in-loop
        b = jnp.pad(b, (0, Cout_p - Cout)).astype(jnp.float32)
        return jnp.broadcast_to(b[:, None], (Cout_p, L))

    b1 = bias_full(params["conv1_b"])
    b2 = bias_full(params["conv2_b"])
    b3 = bias_full(params["addition_b"])

    # 1.0 on the W valid columns of each flattened row, 0.0 on wrap/pad cols.
    interior = ((jnp.arange(L, dtype=jnp.int32) % Wp) < W).astype(jnp.float32)
    interior = jnp.broadcast_to(interior[None, :], (Cout_p, L))

    kernel = functools.partial(_residual_block_kernel, H=H, Wp=Wp)

    flops = 2 * N * D * L * Cout_p * 2 * (K1 + K2)
    bytes_accessed = (xp.size * 2 + N * D * Cout_p * L * 4
                      + (w1.size + w2.size + w3.size) * 2
                      + 4 * Cout_p * L * 4)
    vmem_est = (2 * (D + 2) * Cin_p * Pflat * 2          # input block (dbl buf)
                + 2 * D * Cout_p * L * 4                 # output block (dbl buf)
                + 2 * (D + 2) * Cout_p * Pflat * 2       # h1 + h2 scratch
                + (K1 + K2) * L * 2                      # im2col slab
                + (w1.size + w2.size + w3.size) * 2
                + 4 * Cout_p * L * 4 + (1 << 20))
    vmem_limit = int(min(max(2 * vmem_est, 32 * 2**20), 64 * 2**20))

    # TODO(synk): for large volumes (e.g. D=H=W=64) tile D into slabs with a
    # 2-plane halo / rolling 3-plane window so scratch is O(planes) not O(D),
    # and add it as a second "parallel" grid axis so both v7x cores get work
    # when N is small.
    out_flat = pl.pallas_call(
        kernel,
        out_shape=jax.ShapeDtypeStruct((N, D, Cout_p, L), jnp.float32),
        grid=(N,),
        in_specs=[
            pl.BlockSpec((None, D + 2, Cin_p, Pflat), lambda n: (n, 0, 0, 0)),
            pl.BlockSpec((Cout_p, L), lambda n: (0, 0)),
            pl.BlockSpec((Cout_p, K1), lambda n: (0, 0)),
            pl.BlockSpec((Cout_p, L), lambda n: (0, 0)),
            pl.BlockSpec((Cout_p, K2), lambda n: (0, 0)),
            pl.BlockSpec((Cout_p, L), lambda n: (0, 0)),
            pl.BlockSpec((Cout_p, K1 + K2), lambda n: (0, 0)),
            pl.BlockSpec((Cout_p, L), lambda n: (0, 0)),
        ],
        out_specs=pl.BlockSpec((None, D, Cout_p, L), lambda n: (n, 0, 0, 0)),
        scratch_shapes=[
            pltpu.VMEM((D + 2, Cout_p, Pflat), jnp.bfloat16),   # padded h1
            pltpu.VMEM((D + 2, Cout_p, Pflat), jnp.bfloat16),   # padded h2
            pltpu.VMEM((K1 + K2, L), jnp.bfloat16),             # im2col slab
        ],
        compiler_params=pltpu.CompilerParams(
            dimension_semantics=("parallel",),
            vmem_limit_bytes=vmem_limit),
        cost_estimate=pl.CostEstimate(flops=flops, transcendentals=0,
                                      bytes_accessed=bytes_accessed),
    )(xp, interior, w1, b1, w2, b2, w3, b3)

    # (N, D, Cout_p, H*Wp) -> drop pad channels & wrap columns -> NCDHW.
    out = out_flat.reshape(N, D, Cout_p, H, Wp)[:, :, :Cout, :, :W]
    return jnp.transpose(out, (0, 2, 1, 3, 4))


# ----------------------------------------------------------------------------
# Pure-JAX reference (matches the PyTorch module).  operand_dtype=bfloat16
# mimics the kernel's MXU numerics (bf16 operands, f32 accumulation).
# ----------------------------------------------------------------------------
def residual_block_reference(x, params, operand_dtype=jnp.float32):
    def prep(v):
        return v.astype(operand_dtype).astype(jnp.float32)

    def conv(v, w, b):
        y = lax.conv_general_dilated(
            prep(v), prep(w), window_strides=(1, 1, 1), padding="SAME",
            dimension_numbers=("NCDHW", "OIDHW", "NCDHW"),
            precision=lax.Precision.HIGHEST)
        return y + b.reshape(1, -1, 1, 1, 1).astype(jnp.float32)

    def leaky(v):
        return jnp.where(v >= 0, v, NEG_SLOPE * v)

    h = leaky(conv(x, params["conv1_w"], params["conv1_b"]))
    h = conv(h, params["conv2_w"], params["conv2_b"])
    h = conv(jnp.concatenate([x, h], axis=1),
             params["addition_w"], params["addition_b"])
    return leaky(h)


# ----------------------------------------------------------------------------
# Deterministic synthetic parameters (PyTorch Conv3d weight layout OIDHW).
# ----------------------------------------------------------------------------
def init_residual_block(key, cin, cout):
    ks = jax.random.split(key, 6)

    def conv_init(kw_key, kb_key, ci, co):
        fan_in = ci * 27
        w = jax.random.normal(kw_key, (co, ci, 3, 3, 3), jnp.float32)
        w = w / jnp.sqrt(fan_in)
        b = jax.random.normal(kb_key, (co,), jnp.float32) * 0.1
        return w, b

    c1w, c1b = conv_init(ks[0], ks[1], cin, cout)
    c2w, c2b = conv_init(ks[2], ks[3], cout, cout)
    aw, ab = conv_init(ks[4], ks[5], cin + cout, cout)
    return dict(conv1_w=c1w, conv1_b=c1b,
                conv2_w=c2w, conv2_b=c2b,
                addition_w=aw, addition_b=ab)


# ----------------------------------------------------------------------------
if __name__ == "__main__":
    N, CIN, COUT = 2, 4, 8
    D = H = W = 16

    key = jax.random.PRNGKey(0)
    kx, kp = jax.random.split(key)

    x = jax.random.normal(kx, (N, CIN, D, H, W), jnp.float32)  # NCDHW
    params = init_residual_block(kp, CIN, COUT)

    run = jax.jit(residual_block)
    out = jax.block_until_ready(run(x, params))

    assert out.shape == (N, COUT, D, H, W), out.shape
    assert bool(jnp.all(jnp.isfinite(out)))

    # Tight check vs a reference with identical bf16-operand numerics.
    ref_bf16 = residual_block_reference(x, params, operand_dtype=jnp.bfloat16)
    err_bf16 = float(jnp.max(jnp.abs(out - ref_bf16)))
    assert err_bf16 < 1e-2, f"max abs err vs bf16-operand reference: {err_bf16}"

    # Loose sanity check vs the full-f32 reference (bf16 operand rounding only).
    ref_f32 = residual_block_reference(x, params, operand_dtype=jnp.float32)
    err_f32 = float(jnp.max(jnp.abs(out - ref_f32)))
    assert err_f32 < 2e-1, f"max abs err vs f32 reference: {err_f32}"

    print("KERNEL_OK")
</pallas_src>

<mosaic_0001>
module attributes {stable_mosaic.version = 11 : i64} {
  func.func @_residual_block_kernel(%arg0: i32, %arg1: memref<1x18x8x456xbf16, #tpu.memory_space<vmem>>, %arg2: memref<8x384xf32, #tpu.memory_space<vmem>>, %arg3: memref<8x216xbf16, #tpu.memory_space<vmem>>, %arg4: memref<8x384xf32, #tpu.memory_space<vmem>>, %arg5: memref<8x216xbf16, #tpu.memory_space<vmem>>, %arg6: memref<8x384xf32, #tpu.memory_space<vmem>>, %arg7: memref<8x432xbf16, #tpu.memory_space<vmem>>, %arg8: memref<8x384xf32, #tpu.memory_space<vmem>>, %arg9: memref<1x16x8x384xf32, #tpu.memory_space<vmem>>, %arg10: memref<18x8x456xbf16, #tpu.memory_space<vmem>>, %arg11: memref<18x8x456xbf16, #tpu.memory_space<vmem>>, %arg12: memref<432x384xbf16, #tpu.memory_space<vmem>>) attributes {dimension_semantics = [#tpu.dimension_semantics<parallel>], iteration_bounds = array<i64: 2>, scalar_prefetch = 0 : i64, scratch_operands = 3 : i64, tpu.core_type = #tpu.core_type<tc>, window_params = [{transform_indices = @transform_0, window_bounds = array<i64: 1, 18, 8, 456>}, {pipeline_mode = #tpu.pipeline_mode<synchronous>, transform_indices = @transform_1, window_bounds = array<i64: 8, 384>}, {pipeline_mode = #tpu.pipeline_mode<synchronous>, transform_indices = @transform_2, window_bounds = array<i64: 8, 216>}, {pipeline_mode = #tpu.pipeline_mode<synchronous>, transform_indices = @transform_3, window_bounds = array<i64: 8, 384>}, {pipeline_mode = #tpu.pipeline_mode<synchronous>, transform_indices = @transform_4, window_bounds = array<i64: 8, 216>}, {pipeline_mode = #tpu.pipeline_mode<synchronous>, transform_indices = @transform_5, window_bounds = array<i64: 8, 384>}, {pipeline_mode = #tpu.pipeline_mode<synchronous>, transform_indices = @transform_6, window_bounds = array<i64: 8, 432>}, {pipeline_mode = #tpu.pipeline_mode<synchronous>, transform_indices = @transform_7, window_bounds = array<i64: 8, 384>}, {transform_indices = @transform_8, window_bounds = array<i64: 1, 16, 8, 384>}]} {
    %c0 = arith.constant 0 : index
    %c0_0 = arith.constant 0 : index
    %0 = vector.load %arg2[%c0, %c0_0] : memref<8x384xf32, #tpu.memory_space<vmem>>, vector<8x384xf32>
    %c0_1 = arith.constant 0 : index
    %c0_2 = arith.constant 0 : index
    %1 = vector.load %arg4[%c0_1, %c0_2] : memref<8x384xf32, #tpu.memory_space<vmem>>, vector<8x384xf32>
    %c0_3 = arith.constant 0 : index
    %c0_4 = arith.constant 0 : index
    %2 = vector.load %arg6[%c0_3, %c0_4] : memref<8x384xf32, #tpu.memory_space<vmem>>, vector<8x384xf32>
    %c0_5 = arith.constant 0 : index
    %c0_6 = arith.constant 0 : index
    %3 = vector.load %arg8[%c0_5, %c0_6] : memref<8x384xf32, #tpu.memory_space<vmem>>, vector<8x384xf32>
    %cst = arith.constant 0.000000e+00 : bf16
    %4 = vector.broadcast %cst : bf16 to vector<8x456xbf16>
    %c0_7 = arith.constant 0 : index
    %c0_8 = arith.constant 0 : index
    %c0_9 = arith.constant 0 : index
    %5 = vector.load %arg10[%c0_7, %c0_8, %c0_9] : memref<18x8x456xbf16, #tpu.memory_space<vmem>>, vector<1x8x456xbf16>
    %6 = vector.shape_cast %5 : vector<1x8x456xbf16> to vector<8x456xbf16>
    %7 = vector.shape_cast %4 : vector<8x456xbf16> to vector<1x8x456xbf16>
    tpu.vector_store %arg10[%c0_7, %c0_8, %c0_9], %7 {strides = array<i32>} : memref<18x8x456xbf16, #tpu.memory_space<vmem>>, vector<1x8x456xbf16>,
    %c17 = arith.constant 17 : index
    %c0_10 = arith.constant 0 : index
    %c0_11 = arith.constant 0 : index
    %8 = vector.load %arg10[%c17, %c0_10, %c0_11] : memref<18x8x456xbf16, #tpu.memory_space<vmem>>, vector<1x8x456xbf16>
    %9 = vector.shape_cast %8 : vector<1x8x456xbf16> to vector<8x456xbf16>
    %10 = vector.shape_cast %4 : vector<8x456xbf16> to vector<1x8x456xbf16>
    tpu.vector_store %arg10[%c17, %c0_10, %c0_11], %10 {strides = array<i32>} : memref<18x8x456xbf16, #tpu.memory_space<vmem>>, vector<1x8x456xbf16>,
    %c0_12 = arith.constant 0 : index
    %c0_13 = arith.constant 0 : index
    %c0_14 = arith.constant 0 : index
    %11 = vector.load %arg11[%c0_12, %c0_13, %c0_14] : memref<18x8x456xbf16, #tpu.memory_space<vmem>>, vector<1x8x456xbf16>
    %12 = vector.shape_cast %11 : vector<1x8x456xbf16> to vector<8x456xbf16>
    %13 = vector.shape_cast %4 : vector<8x456xbf16> to vector<1x8x456xbf16>
    tpu.vector_store %arg11[%c0_12, %c0_13, %c0_14], %13 {strides = array<i32>} : memref<18x8x456xbf16, #tpu.memory_space<vmem>>, vector<1x8x456xbf16>,
    %c17_15 = arith.constant 17 : index
    %c0_16 = arith.constant 0 : index
    %c0_17 = arith.constant 0 : index
    %14 = vector.load %arg11[%c17_15, %c0_16, %c0_17] : memref<18x8x456xbf16, #tpu.memory_space<vmem>>, vector<1x8x456xbf16>
    %15 = vector.shape_cast %14 : vector<1x8x456xbf16> to vector<8x456xbf16>
    %16 = vector.shape_cast %4 : vector<8x456xbf16> to vector<1x8x456xbf16>
    tpu.vector_store %arg11[%c17_15, %c0_16, %c0_17], %16 {strides = array<i32>} : memref<18x8x456xbf16, #tpu.memory_space<vmem>>, vector<1x8x456xbf16>,
    %cst_18 = arith.constant 0.000000e+00 : bf16
    %17 = vector.broadcast %cst_18 : bf16 to vector<8x25xbf16>
    %cst_19 = arith.constant 0.000000e+00 : bf16
    %18 = vector.broadcast %cst_19 : bf16 to vector<8x47xbf16>
    %c0_i32 = arith.constant 0 : i32
    %c16_i32 = arith.constant 16 : i32
    %19 = arith.addi %c0_i32, %c16_i32 : i32
    %c1_i32 = arith.constant 1 : i32
    scf.for %arg13 = %c0_i32 to %19 step %c1_i32  : i32 {
      %c1_i32_29 = arith.constant 1 : i32
      %22 = arith.muli %arg13, %c1_i32_29 : i32
      %c0_i32_30 = arith.constant 0 : i32
      %23 = arith.addi %c0_i32_30, %22 : i32
      %c0_i32_31 = arith.constant 0 : i32
      %24 = arith.addi %23, %c0_i32_31 : i32
      %c0_32 = arith.constant 0 : index
      %25 = arith.index_cast %24 : i32 to index
      %c0_33 = arith.constant 0 : index
      %c0_34 = arith.constant 0 : index
      %26 = vector.load %arg1[%c0_32, %25, %c0_33, %c0_34] : memref<1x18x8x456xbf16, #tpu.memory_space<vmem>>, vector<1x1x8x384xbf16>
      %27 = vector.shape_cast %26 : vector<1x1x8x384xbf16> to vector<8x384xbf16>
      %c0_35 = arith.constant 0 : index
      %c0_36 = arith.constant 0 : index
      %28 = vector.load %arg12[%c0_35, %c0_36] : memref<432x384xbf16, #tpu.memory_space<vmem>>, vector<8x384xbf16>
      tpu.vector_store %arg12[%c0_35, %c0_36], %27 {strides = array<i32>} : memref<432x384xbf16, #tpu.memory_space<vmem>>, vector<8x384xbf16>,
      %c0_i32_37 = arith.constant 0 : i32
      %29 = arith.addi %23, %c0_i32_37 : i32
      %c0_38 = arith.constant 0 : index
      %30 = arith.index_cast %29 : i32 to index
      %c0_39 = arith.constant 0 : index
      %c1 = arith.constant 1 : index
      %31 = vector.load %arg1[%c0_38, %30, %c0_39, %c1] : memref<1x18x8x456xbf16, #tpu.memory_space<vmem>>, vector<1x1x8x384xbf16>
      %32 = vector.shape_cast %31 : vector<1x1x8x384xbf16> to vector<8x384xbf16>
      %c8 = arith.constant 8 : index
      %c0_40 = arith.constant 0 : index
      %33 = vector.load %arg12[%c8, %c0_40] : memref<432x384xbf16, #tpu.memory_space<vmem>>, vector<8x384xbf16>
      tpu.vector_store %arg12[%c8, %c0_40], %32 {strides = array<i32>} : memref<432x384xbf16, #tpu.memory_space<vmem>>, vector<8x384xbf16>,
      %c0_i32_41 = arith.constant 0 : i32
      %34 = arith.addi %23, %c0_i32_41 : i32
      %c0_42 = arith.constant 0 : index
      %35 = arith.index_cast %34 : i32 to index
      %c0_43 = arith.constant 0 : index
      %c2 = arith.constant 2 : index
      %36 = vector.load %arg1[%c0_42, %35, %c0_43, %c2] : memref<1x18x8x456xbf16, #tpu.memory_space<vmem>>, vector<1x1x8x384xbf16>
      %37 = vector.shape_cast %36 : vector<1x1x8x384xbf16> to vector<8x384xbf16>
      %c16 = arith.constant 16 : index
      %c0_44 = arith.constant 0 : index
      %38 = vector.load %arg12[%c16, %c0_44] : memref<432x384xbf16, #tpu.memory_space<vmem>>, vector<8x384xbf16>
      tpu.vector_store %arg12[%c16, %c0_44], %37 {strides = array<i32>} : memref<432x384xbf16, #tpu.memory_space<vmem>>, vector<8x384xbf16>,
      %c0_i32_45 = arith.constant 0 : i32
      %39 = arith.addi %23, %c0_i32_45 : i32
      %c0_46 = arith.constant 0 : index
      %40 = arith.index_cast %39 : i32 to index
      %c0_47 = arith.constant 0 : index
      %c24 = arith.constant 24 : index
      %41 = vector.load %arg1[%c0_46, %40, %c0_47, %c24] : memref<1x18x8x456xbf16, #tpu.memory_space<vmem>>, vector<1x1x8x384xbf16>
      %42 = vector.shape_cast %41 : vector<1x1x8x384xbf16> to vector<8x384xbf16>
      %c24_48 = arith.constant 24 : index
      %c0_49 = arith.constant 0 : index
      %43 = vector.load %arg12[%c24_48, %c0_49] : memref<432x384xbf16, #tpu.memory_space<vmem>>, vector<8x384xbf16>
      tpu.vector_store %arg12[%c24_48, %c0_49], %42 {strides = array<i32>} : memref<432x384xbf16, #tpu.memory_space<vmem>>, vector<8x384xbf16>,
      %c0_i32_50 = arith.constant 0 : i32
      %44 = arith.addi %23, %c0_i32_50 : i32
      %c0_51 = arith.constant 0 : index
      %45 = arith.index_cast %44 : i32 to index
      %c0_52 = arith.constant 0 : index
      %c25 = arith.constant 25 : index
      %46 = vector.load %arg1[%c0_51, %45, %c0_52, %c25] : memref<1x18x8x456xbf16, #tpu.memory_space<vmem>>, vector<1x1x8x384xbf16>
      %47 = vector.shape_cast %46 : vector<1x1x8x384xbf16> to vector<8x384xbf16>
      %c32 = arith.constant 32 : index
      %c0_53 = arith.constant 0 : index
      %48 = vector.load %arg12[%c32, %c0_53] : memref<432x384xbf16, #tpu.memory_space<vmem>>, vector<8x384xbf16>
      tpu.vector_store %arg12[%c32, %c0_53], %47 {strides = array<i32>} : memref<432x384xbf16, #tpu.memory_space<vmem>>, vector<8x384xbf16>,
      %c0_i32_54 = arith.constant 0 : i32
      %49 = arith.addi %23, %c0_i32_54 : i32
      %c0_55 = arith.constant 0 : index
      %50 = arith.index_cast %49 : i32 to index
      %c0_56 = arith.constant 0 : index
      %c26 = arith.constant 26 : index
      %51 = vector.load %arg1[%c0_55, %50, %c0_56, %c26] : memref<1x18x8x456xbf16, #tpu.memory_space<vmem>>, vector<1x1x8x384xbf16>
      %52 = vector.shape_cast %51 : vector<1x1x8x384xbf16> to vector<8x384xbf16>
      %c40 = arith.constant 40 : index
      %c0_57 = arith.constant 0 : index
      %53 = vector.load %arg12[%c40, %c0_57] : memref<432x384xbf16, #tpu.memory_space<vmem>>, vector<8x384xbf16>
      tpu.vector_store %arg12[%c40, %c0_57], %52 {strides = array<i32>} : memref<432x384xbf16, #tpu.memory_space<vmem>>, vector<8x384xbf16>,
      %c0_i32_58 = arith.constant 0 : i32
      %54 = arith.addi %23, %c0_i32_58 : i32
      %c0_59 = arith.constant 0 : index
      %55 = arith.index_cast %54 : i32 to index
      %c0_60 = arith.constant 0 : index
      %c48 = arith.constant 48 : index
      %56 = vector.load %arg1[%c0_59, %55, %c0_60, %c48] : memref<1x18x8x456xbf16, #tpu.memory_space<vmem>>, vector<1x1x8x384xbf16>
      %57 = vector.shape_cast %56 : vector<1x1x8x384xbf16> to vector<8x384xbf16>
      %c48_61 = arith.constant 48 : index
      %c0_62 = arith.constant 0 : index
      %58 = vector.load %arg12[%c48_61, %c0_62] : memref<432x384xbf16, #tpu.memory_space<vmem>>, vector<8x384xbf16>
      tpu.vector_store %arg12[%c48_61, %c0_62], %57 {strides = array<i32>} : memref<432x384xbf16, #tpu.memory_space<vmem>>, vector<8x384xbf16>,
      %c0_i32_63 = arith.constant 0 : i32
      %59 = arith.addi %23, %c0_i32_63 : i32
      %c0_64 = arith.constant 0 : index
      %60 = arith.index_cast %59 : i32 to index
      %c0_65 = arith.constant 0 : index
      %c49 = arith.constant 49 : index
      %61 = vector.load %arg1[%c0_64, %60, %c0_65, %c49] : memref<1x18x8x456xbf16, #tpu.memory_space<vmem>>, vector<1x1x8x384xbf16>
      %62 = vector.shape_cast %61 : vector<1x1x8x384xbf16> to vector<8x384xbf16>
      %c56 = arith.constant 56 : index
      %c0_66 = arith.constant 0 : index
      %63 = vector.load %arg12[%c56, %c0_66] : memref<432x384xbf16, #tpu.memory_space<vmem>>, vector<8x384xbf16>
      tpu.vector_store %arg12[%c56, %c0_66], %62 {strides = array<i32>} : memref<432x384xbf16, #tpu.memory_space<vmem>>, vector<8x384xbf16>,
      %c0_i32_67 = arith.constant 0 : i32
      %64 = arith.addi %23, %c0_i32_67 : i32
      %c0_68 = arith.constant 0 : index
      %65 = arith.index_cast %64 : i32 to index
      %c0_69 = arith.constant 0 : index
      %c50 = arith.constant 50 : index
      %66 = vector.load %arg1[%c0_68, %65, %c0_69, %c50] : memref<1x18x8x456xbf16, #tpu.memory_space<vmem>>, vector<1x1x8x384xbf16>
      %67 = vector.shape_cast %66 : vector<1x1x8x384xbf16> to vector<8x384xbf16>
      %c64 = arith.constant 64 : index
      %c0_70 = arith.constant 0 : index
      %68 = vector.load %arg12[%c64, %c0_70] : memref<432x384xbf16, #tpu.memory_space<vmem>>, vector<8x384xbf16>
      tpu.vector_store %arg12[%c64, %c0_70], %67 {strides = array<i32>} : memref<432x384xbf16, #tpu.memory_space<vmem>>, vector<8x384xbf16>,
      %c1_i32_71 = arith.constant 1 : i32
      %69 = arith.addi %23, %c1_i32_71 : i32
      %c0_72 = arith.constant 0 : index
      %70 = arith.index_cast %69 : i32 to index
      %c0_73 = arith.constant 0 : index
      %c0_74 = arith.constant 0 : index
      %71 = vector.load %arg1[%c0_72, %70, %c0_73, %c0_74] : memref<1x18x8x456xbf16, #tpu.memory_space<vmem>>, vector<1x1x8x384xbf16>
      %72 = vector.shape_cast %71 : vector<1x1x8x384xbf16> to vector<8x384xbf16>
      %c72 = arith.constant 72 : index
      %c0_75 = arith.constant 0 : index
      %73 = vector.load %arg12[%c72, %c0_75] : memref<432x384xbf16, #tpu.memory_space<vmem>>, vector<8x384xbf16>
      tpu.vector_store %arg12[%c72, %c0_75], %72 {strides = array<i32>} : memref<432x384xbf16, #tpu.memory_space<vmem>>, vector<8x384xbf16>,
      %c1_i32_76 = arith.constant 1 : i32
      %74 = arith.addi %23, %c1_i32_76 : i32
      %c0_77 = arith.constant 0 : index
      %75 = arith.index_cast %74 : i32 to index
      %c0_78 = arith.constant 0 : index
      %c1_79 = arith.constant 1 : index
      %76 = vector.load %arg1[%c0_77, %75, %c0_78, %c1_79] : memref<1x18x8x456xbf16, #tpu.memory_space<vmem>>, vector<1x1x8x384xbf16>
      %77 = vector.shape_cast %76 : vector<1x1x8x384xbf16> to vector<8x384xbf16>
      %c80 = arith.constant 80 : index
      %c0_80 = arith.constant 0 : index
      %78 = vector.load %arg12[%c80, %c0_80] : memref<432x384xbf16, #tpu.memory_space<vmem>>, vector<8x384xbf16>
      tpu.vector_store %arg12[%c80, %c0_80], %77 {strides = array<i32>} : memref<432x384xbf16, #tpu.memory_space<vmem>>, vector<8x384xbf16>,
      %c1_i32_81 = arith.constant 1 : i32
      %79 = arith.addi %23, %c1_i32_81 : i32
      %c0_82 = arith.constant 0 : index
      %80 = arith.index_cast %79 : i32 to index
      %c0_83 = arith.constant 0 : index
      %c2_84 = arith.constant 2 : index
      %81 = vector.load %arg1[%c0_82, %80, %c0_83, %c2_84] : memref<1x18x8x456xbf16, #tpu.memory_space<vmem>>, vector<1x1x8x384xbf16>
      %82 = vector.shape_cast %81 : vector<1x1x8x384xbf16> to vector<8x384xbf16>
      %c88 = arith.constant 88 : index
      %c0_85 = arith.constant 0 : index
      %83 = vector.load %arg12[%c88, %c0_85] : memref<432x384xbf16, #tpu.memory_space<vmem>>, vector<8x384xbf16>
      tpu.vector_store %arg12[%c88, %c0_85], %82 {strides = array<i32>} : memref<432x384xbf16, #tpu.memory_space<vmem>>, vector<8x384xbf16>,
      %c1_i32_86 = arith.constant 1 : i32
      %84 = arith.addi %23, %c1_i32_86 : i32
      %c0_87 = arith.constant 0 : index
      %85 = arith.index_cast %84 : i32 to index
      %c0_88 = arith.constant 0 : index
      %c24_89 = arith.constant 24 : index
      %86 = vector.load %arg1[%c0_87, %85, %c0_88, %c24_89] : memref<1x18x8x456xbf16, #tpu.memory_space<vmem>>, vector<1x1x8x384xbf16>
      %87 = vector.shape_cast %86 : vector<1x1x8x384xbf16> to vector<8x384xbf16>
      %c96 = arith.constant 96 : index
      %c0_90 = arith.constant 0 : index
      %88 = vector.load %arg12[%c96, %c0_90] : memref<432x384xbf16, #tpu.memory_space<vmem>>, vector<8x384xbf16>
      tpu.vector_store %arg12[%c96, %c0_90], %87 {strides = array<i32>} : memref<432x384xbf16, #tpu.memory_space<vmem>>, vector<8x384xbf16>,
      %c1_i32_91 = arith.constant 1 : i32
      %89 = arith.addi %23, %c1_i32_91 : i32
      %c0_92 = arith.constant 0 : index
      %90 = arith.index_cast %89 : i32 to index
      %c0_93 = arith.constant 0 : index
      %c25_94 = arith.constant 25 : index
      %91 = vector.load %arg1[%c0_92, %90, %c0_93, %c25_94] : memref<1x18x8x456xbf16, #tpu.memory_space<vmem>>, vector<1x1x8x384xbf16>
      %92 = vector.shape_cast %91 : vector<1x1x8x384xbf16> to vector<8x384xbf16>
      %c104 = arith.constant 104 : index
      %c0_95 = arith.constant 0 : index
      %93 = vector.load %arg12[%c104, %c0_95] : memref<432x384xbf16, #tpu.memory_space<vmem>>, vector<8x384xbf16>
      tpu.vector_store %arg12[%c104, %c0_95], %92 {strides = array<i32>} : memref<432x384xbf16, #tpu.memory_space<vmem>>, vector<8x384xbf16>,
      %c1_i32_96 = arith.constant 1 : i32
      %94 = arith.addi %23, %c1_i32_96 : i32
      %c0_97 = arith.constant 0 : index
      %95 = arith.index_cast %94 : i32 to index
      %c0_98 = arith.constant 0 : index
      %c26_99 = arith.constant 26 : index
      %96 = vector.load %arg1[%c0_97, %95, %c0_98, %c26_99] : memref<1x18x8x456xbf16, #tpu.memory_space<vmem>>, vector<1x1x8x384xbf16>
      %97 = vector.shape_cast %96 : vector<1x1x8x384xbf16> to vector<8x384xbf16>
      %c112 = arith.constant 112 : index
      %c0_100 = arith.constant 0 : index
      %98 = vector.load %arg12[%c112, %c0_100] : memref<432x384xbf16, #tpu.memory_space<vmem>>, vector<8x384xbf16>
      tpu.vector_store %arg12[%c112, %c0_100], %97 {strides = array<i32>} : memref<432x384xbf16, #tpu.memory_space<vmem>>, vector<8x384xbf16>,
      %c1_i32_101 = arith.constant 1 : i32
      %99 = arith.addi %23, %c1_i32_101 : i32
      %c0_102 = arith.constant 0 : index
      %100 = arith.index_cast %99 : i32 to index
      %c0_103 = arith.constant 0 : index
      %c48_104 = arith.constant 48 : index
      %101 = vector.load %arg1[%c0_102, %100, %c0_103, %c48_104] : memref<1x18x8x456xbf16, #tpu.memory_space<vmem>>, vector<1x1x8x384xbf16>
      %102 = vector.shape_cast %101 : vector<1x1x8x384xbf16> to vector<8x384xbf16>
      %c120 = arith.constant 120 : index
      %c0_105 = arith.constant 0 : index
      %103 = vector.load %arg12[%c120, %c0_105] : memref<432x384xbf16, #tpu.memory_space<vmem>>, vector<8x384xbf16>
      tpu.vector_store %arg12[%c120, %c0_105], %102 {strides = array<i32>} : memref<432x384xbf16, #tpu.memory_space<vmem>>, vector<8x384xbf16>,
      %c1_i32_106 = arith.constant 1 : i32
      %104 = arith.addi %23, %c1_i32_106 : i32
      %c0_107 = arith.constant 0 : index
      %105 = arith.index_cast %104 : i32 to index
      %c0_108 = arith.constant 0 : index
      %c49_109 = arith.constant 49 : index
      %106 = vector.load %arg1[%c0_107, %105, %c0_108, %c49_109] : memref<1x18x8x456xbf16, #tpu.memory_space<vmem>>, vector<1x1x8x384xbf16>
      %107 = vector.shape_cast %106 : vector<1x1x8x384xbf16> to vector<8x384xbf16>
      %c128 = arith.constant 128 : index
      %c0_110 = arith.constant 0 : index
      %108 = vector.load %arg12[%c128, %c0_110] : memref<432x384xbf16, #tpu.memory_space<vmem>>, vector<8x384xbf16>
      tpu.vector_store %arg12[%c128, %c0_110], %107 {strides = array<i32>} : memref<432x384xbf16, #tpu.memory_space<vmem>>, vector<8x384xbf16>,
      %c1_i32_111 = arith.constant 1 : i32
      %109 = arith.addi %23, %c1_i32_111 : i32
      %c0_112 = arith.constant 0 : index
      %110 = arith.index_cast %109 : i32 to index
      %c0_113 = arith.constant 0 : index
      %c50_114 = arith.constant 50 : index
      %111 = vector.load %arg1[%c0_112, %110, %c0_113, %c50_114] : memref<1x18x8x456xbf16, #tpu.memory_space<vmem>>, vector<1x1x8x384xbf16>
      %112 = vector.shape_cast %111 : vector<1x1x8x384xbf16> to vector<8x384xbf16>
      %c136 = arith.constant 136 : index
      %c0_115 = arith.constant 0 : index
      %113 = vector.load %arg12[%c136, %c0_115] : memref<432x384xbf16, #tpu.memory_space<vmem>>, vector<8x384xbf16>
      tpu.vector_store %arg12[%c136, %c0_115], %112 {strides = array<i32>} : memref<432x384xbf16, #tpu.memory_space<vmem>>, vector<8x384xbf16>,
      %c2_i32 = arith.constant 2 : i32
      %114 = arith.addi %23, %c2_i32 : i32
      %c0_116 = arith.constant 0 : index
      %115 = arith.index_cast %114 : i32 to index
      %c0_117 = arith.constant 0 : index
      %c0_118 = arith.constant 0 : index
      %116 = vector.load %arg1[%c0_116, %115, %c0_117, %c0_118] : memref<1x18x8x456xbf16, #tpu.memory_space<vmem>>, vector<1x1x8x384xbf16>
      %117 = vector.shape_cast %116 : vector<1x1x8x384xbf16> to vector<8x384xbf16>
      %c144 = arith.constant 144 : index
      %c0_119 = arith.constant 0 : index
      %118 = vector.load %arg12[%c144, %c0_119] : memref<432x384xbf16, #tpu.memory_space<vmem>>, vector<8x384xbf16>
      tpu.vector_store %arg12[%c144, %c0_119], %117 {strides = array<i32>} : memref<432x384xbf16, #tpu.memory_space<vmem>>, vector<8x384xbf16>,
      %c2_i32_120 = arith.constant 2 : i32
      %119 = arith.addi %23, %c2_i32_120 : i32
      %c0_121 = arith.constant 0 : index
      %120 = arith.index_cast %119 : i32 to index
      %c0_122 = arith.constant 0 : index
      %c1_123 = arith.constant 1 : index
      %121 = vector.load %arg1[%c0_121, %120, %c0_122, %c1_123] : memref<1x18x8x456xbf16, #tpu.memory_space<vmem>>, vector<1x1x8x384xbf16>
      %122 = vector.shape_cast %121 : vector<1x1x8x384xbf16> to vector<8x384xbf16>
      %c152 = arith.constant 152 : index
      %c0_124 = arith.constant 0 : index
      %123 = vector.load %arg12[%c152, %c0_124] : memref<432x384xbf16, #tpu.memory_space<vmem>>, vector<8x384xbf16>
      tpu.vector_store %arg12[%c152, %c0_124], %122 {strides = array<i32>} : memref<432x384xbf16, #tpu.memory_space<vmem>>, vector<8x384xbf16>,
      %c2_i32_125 = arith.constant 2 : i32
      %124 = arith.addi %23, %c2_i32_125 : i32
      %c0_126 = arith.constant 0 : index
      %125 = arith.index_cast %124 : i32 to index
      %c0_127 = arith.constant 0 : index
      %c2_128 = arith.constant 2 : index
      %126 = vector.load %arg1[%c0_126, %125, %c0_127, %c2_128] : memref<1x18x8x456xbf16, #tpu.memory_space<vmem>>, vector<1x1x8x384xbf16>
      %127 = vector.shape_cast %126 : vector<1x1x8x384xbf16> to vector<8x384xbf16>
      %c160 = arith.constant 160 : index
      %c0_129 = arith.constant 0 : index
      %128 = vector.load %arg12[%c160, %c0_129] : memref<432x384xbf16, #tpu.memory_space<vmem>>, vector<8x384xbf16>
      tpu.vector_store %arg12[%c160, %c0_129], %127 {strides = array<i32>} : memref<432x384xbf16, #tpu.memory_space<vmem>>, vector<8x384xbf16>,
      %c2_i32_130 = arith.constant 2 : i32
      %129 = arith.addi %23, %c2_i32_130 : i32
      %c0_131 = arith.constant 0 : index
      %130 = arith.index_cast %129 : i32 to index
      %c0_132 = arith.constant 0 : index
      %c24_133 = arith.constant 24 : index
      %131 = vector.load %arg1[%c0_131, %130, %c0_132, %c24_133] : memref<1x18x8x456xbf16, #tpu.memory_space<vmem>>, vector<1x1x8x384xbf16>
      %132 = vector.shape_cast %131 : vector<1x1x8x384xbf16> to vector<8x384xbf16>
      %c168 = arith.constant 168 : index
      %c0_134 = arith.constant 0 : index
      %133 = vector.load %arg12[%c168, %c0_134] : memref<432x384xbf16, #tpu.memory_space<vmem>>, vector<8x384xbf16>
      tpu.vector_store %arg12[%c168, %c0_134], %132 {strides = array<i32>} : memref<432x384xbf16, #tpu.memory_space<vmem>>, vector<8x384xbf16>,
      %c2_i32_135 = arith.constant 2 : i32
      %134 = arith.addi %23, %c2_i32_135 : i32
      %c0_136 = arith.constant 0 : index
      %135 = arith.index_cast %134 : i32 to index
      %c0_137 = arith.constant 0 : index
      %c25_138 = arith.constant 25 : index
      %136 = vector.load %arg1[%c0_136, %135, %c0_137, %c25_138] : memref<1x18x8x456xbf16, #tpu.memory_space<vmem>>, vector<1x1x8x384xbf16>
      %137 = vector.shape_cast %136 : vector<1x1x8x384xbf16> to vector<8x384xbf16>
      %c176 = arith.constant 176 : index
      %c0_139 = arith.constant 0 : index
      %138 = vector.load %arg12[%c176, %c0_139] : memref<432x384xbf16, #tpu.memory_space<vmem>>, vector<8x384xbf16>
      tpu.vector_store %arg12[%c176, %c0_139], %137 {strides = array<i32>} : memref<432x384xbf16, #tpu.memory_space<vmem>>, vector<8x384xbf16>,
      %c2_i32_140 = arith.constant 2 : i32
      %139 = arith.addi %23, %c2_i32_140 : i32
      %c0_141 = arith.constant 0 : index
      %140 = arith.index_cast %139 : i32 to index
      %c0_142 = arith.constant 0 : index
      %c26_143 = arith.constant 26 : index
      %141 = vector.load %arg1[%c0_141, %140, %c0_142, %c26_143] : memref<1x18x8x456xbf16, #tpu.memory_space<vmem>>, vector<1x1x8x384xbf16>
      %142 = vector.shape_cast %141 : vector<1x1x8x384xbf16> to vector<8x384xbf16>
      %c184 = arith.constant 184 : index
      %c0_144 = arith.constant 0 : index
      %143 = vector.load %arg12[%c184, %c0_144] : memref<432x384xbf16, #tpu.memory_space<vmem>>, vector<8x384xbf16>
      tpu.vector_store %arg12[%c184, %c0_144], %142 {strides = array<i32>} : memref<432x384xbf16, #tpu.memory_space<vmem>>, vector<8x384xbf16>,
      %c2_i32_145 = arith.constant 2 : i32
      %144 = arith.addi %23, %c2_i32_145 : i32
      %c0_146 = arith.constant 0 : index
      %145 = arith.index_cast %144 : i32 to index
      %c0_147 = arith.constant 0 : index
      %c48_148 = arith.constant 48 : index
      %146 = vector.load %arg1[%c0_146, %145, %c0_147, %c48_148] : memref<1x18x8x456xbf16, #tpu.memory_space<vmem>>, vector<1x1x8x384xbf16>
      %147 = vector.shape_cast %146 : vector<1x1x8x384xbf16> to vector<8x384xbf16>
      %c192 = arith.constant 192 : index
      %c0_149 = arith.constant 0 : index
      %148 = vector.load %arg12[%c192, %c0_149] : memref<432x384xbf16, #tpu.memory_space<vmem>>, vector<8x384xbf16>
      tpu.vector_store %arg12[%c192, %c0_149], %147 {strides = array<i32>} : memref<432x384xbf16, #tpu.memory_space<vmem>>, vector<8x384xbf16>,
      %c2_i32_150 = arith.constant 2 : i32
      %149 = arith.addi %23, %c2_i32_150 : i32
      %c0_151 = arith.constant 0 : index
      %150 = arith.index_cast %149 : i32 to index
      %c0_152 = arith.constant 0 : index
      %c49_153 = arith.constant 49 : index
      %151 = vector.load %arg1[%c0_151, %150, %c0_152, %c49_153] : memref<1x18x8x456xbf16, #tpu.memory_space<vmem>>, vector<1x1x8x384xbf16>
      %152 = vector.shape_cast %151 : vector<1x1x8x384xbf16> to vector<8x384xbf16>
      %c200 = arith.constant 200 : index
      %c0_154 = arith.constant 0 : index
      %153 = vector.load %arg12[%c200, %c0_154] : memref<432x384xbf16, #tpu.memory_space<vmem>>, vector<8x384xbf16>
      tpu.vector_store %arg12[%c200, %c0_154], %152 {strides = array<i32>} : memref<432x384xbf16, #tpu.memory_space<vmem>>, vector<8x384xbf16>,
      %c2_i32_155 = arith.constant 2 : i32
      %154 = arith.addi %23, %c2_i32_155 : i32
      %c0_156 = arith.constant 0 : index
      %155 = arith.index_cast %154 : i32 to index
      %c0_157 = arith.constant 0 : index
      %c50_158 = arith.constant 50 : index
      %156 = vector.load %arg1[%c0_156, %155, %c0_157, %c50_158] : memref<1x18x8x456xbf16, #tpu.memory_space<vmem>>, vector<1x1x8x384xbf16>
      %157 = vector.shape_cast %156 : vector<1x1x8x384xbf16> to vector<8x384xbf16>
      %c208 = arith.constant 208 : index
      %c0_159 = arith.constant 0 : index
      %158 = vector.load %arg12[%c208, %c0_159] : memref<432x384xbf16, #tpu.memory_space<vmem>>, vector<8x384xbf16>
      tpu.vector_store %arg12[%c208, %c0_159], %157 {strides = array<i32>} : memref<432x384xbf16, #tpu.memory_space<vmem>>, vector<8x384xbf16>,
      %c0_160 = arith.constant 0 : index
      %c0_161 = arith.constant 0 : index
      %159 = vector.load %arg3[%c0_160, %c0_161] : memref<8x216xbf16, #tpu.memory_space<vmem>>, vector<8x216xbf16>
      %c0_162 = arith.constant 0 : index
      %c0_163 = arith.constant 0 : index
      %160 = vector.load %arg12[%c0_162, %c0_163] : memref<432x384xbf16, #tpu.memory_space<vmem>>, vector<216x384xbf16>
      %cst_164 = arith.constant dense<0.000000e+00> : vector<8x384xf32>
      %161 = tpu.matmul %159, %160, %cst_164 {dimension_numbers = #tpu.dot_dimension_numbers<[1], [0], [0], [1], [0, 0, 1, 1], [], []>} : vector<8x216xbf16>, vector<216x384xbf16>, vector<8x384xf32> -> vector<8x384xf32>
      %162 = arith.addf %161, %1 : vector<8x384xf32>
      %cst_165 = arith.constant 0.000000e+00 : f32
      %163 = vector.broadcast %cst_165 : f32 to vector<8x384xf32>
      %164 = arith.cmpf oge, %162, %163 : vector<8x384xf32>
      %cst_166 = arith.constant 0.00999999977 : f32
      %165 = vector.broadcast %cst_166 : f32 to vector<8x384xf32>
      %166 = arith.mulf %165, %162 : vector<8x384xf32>
      %167 = arith.select %164, %162, %166 : vector<8x384xi1>, vector<8x384xf32>
      %168 = arith.mulf %167, %0 : vector<8x384xf32>
      %c1_i32_167 = arith.constant 1 : i32
      %169 = arith.addi %c1_i32_167, %23 : i32
      %170 = arith.index_cast %169 : i32 to index
      %c0_168 = arith.constant 0 : index
      %c0_169 = arith.constant 0 : index
      %171 = vector.load %arg10[%170, %c0_168, %c0_169] : memref<18x8x456xbf16, #tpu.memory_space<vmem>>, vector<1x8x25xbf16>
      %172 = vector.shape_cast %171 : vector<1x8x25xbf16> to vector<8x25xbf16>
      %173 = vector.shape_cast %17 : vector<8x25xbf16> to vector<1x8x25xbf16>
      tpu.vector_store %arg10[%170, %c0_168, %c0_169], %173 {strides = array<i32>} : memref<18x8x456xbf16, #tpu.memory_space<vmem>>, vector<1x8x25xbf16>,
      %174 = arith.truncf %168 : vector<8x384xf32> to vector<8x384xbf16>
      %c1_i32_170 = arith.constant 1 : i32
      %175 = arith.addi %c1_i32_170, %23 : i32
      %176 = arith.index_cast %175 : i32 to index
      %c0_171 = arith.constant 0 : index
      %c25_172 = arith.constant 25 : index
      %177 = vector.load %arg10[%176, %c0_171, %c25_172] : memref<18x8x456xbf16, #tpu.memory_space<vmem>>, vector<1x8x384xbf16>
      %178 = vector.shape_cast %177 : vector<1x8x384xbf16> to vector<8x384xbf16>
      %179 = vector.shape_cast %174 : vector<8x384xbf16> to vector<1x8x384xbf16>
      tpu.vector_store %arg10[%176, %c0_171, %c25_172], %179 {strides = array<i32>} : memref<18x8x456xbf16, #tpu.memory_space<vmem>>, vector<1x8x384xbf16>,
      %c1_i32_173 = arith.constant 1 : i32
      %180 = arith.addi %c1_i32_173, %23 : i32
      %181 = arith.index_cast %180 : i32 to index
      %c0_174 = arith.constant 0 : index
      %c409 = arith.constant 409 : index
      %182 = vector.load %arg10[%181, %c0_174, %c409] : memref<18x8x456xbf16, #tpu.memory_space<vmem>>, vector<1x8x47xbf16>
      %183 = vector.shape_cast %182 : vector<1x8x47xbf16> to vector<8x47xbf16>
      %184 = vector.shape_cast %18 : vector<8x47xbf16> to vector<1x8x47xbf16>
      tpu.vector_store %arg10[%181, %c0_174, %c409], %184 {strides = array<i32>} : memref<18x8x456xbf16, #tpu.memory_space<vmem>>, vector<1x8x47xbf16>,
    }
    %c16_i32_20 = arith.constant 16 : i32
    %c0_i32_21 = arith.constant 0 : i32
    %c16_i32_22 = arith.constant 16 : i32
    %20 = arith.addi %c0_i32_21, %c16_i32_22 : i32
    %c1_i32_23 = arith.constant 1 : i32
    scf.for %arg13 = %c0_i32_21 to %20 step %c1_i32_23  : i32 {
      %c1_i32_29 = arith.constant 1 : i32
      %22 = arith.muli %arg13, %c1_i32_29 : i32
      %c0_i32_30 = arith.constant 0 : i32
      %23 = arith.addi %c0_i32_30, %22 : i32
      %c0_i32_31 = arith.constant 0 : i32
      %24 = arith.addi %23, %c0_i32_31 : i32
      %25 = arith.index_cast %24 : i32 to index
      %c0_32 = arith.constant 0 : index
      %c0_33 = arith.constant 0 : index
      %26 = vector.load %arg10[%25, %c0_32, %c0_33] : memref<18x8x456xbf16, #tpu.memory_space<vmem>>, vector<1x8x384xbf16>
      %27 = vector.shape_cast %26 : vector<1x8x384xbf16> to vector<8x384xbf16>
      %c0_34 = arith.constant 0 : index
      %c0_35 = arith.constant 0 : index
      %28 = vector.load %arg12[%c0_34, %c0_35] : memref<432x384xbf16, #tpu.memory_space<vmem>>, vector<8x384xbf16>
      tpu.vector_store %arg12[%c0_34, %c0_35], %27 {strides = array<i32>} : memref<432x384xbf16, #tpu.memory_space<vmem>>, vector<8x384xbf16>,
      %c0_i32_36 = arith.constant 0 : i32
      %29 = arith.addi %23, %c0_i32_36 : i32
      %30 = arith.index_cast %29 : i32 to index
      %c0_37 = arith.constant 0 : index
      %c1 = arith.constant 1 : index
      %31 = vector.load %arg10[%30, %c0_37, %c1] : memref<18x8x456xbf16, #tpu.memory_space<vmem>>, vector<1x8x384xbf16>
      %32 = vector.shape_cast %31 : vector<1x8x384xbf16> to vector<8x384xbf16>
      %c8 = arith.constant 8 : index
      %c0_38 = arith.constant 0 : index
      %33 = vector.load %arg12[%c8, %c0_38] : memref<432x384xbf16, #tpu.memory_space<vmem>>, vector<8x384xbf16>
      tpu.vector_store %arg12[%c8, %c0_38], %32 {strides = array<i32>} : memref<432x384xbf16, #tpu.memory_space<vmem>>, vector<8x384xbf16>,
      %c0_i32_39 = arith.constant 0 : i32
      %34 = arith.addi %23, %c0_i32_39 : i32
      %35 = arith.index_cast %34 : i32 to index
      %c0_40 = arith.constant 0 : index
      %c2 = arith.constant 2 : index
      %36 = vector.load %arg10[%35, %c0_40, %c2] : memref<18x8x456xbf16, #tpu.memory_space<vmem>>, vector<1x8x384xbf16>
      %37 = vector.shape_cast %36 : vector<1x8x384xbf16> to vector<8x384xbf16>
      %c16 = arith.constant 16 : index
      %c0_41 = arith.constant 0 : index
      %38 = vector.load %arg12[%c16, %c0_41] : memref<432x384xbf16, #tpu.memory_space<vmem>>, vector<8x384xbf16>
      tpu.vector_store %arg12[%c16, %c0_41], %37 {strides = array<i32>} : memref<432x384xbf16, #tpu.memory_space<vmem>>, vector<8x384xbf16>,
      %c0_i32_42 = arith.constant 0 : i32
      %39 = arith.addi %23, %c0_i32_42 : i32
      %40 = arith.index_cast %39 : i32 to index
      %c0_43 = arith.constant 0 : index
      %c24 = arith.constant 24 : index
      %41 = vector.load %arg10[%40, %c0_43, %c24] : memref<18x8x456xbf16, #tpu.memory_space<vmem>>, vector<1x8x384xbf16>
      %42 = vector.shape_cast %41 : vector<1x8x384xbf16> to vector<8x384xbf16>
      %c24_44 = arith.constant 24 : index
      %c0_45 = arith.constant 0 : index
      %43 = vector.load %arg12[%c24_44, %c0_45] : memref<432x384xbf16, #tpu.memory_space<vmem>>, vector<8x384xbf16>
      tpu.vector_store %arg12[%c24_44, %c0_45], %42 {strides = array<i32>} : memref<432x384xbf16, #tpu.memory_space<vmem>>, vector<8x384xbf16>,
      %c0_i32_46 = arith.constant 0 : i32
      %44 = arith.addi %23, %c0_i32_46 : i32
      %45 = arith.index_cast %44 : i32 to index
      %c0_47 = arith.constant 0 : index
      %c25 = arith.constant 25 : index
      %46 = vector.load %arg10[%45, %c0_47, %c25] : memref<18x8x456xbf16, #tpu.memory_space<vmem>>, vector<1x8x384xbf16>
      %47 = vector.shape_cast %46 : vector<1x8x384xbf16> to vector<8x384xbf16>
      %c32 = arith.constant 32 : index
      %c0_48 = arith.constant 0 : index
      %48 = vector.load %arg12[%c32, %c0_48] : memref<432x384xbf16, #tpu.memory_space<vmem>>, vector<8x384xbf16>
      tpu.vector_store %arg12[%c32, %c0_48], %47 {strides = array<i32>} : memref<432x384xbf16, #tpu.memory_space<vmem>>, vector<8x384xbf16>,
      %c0_i32_49 = arith.constant 0 : i32
      %49 = arith.addi %23, %c0_i32_49 : i32
      %50 = arith.index_cast %49 : i32 to index
      %c0_50 = arith.constant 0 : index
      %c26 = arith.constant 26 : index
      %51 = vector.load %arg10[%50, %c0_50, %c26] : memref<18x8x456xbf16, #tpu.memory_space<vmem>>, vector<1x8x384xbf16>
      %52 = vector.shape_cast %51 : vector<1x8x384xbf16> to vector<8x384xbf16>
      %c40 = arith.constant 40 : index
      %c0_51 = arith.constant 0 : index
      %53 = vector.load %arg12[%c40, %c0_51] : memref<432x384xbf16, #tpu.memory_space<vmem>>, vector<8x384xbf16>
      tpu.vector_store %arg12[%c40, %c0_51], %52 {strides = array<i32>} : memref<432x384xbf16, #tpu.memory_space<vmem>>, vector<8x384xbf16>,
      %c0_i32_52 = arith.constant 0 : i32
      %54 = arith.addi %23, %c0_i32_52 : i32
      %55 = arith.index_cast %54 : i32 to index
      %c0_53 = arith.constant 0 : index
      %c48 = arith.constant 48 : index
      %56 = vector.load %arg10[%55, %c0_53, %c48] : memref<18x8x456xbf16, #tpu.memory_space<vmem>>, vector<1x8x384xbf16>
      %57 = vector.shape_cast %56 : vector<1x8x384xbf16> to vector<8x384xbf16>
      %c48_54 = arith.constant 48 : index
      %c0_55 = arith.constant 0 : index
      %58 = vector.load %arg12[%c48_54, %c0_55] : memref<432x384xbf16, #tpu.memory_space<vmem>>, vector<8x384xbf16>
      tpu.vector_store %arg12[%c48_54, %c0_55], %57 {strides = array<i32>} : memref<432x384xbf16, #tpu.memory_space<vmem>>, vector<8x384xbf16>,
      %c0_i32_56 = arith.constant 0 : i32
      %59 = arith.addi %23, %c0_i32_56 : i32
      %60 = arith.index_cast %59 : i32 to index
      %c0_57 = arith.constant 0 : index
      %c49 = arith.constant 49 : index
      %61 = vector.load %arg10[%60, %c0_57, %c49] : memref<18x8x456xbf16, #tpu.memory_space<vmem>>, vector<1x8x384xbf16>
      %62 = vector.shape_cast %61 : vector<1x8x384xbf16> to vector<8x384xbf16>
      %c56 = arith.constant 56 : index
      %c0_58 = arith.constant 0 : index
      %63 = vector.load %arg12[%c56, %c0_58] : memref<432x384xbf16, #tpu.memory_space<vmem>>, vector<8x384xbf16>
      tpu.vector_store %arg12[%c56, %c0_58], %62 {strides = array<i32>} : memref<432x384xbf16, #tpu.memory_space<vmem>>, vector<8x384xbf16>,
      %c0_i32_59 = arith.constant 0 : i32
      %64 = arith.addi %23, %c0_i32_59 : i32
      %65 = arith.index_cast %64 : i32 to index
      %c0_60 = arith.constant 0 : index
      %c50 = arith.constant 50 : index
      %66 = vector.load %arg10[%65, %c0_60, %c50] : memref<18x8x456xbf16, #tpu.memory_space<vmem>>, vector<1x8x384xbf16>
      %67 = vector.shape_cast %66 : vector<1x8x384xbf16> to vector<8x384xbf16>
      %c64 = arith.constant 64 : index
      %c0_61 = arith.constant 0 : index
      %68 = vector.load %arg12[%c64, %c0_61] : memref<432x384xbf16, #tpu.memory_space<vmem>>, vector<8x384xbf16>
      tpu.vector_store %arg12[%c64, %c0_61], %67 {strides = array<i32>} : memref<432x384xbf16, #tpu.memory_space<vmem>>, vector<8x384xbf16>,
      %c1_i32_62 = arith.constant 1 : i32
      %69 = arith.addi %23, %c1_i32_62 : i32
      %70 = arith.index_cast %69 : i32 to index
      %c0_63 = arith.constant 0 : index
      %c0_64 = arith.constant 0 : index
      %71 = vector.load %arg10[%70, %c0_63, %c0_64] : memref<18x8x456xbf16, #tpu.memory_space<vmem>>, vector<1x8x384xbf16>
      %72 = vector.shape_cast %71 : vector<1x8x384xbf16> to vector<8x384xbf16>
      %c72 = arith.constant 72 : index
      %c0_65 = arith.constant 0 : index
      %73 = vector.load %arg12[%c72, %c0_65] : memref<432x384xbf16, #tpu.memory_space<vmem>>, vector<8x384xbf16>
      tpu.vector_store %arg12[%c72, %c0_65], %72 {strides = array<i32>} : memref<432x384xbf16, #tpu.memory_space<vmem>>, vector<8x384xbf16>,
      %c1_i32_66 = arith.constant 1 : i32
      %74 = arith.addi %23, %c1_i32_66 : i32
      %75 = arith.index_cast %74 : i32 to index
      %c0_67 = arith.constant 0 : index
      %c1_68 = arith.constant 1 : index
      %76 = vector.load %arg10[%75, %c0_67, %c1_68] : memref<18x8x456xbf16, #tpu.memory_space<vmem>>, vector<1x8x384xbf16>
      %77 = vector.shape_cast %76 : vector<1x8x384xbf16> to vector<8x384xbf16>
      %c80 = arith.constant 80 : index
      %c0_69 = arith.constant 0 : index
      %78 = vector.load %arg12[%c80, %c0_69] : memref<432x384xbf16, #tpu.memory_space<vmem>>, vector<8x384xbf16>
      tpu.vector_store %arg12[%c80, %c0_69], %77 {strides = array<i32>} : memref<432x384xbf16, #tpu.memory_space<vmem>>, vector<8x384xbf16>,
      %c1_i32_70 = arith.constant 1 : i32
      %79 = arith.addi %23, %c1_i32_70 : i32
      %80 = arith.index_cast %79 : i32 to index
      %c0_71 = arith.constant 0 : index
      %c2_72 = arith.constant 2 : index
      %81 = vector.load %arg10[%80, %c0_71, %c2_72] : memref<18x8x456xbf16, #tpu.memory_space<vmem>>, vector<1x8x384xbf16>
      %82 = vector.shape_cast %81 : vector<1x8x384xbf16> to vector<8x384xbf16>
      %c88 = arith.constant 88 : index
      %c0_73 = arith.constant 0 : index
      %83 = vector.load %arg12[%c88, %c0_73] : memref<432x384xbf16, #tpu.memory_space<vmem>>, vector<8x384xbf16>
      tpu.vector_store %arg12[%c88, %c0_73], %82 {strides = array<i32>} : memref<432x384xbf16, #tpu.memory_space<vmem>>, vector<8x384xbf16>,
      %c1_i32_74 = arith.constant 1 : i32
      %84 = arith.addi %23, %c1_i32_74 : i32
      %85 = arith.index_cast %84 : i32 to index
      %c0_75 = arith.constant 0 : index
      %c24_76 = arith.constant 24 : index
      %86 = vector.load %arg10[%85, %c0_75, %c24_76] : memref<18x8x456xbf16, #tpu.memory_space<vmem>>, vector<1x8x384xbf16>
      %87 = vector.shape_cast %86 : vector<1x8x384xbf16> to vector<8x384xbf16>
      %c96 = arith.constant 96 : index
      %c0_77 = arith.constant 0 : index
      %88 = vector.load %arg12[%c96, %c0_77] : memref<432x384xbf16, #tpu.memory_space<vmem>>, vector<8x384xbf16>
      tpu.vector_store %arg12[%c96, %c0_77], %87 {strides = array<i32>} : memref<432x384xbf16, #tpu.memory_space<vmem>>, vector<8x384xbf16>,
      %c1_i32_78 = arith.constant 1 : i32
      %89 = arith.addi %23, %c1_i32_78 : i32
      %90 = arith.index_cast %89 : i32 to index
      %c0_79 = arith.constant 0 : index
      %c25_80 = arith.constant 25 : index
      %91 = vector.load %arg10[%90, %c0_79, %c25_80] : memref<18x8x456xbf16, #tpu.memory_space<vmem>>, vector<1x8x384xbf16>
      %92 = vector.shape_cast %91 : vector<1x8x384xbf16> to vector<8x384xbf16>
      %c104 = arith.constant 104 : index
      %c0_81 = arith.constant 0 : index
      %93 = vector.load %arg12[%c104, %c0_81] : memref<432x384xbf16, #tpu.memory_space<vmem>>, vector<8x384xbf16>
      tpu.vector_store %arg12[%c104, %c0_81], %92 {strides = array<i32>} : memref<432x384xbf16, #tpu.memory_space<vmem>>, vector<8x384xbf16>,
      %c1_i32_82 = arith.constant 1 : i32
      %94 = arith.addi %23, %c1_i32_82 : i32
      %95 = arith.index_cast %94 : i32 to index
      %c0_83 = arith.constant 0 : index
      %c26_84 = arith.constant 26 : index
      %96 = vector.load %arg10[%95, %c0_83, %c26_84] : memref<18x8x456xbf16, #tpu.memory_space<vmem>>, vector<1x8x384xbf16>
      %97 = vector.shape_cast %96 : vector<1x8x384xbf16> to vector<8x384xbf16>
      %c112 = arith.constant 112 : index
      %c0_85 = arith.constant 0 : index
      %98 = vector.load %arg12[%c112, %c0_85] : memref<432x384xbf16, #tpu.memory_space<vmem>>, vector<8x384xbf16>
      tpu.vector_store %arg12[%c112, %c0_85], %97 {strides = array<i32>} : memref<432x384xbf16, #tpu.memory_space<vmem>>, vector<8x384xbf16>,
      %c1_i32_86 = arith.constant 1 : i32
      %99 = arith.addi %23, %c1_i32_86 : i32
      %100 = arith.index_cast %99 : i32 to index
      %c0_87 = arith.constant 0 : index
      %c48_88 = arith.constant 48 : index
      %101 = vector.load %arg10[%100, %c0_87, %c48_88] : memref<18x8x456xbf16, #tpu.memory_space<vmem>>, vector<1x8x384xbf16>
      %102 = vector.shape_cast %101 : vector<1x8x384xbf16> to vector<8x384xbf16>
      %c120 = arith.constant 120 : index
      %c0_89 = arith.constant 0 : index
      %103 = vector.load %arg12[%c120, %c0_89] : memref<432x384xbf16, #tpu.memory_space<vmem>>, vector<8x384xbf16>
      tpu.vector_store %arg12[%c120, %c0_89], %102 {strides = array<i32>} : memref<432x384xbf16, #tpu.memory_space<vmem>>, vector<8x384xbf16>,
      %c1_i32_90 = arith.constant 1 : i32
      %104 = arith.addi %23, %c1_i32_90 : i32
      %105 = arith.index_cast %104 : i32 to index
      %c0_91 = arith.constant 0 : index
      %c49_92 = arith.constant 49 : index
      %106 = vector.load %arg10[%105, %c0_91, %c49_92] : memref<18x8x456xbf16, #tpu.memory_space<vmem>>, vector<1x8x384xbf16>
      %107 = vector.shape_cast %106 : vector<1x8x384xbf16> to vector<8x384xbf16>
      %c128 = arith.constant 128 : index
      %c0_93 = arith.constant 0 : index
      %108 = vector.load %arg12[%c128, %c0_93] : memref<432x384xbf16, #tpu.memory_space<vmem>>, vector<8x384xbf16>
      tpu.vector_store %arg12[%c128, %c0_93], %107 {strides = array<i32>} : memref<432x384xbf16, #tpu.memory_space<vmem>>, vector<8x384xbf16>,
      %c1_i32_94 = arith.constant 1 : i32
      %109 = arith.addi %23, %c1_i32_94 : i32
      %110 = arith.index_cast %109 : i32 to index
      %c0_95 = arith.constant 0 : index
      %c50_96 = arith.constant 50 : index
      %111 = vector.load %arg10[%110, %c0_95, %c50_96] : memref<18x8x456xbf16, #tpu.memory_space<vmem>>, vector<1x8x384xbf16>
      %112 = vector.shape_cast %111 : vector<1x8x384xbf16> to vector<8x384xbf16>
      %c136 = arith.constant 136 : index
      %c0_97 = arith.constant 0 : index
      %113 = vector.load %arg12[%c136, %c0_97] : memref<432x384xbf16, #tpu.memory_space<vmem>>, vector<8x384xbf16>
      tpu.vector_store %arg12[%c136, %c0_97], %112 {strides = array<i32>} : memref<432x384xbf16, #tpu.memory_space<vmem>>, vector<8x384xbf16>,
      %c2_i32 = arith.constant 2 : i32
      %114 = arith.addi %23, %c2_i32 : i32
      %115 = arith.index_cast %114 : i32 to index
      %c0_98 = arith.constant 0 : index
      %c0_99 = arith.constant 0 : index
      %116 = vector.load %arg10[%115, %c0_98, %c0_99] : memref<18x8x456xbf16, #tpu.memory_space<vmem>>, vector<1x8x384xbf16>
      %117 = vector.shape_cast %116 : vector<1x8x384xbf16> to vector<8x384xbf16>
      %c144 = arith.constant 144 : index
      %c0_100 = arith.constant 0 : index
      %118 = vector.load %arg12[%c144, %c0_100] : memref<432x384xbf16, #tpu.memory_space<vmem>>, vector<8x384xbf16>
      tpu.vector_store %arg12[%c144, %c0_100], %117 {strides = array<i32>} : memref<432x384xbf16, #tpu.memory_space<vmem>>, vector<8x384xbf16>,
      %c2_i32_101 = arith.constant 2 : i32
      %119 = arith.addi %23, %c2_i32_101 : i32
      %120 = arith.index_cast %119 : i32 to index
      %c0_102 = arith.constant 0 : index
      %c1_103 = arith.constant 1 : index
      %121 = vector.load %arg10[%120, %c0_102, %c1_103] : memref<18x8x456xbf16, #tpu.memory_space<vmem>>, vector<1x8x384xbf16>
      %122 = vector.shape_cast %121 : vector<1x8x384xbf16> to vector<8x384xbf16>
      %c152 = arith.constant 152 : index
      %c0_104 = arith.constant 0 : index
      %123 = vector.load %arg12[%c152, %c0_104] : memref<432x384xbf16, #tpu.memory_space<vmem>>, vector<8x384xbf16>
      tpu.vector_store %arg12[%c152, %c0_104], %122 {strides = array<i32>} : memref<432x384xbf16, #tpu.memory_space<vmem>>, vector<8x384xbf16>,
      %c2_i32_105 = arith.constant 2 : i32
      %124 = arith.addi %23, %c2_i32_105 : i32
      %125 = arith.index_cast %124 : i32 to index
      %c0_106 = arith.constant 0 : index
      %c2_107 = arith.constant 2 : index
      %126 = vector.load %arg10[%125, %c0_106, %c2_107] : memref<18x8x456xbf16, #tpu.memory_space<vmem>>, vector<1x8x384xbf16>
      %127 = vector.shape_cast %126 : vector<1x8x384xbf16> to vector<8x384xbf16>
      %c160 = arith.constant 160 : index
      %c0_108 = arith.constant 0 : index
      %128 = vector.load %arg12[%c160, %c0_108] : memref<432x384xbf16, #tpu.memory_space<vmem>>, vector<8x384xbf16>
      tpu.vector_store %arg12[%c160, %c0_108], %127 {strides = array<i32>} : memref<432x384xbf16, #tpu.memory_space<vmem>>, vector<8x384xbf16>,
      %c2_i32_109 = arith.constant 2 : i32
      %129 = arith.addi %23, %c2_i32_109 : i32
      %130 = arith.index_cast %129 : i32 to index
      %c0_110 = arith.constant 0 : index
      %c24_111 = arith.constant 24 : index
      %131 = vector.load %arg10[%130, %c0_110, %c24_111] : memref<18x8x456xbf16, #tpu.memory_space<vmem>>, vector<1x8x384xbf16>
      %132 = vector.shape_cast %131 : vector<1x8x384xbf16> to vector<8x384xbf16>
      %c168 = arith.constant 168 : index
      %c0_112 = arith.constant 0 : index
      %133 = vector.load %arg12[%c168, %c0_112] : memref<432x384xbf16, #tpu.memory_space<vmem>>, vector<8x384xbf16>
      tpu.vector_store %arg12[%c168, %c0_112], %132 {strides = array<i32>} : memref<432x384xbf16, #tpu.memory_space<vmem>>, vector<8x384xbf16>,
      %c2_i32_113 = arith.constant 2 : i32
      %134 = arith.addi %23, %c2_i32_113 : i32
      %135 = arith.index_cast %134 : i32 to index
      %c0_114 = arith.constant 0 : index
      %c25_115 = arith.constant 25 : index
      %136 = vector.load %arg10[%135, %c0_114, %c25_115] : memref<18x8x456xbf16, #tpu.memory_space<vmem>>, vector<1x8x384xbf16>
      %137 = vector.shape_cast %136 : vector<1x8x384xbf16> to vector<8x384xbf16>
      %c176 = arith.constant 176 : index
      %c0_116 = arith.constant 0 : index
      %138 = vector.load %arg12[%c176, %c0_116] : memref<432x384xbf16, #tpu.memory_space<vmem>>, vector<8x384xbf16>
      tpu.vector_store %arg12[%c176, %c0_116], %137 {strides = array<i32>} : memref<432x384xbf16, #tpu.memory_space<vmem>>, vector<8x384xbf16>,
      %c2_i32_117 = arith.constant 2 : i32
      %139 = arith.addi %23, %c2_i32_117 : i32
      %140 = arith.index_cast %139 : i32 to index
      %c0_118 = arith.constant 0 : index
      %c26_119 = arith.constant 26 : index
      %141 = vector.load %arg10[%140, %c0_118, %c26_119] : memref<18x8x456xbf16, #tpu.memory_space<vmem>>, vector<1x8x384xbf16>
      %142 = vector.shape_cast %141 : vector<1x8x384xbf16> to vector<8x384xbf16>
      %c184 = arith.constant 184 : index
      %c0_120 = arith.constant 0 : index
      %143 = vector.load %arg12[%c184, %c0_120] : memref<432x384xbf16, #tpu.memory_space<vmem>>, vector<8x384xbf16>
      tpu.vector_store %arg12[%c184, %c0_120], %142 {strides = array<i32>} : memref<432x384xbf16, #tpu.memory_space<vmem>>, vector<8x384xbf16>,
      %c2_i32_121 = arith.constant 2 : i32
      %144 = arith.addi %23, %c2_i32_121 : i32
      %145 = arith.index_cast %144 : i32 to index
      %c0_122 = arith.constant 0 : index
      %c48_123 = arith.constant 48 : index
      %146 = vector.load %arg10[%145, %c0_122, %c48_123] : memref<18x8x456xbf16, #tpu.memory_space<vmem>>, vector<1x8x384xbf16>
      %147 = vector.shape_cast %146 : vector<1x8x384xbf16> to vector<8x384xbf16>
      %c192 = arith.constant 192 : index
      %c0_124 = arith.constant 0 : index
      %148 = vector.load %arg12[%c192, %c0_124] : memref<432x384xbf16, #tpu.memory_space<vmem>>, vector<8x384xbf16>
      tpu.vector_store %arg12[%c192, %c0_124], %147 {strides = array<i32>} : memref<432x384xbf16, #tpu.memory_space<vmem>>, vector<8x384xbf16>,
      %c2_i32_125 = arith.constant 2 : i32
      %149 = arith.addi %23, %c2_i32_125 : i32
      %150 = arith.index_cast %149 : i32 to index
      %c0_126 = arith.constant 0 : index
      %c49_127 = arith.constant 49 : index
      %151 = vector.load %arg10[%150, %c0_126, %c49_127] : memref<18x8x456xbf16, #tpu.memory_space<vmem>>, vector<1x8x384xbf16>
      %152 = vector.shape_cast %151 : vector<1x8x384xbf16> to vector<8x384xbf16>
      %c200 = arith.constant 200 : index
      %c0_128 = arith.constant 0 : index
      %153 = vector.load %arg12[%c200, %c0_128] : memref<432x384xbf16, #tpu.memory_space<vmem>>, vector<8x384xbf16>
      tpu.vector_store %arg12[%c200, %c0_128], %152 {strides = array<i32>} : memref<432x384xbf16, #tpu.memory_space<vmem>>, vector<8x384xbf16>,
      %c2_i32_129 = arith.constant 2 : i32
      %154 = arith.addi %23, %c2_i32_129 : i32
      %155 = arith.index_cast %154 : i32 to index
      %c0_130 = arith.constant 0 : index
      %c50_131 = arith.constant 50 : index
      %156 = vector.load %arg10[%155, %c0_130, %c50_131] : memref<18x8x456xbf16, #tpu.memory_space<vmem>>, vector<1x8x384xbf16>
      %157 = vector.shape_cast %156 : vector<1x8x384xbf16> to vector<8x384xbf16>
      %c208 = arith.constant 208 : index
      %c0_132 = arith.constant 0 : index
      %158 = vector.load %arg12[%c208, %c0_132] : memref<432x384xbf16, #tpu.memory_space<vmem>>, vector<8x384xbf16>
      tpu.vector_store %arg12[%c208, %c0_132], %157 {strides = array<i32>} : memref<432x384xbf16, #tpu.memory_space<vmem>>, vector<8x384xbf16>,
      %c0_133 = arith.constant 0 : index
      %c0_134 = arith.constant 0 : index
      %159 = vector.load %arg5[%c0_133, %c0_134] : memref<8x216xbf16, #tpu.memory_space<vmem>>, vector<8x216xbf16>
      %c0_135 = arith.constant 0 : index
      %c0_136 = arith.constant 0 : index
      %160 = vector.load %arg12[%c0_135, %c0_136] : memref<432x384xbf16, #tpu.memory_space<vmem>>, vector<216x384xbf16>
      %cst_137 = arith.constant dense<0.000000e+00> : vector<8x384xf32>
      %161 = tpu.matmul %159, %160, %cst_137 {dimension_numbers = #tpu.dot_dimension_numbers<[1], [0], [0], [1], [0, 0, 1, 1], [], []>} : vector<8x216xbf16>, vector<216x384xbf16>, vector<8x384xf32> -> vector<8x384xf32>
      %162 = arith.addf %161, %2 : vector<8x384xf32>
      %163 = arith.mulf %162, %0 : vector<8x384xf32>
      %c1_i32_138 = arith.constant 1 : i32
      %164 = arith.addi %c1_i32_138, %23 : i32
      %165 = arith.index_cast %164 : i32 to index
      %c0_139 = arith.constant 0 : index
      %c0_140 = arith.constant 0 : index
      %166 = vector.load %arg11[%165, %c0_139, %c0_140] : memref<18x8x456xbf16, #tpu.memory_space<vmem>>, vector<1x8x25xbf16>
      %167 = vector.shape_cast %166 : vector<1x8x25xbf16> to vector<8x25xbf16>
      %168 = vector.shape_cast %17 : vector<8x25xbf16> to vector<1x8x25xbf16>
      tpu.vector_store %arg11[%165, %c0_139, %c0_140], %168 {strides = array<i32>} : memref<18x8x456xbf16, #tpu.memory_space<vmem>>, vector<1x8x25xbf16>,
      %169 = arith.truncf %163 : vector<8x384xf32> to vector<8x384xbf16>
      %c1_i32_141 = arith.constant 1 : i32
      %170 = arith.addi %c1_i32_141, %23 : i32
      %171 = arith.index_cast %170 : i32 to index
      %c0_142 = arith.constant 0 : index
      %c25_143 = arith.constant 25 : index
      %172 = vector.load %arg11[%171, %c0_142, %c25_143] : memref<18x8x456xbf16, #tpu.memory_space<vmem>>, vector<1x8x384xbf16>
      %173 = vector.shape_cast %172 : vector<1x8x384xbf16> to vector<8x384xbf16>
      %174 = vector.shape_cast %169 : vector<8x384xbf16> to vector<1x8x384xbf16>
      tpu.vector_store %arg11[%171, %c0_142, %c25_143], %174 {strides = array<i32>} : memref<18x8x456xbf16, #tpu.memory_space<vmem>>, vector<1x8x384xbf16>,
      %c1_i32_144 = arith.constant 1 : i32
      %175 = arith.addi %c1_i32_144, %23 : i32
      %176 = arith.index_cast %175 : i32 to index
      %c0_145 = arith.constant 0 : index
      %c409 = arith.constant 409 : index
      %177 = vector.load %arg11[%176, %c0_145, %c409] : memref<18x8x456xbf16, #tpu.memory_space<vmem>>, vector<1x8x47xbf16>
      %178 = vector.shape_cast %177 : vector<1x8x47xbf16> to vector<8x47xbf16>
      %179 = vector.shape_cast %18 : vector<8x47xbf16> to vector<1x8x47xbf16>
      tpu.vector_store %arg11[%176, %c0_145, %c409], %179 {strides = array<i32>} : memref<18x8x456xbf16, #tpu.memory_space<vmem>>, vector<1x8x47xbf16>,
    }
    %c16_i32_24 = arith.constant 16 : i32
    %c0_i32_25 = arith.constant 0 : i32
    %c16_i32_26 = arith.constant 16 : i32
    %21 = arith.addi %c0_i32_25, %c16_i32_26 : i32
    %c1_i32_27 = arith.constant 1 : i32
    scf.for %arg13 = %c0_i32_25 to %21 step %c1_i32_27  : i32 {
      %c1_i32_29 = arith.constant 1 : i32
      %22 = arith.muli %arg13, %c1_i32_29 : i32
      %c0_i32_30 = arith.constant 0 : i32
      %23 = arith.addi %c0_i32_30, %22 : i32
      %c0_i32_31 = arith.constant 0 : i32
      %24 = arith.addi %23, %c0_i32_31 : i32
      %c0_32 = arith.constant 0 : index
      %25 = arith.index_cast %24 : i32 to index
      %c0_33 = arith.constant 0 : index
      %c0_34 = arith.constant 0 : index
      %26 = vector.load %arg1[%c0_32, %25, %c0_33, %c0_34] : memref<1x18x8x456xbf16, #tpu.memory_space<vmem>>, vector<1x1x8x384xbf16>
      %27 = vector.shape_cast %26 : vector<1x1x8x384xbf16> to vector<8x384xbf16>
      %c0_35 = arith.constant 0 : index
      %c0_36 = arith.constant 0 : index
      %28 = vector.load %arg12[%c0_35, %c0_36] : memref<432x384xbf16, #tpu.memory_space<vmem>>, vector<8x384xbf16>
      tpu.vector_store %arg12[%c0_35, %c0_36], %27 {strides = array<i32>} : memref<432x384xbf16, #tpu.memory_space<vmem>>, vector<8x384xbf16>,
      %c0_i32_37 = arith.constant 0 : i32
      %29 = arith.addi %23, %c0_i32_37 : i32
      %c0_38 = arith.constant 0 : index
      %30 = arith.index_cast %29 : i32 to index
      %c0_39 = arith.constant 0 : index
      %c1 = arith.constant 1 : index
      %31 = vector.load %arg1[%c0_38, %30, %c0_39, %c1] : memref<1x18x8x456xbf16, #tpu.memory_space<vmem>>, vector<1x1x8x384xbf16>
      %32 = vector.shape_cast %31 : vector<1x1x8x384xbf16> to vector<8x384xbf16>
      %c8 = arith.constant 8 : index
      %c0_40 = arith.constant 0 : index
      %33 = vector.load %arg12[%c8, %c0_40] : memref<432x384xbf16, #tpu.memory_space<vmem>>, vector<8x384xbf16>
      tpu.vector_store %arg12[%c8, %c0_40], %32 {strides = array<i32>} : memref<432x384xbf16, #tpu.memory_space<vmem>>, vector<8x384xbf16>,
      %c0_i32_41 = arith.constant 0 : i32
      %34 = arith.addi %23, %c0_i32_41 : i32
      %c0_42 = arith.constant 0 : index
      %35 = arith.index_cast %34 : i32 to index
      %c0_43 = arith.constant 0 : index
      %c2 = arith.constant 2 : index
      %36 = vector.load %arg1[%c0_42, %35, %c0_43, %c2] : memref<1x18x8x456xbf16, #tpu.memory_space<vmem>>, vector<1x1x8x384xbf16>
      %37 = vector.shape_cast %36 : vector<1x1x8x384xbf16> to vector<8x384xbf16>
      %c16 = arith.constant 16 : index
      %c0_44 = arith.constant 0 : index
      %38 = vector.load %arg12[%c16, %c0_44] : memref<432x384xbf16, #tpu.memory_space<vmem>>, vector<8x384xbf16>
      tpu.vector_store %arg12[%c16, %c0_44], %37 {strides = array<i32>} : memref<432x384xbf16, #tpu.memory_space<vmem>>, vector<8x384xbf16>,
      %c0_i32_45 = arith.constant 0 : i32
      %39 = arith.addi %23, %c0_i32_45 : i32
      %c0_46 = arith.constant 0 : index
      %40 = arith.index_cast %39 : i32 to index
      %c0_47 = arith.constant 0 : index
      %c24 = arith.constant 24 : index
      %41 = vector.load %arg1[%c0_46, %40, %c0_47, %c24] : memref<1x18x8x456xbf16, #tpu.memory_space<vmem>>, vector<1x1x8x384xbf16>
      %42 = vector.shape_cast %41 : vector<1x1x8x384xbf16> to vector<8x384xbf16>
      %c24_48 = arith.constant 24 : index
      %c0_49 = arith.constant 0 : index
      %43 = vector.load %arg12[%c24_48, %c0_49] : memref<432x384xbf16, #tpu.memory_space<vmem>>, vector<8x384xbf16>
      tpu.vector_store %arg12[%c24_48, %c0_49], %42 {strides = array<i32>} : memref<432x384xbf16, #tpu.memory_space<vmem>>, vector<8x384xbf16>,
      %c0_i32_50 = arith.constant 0 : i32
      %44 = arith.addi %23, %c0_i32_50 : i32
      %c0_51 = arith.constant 0 : index
      %45 = arith.index_cast %44 : i32 to index
      %c0_52 = arith.constant 0 : index
      %c25 = arith.constant 25 : index
      %46 = vector.load %arg1[%c0_51, %45, %c0_52, %c25] : memref<1x18x8x456xbf16, #tpu.memory_space<vmem>>, vector<1x1x8x384xbf16>
      %47 = vector.shape_cast %46 : vector<1x1x8x384xbf16> to vector<8x384xbf16>
      %c32 = arith.constant 32 : index
      %c0_53 = arith.constant 0 : index
      %48 = vector.load %arg12[%c32, %c0_53] : memref<432x384xbf16, #tpu.memory_space<vmem>>, vector<8x384xbf16>
      tpu.vector_store %arg12[%c32, %c0_53], %47 {strides = array<i32>} : memref<432x384xbf16, #tpu.memory_space<vmem>>, vector<8x384xbf16>,
      %c0_i32_54 = arith.constant 0 : i32
      %49 = arith.addi %23, %c0_i32_54 : i32
      %c0_55 = arith.constant 0 : index
      %50 = arith.index_cast %49 : i32 to index
      %c0_56 = arith.constant 0 : index
      %c26 = arith.constant 26 : index
      %51 = vector.load %arg1[%c0_55, %50, %c0_56, %c26] : memref<1x18x8x456xbf16, #tpu.memory_space<vmem>>, vector<1x1x8x384xbf16>
      %52 = vector.shape_cast %51 : vector<1x1x8x384xbf16> to vector<8x384xbf16>
      %c40 = arith.constant 40 : index
      %c0_57 = arith.constant 0 : index
      %53 = vector.load %arg12[%c40, %c0_57] : memref<432x384xbf16, #tpu.memory_space<vmem>>, vector<8x384xbf16>
      tpu.vector_store %arg12[%c40, %c0_57], %52 {strides = array<i32>} : memref<432x384xbf16, #tpu.memory_space<vmem>>, vector<8x384xbf16>,
      %c0_i32_58 = arith.constant 0 : i32
      %54 = arith.addi %23, %c0_i32_58 : i32
      %c0_59 = arith.constant 0 : index
      %55 = arith.index_cast %54 : i32 to index
      %c0_60 = arith.constant 0 : index
      %c48 = arith.constant 48 : index
      %56 = vector.load %arg1[%c0_59, %55, %c0_60, %c48] : memref<1x18x8x456xbf16, #tpu.memory_space<vmem>>, vector<1x1x8x384xbf16>
      %57 = vector.shape_cast %56 : vector<1x1x8x384xbf16> to vector<8x384xbf16>
      %c48_61 = arith.constant 48 : index
      %c0_62 = arith.constant 0 : index
      %58 = vector.load %arg12[%c48_61, %c0_62] : memref<432x384xbf16, #tpu.memory_space<vmem>>, vector<8x384xbf16>
      tpu.vector_store %arg12[%c48_61, %c0_62], %57 {strides = array<i32>} : memref<432x384xbf16, #tpu.memory_space<vmem>>, vector<8x384xbf16>,
      %c0_i32_63 = arith.constant 0 : i32
      %59 = arith.addi %23, %c0_i32_63 : i32
      %c0_64 = arith.constant 0 : index
      %60 = arith.index_cast %59 : i32 to index
      %c0_65 = arith.constant 0 : index
      %c49 = arith.constant 49 : index
      %61 = vector.load %arg1[%c0_64, %60, %c0_65, %c49] : memref<1x18x8x456xbf16, #tpu.memory_space<vmem>>, vector<1x1x8x384xbf16>
      %62 = vector.shape_cast %61 : vector<1x1x8x384xbf16> to vector<8x384xbf16>
      %c56 = arith.constant 56 : index
      %c0_66 = arith.constant 0 : index
      %63 = vector.load %arg12[%c56, %c0_66] : memref<432x384xbf16, #tpu.memory_space<vmem>>, vector<8x384xbf16>
      tpu.vector_store %arg12[%c56, %c0_66], %62 {strides = array<i32>} : memref<432x384xbf16, #tpu.memory_space<vmem>>, vector<8x384xbf16>,
      %c0_i32_67 = arith.constant 0 : i32
      %64 = arith.addi %23, %c0_i32_67 : i32
      %c0_68 = arith.constant 0 : index
      %65 = arith.index_cast %64 : i32 to index
      %c0_69 = arith.constant 0 : index
      %c50 = arith.constant 50 : index
      %66 = vector.load %arg1[%c0_68, %65, %c0_69, %c50] : memref<1x18x8x456xbf16, #tpu.memory_space<vmem>>, vector<1x1x8x384xbf16>
      %67 = vector.shape_cast %66 : vector<1x1x8x384xbf16> to vector<8x384xbf16>
      %c64 = arith.constant 64 : index
      %c0_70 = arith.constant 0 : index
      %68 = vector.load %arg12[%c64, %c0_70] : memref<432x384xbf16, #tpu.memory_space<vmem>>, vector<8x384xbf16>
      tpu.vector_store %arg12[%c64, %c0_70], %67 {strides = array<i32>} : memref<432x384xbf16, #tpu.memory_space<vmem>>, vector<8x384xbf16>,
      %c1_i32_71 = arith.constant 1 : i32
      %69 = arith.addi %23, %c1_i32_71 : i32
      %c0_72 = arith.constant 0 : index
      %70 = arith.index_cast %69 : i32 to index
      %c0_73 = arith.constant 0 : index
      %c0_74 = arith.constant 0 : index
      %71 = vector.load %arg1[%c0_72, %70, %c0_73, %c0_74] : memref<1x18x8x456xbf16, #tpu.memory_space<vmem>>, vector<1x1x8x384xbf16>
      %72 = vector.shape_cast %71 : vector<1x1x8x384xbf16> to vector<8x384xbf16>
      %c72 = arith.constant 72 : index
      %c0_75 = arith.constant 0 : index
      %73 = vector.load %arg12[%c72, %c0_75] : memref<432x384xbf16, #tpu.memory_space<vmem>>, vector<8x384xbf16>
      tpu.vector_store %arg12[%c72, %c0_75], %72 {strides = array<i32>} : memref<432x384xbf16, #tpu.memory_space<vmem>>, vector<8x384xbf16>,
      %c1_i32_76 = arith.constant 1 : i32
      %74 = arith.addi %23, %c1_i32_76 : i32
      %c0_77 = arith.constant 0 : index
      %75 = arith.index_cast %74 : i32 to index
      %c0_78 = arith.constant 0 : index
      %c1_79 = arith.constant 1 : index
      %76 = vector.load %arg1[%c0_77, %75, %c0_78, %c1_79] : memref<1x18x8x456xbf16, #tpu.memory_space<vmem>>, vector<1x1x8x384xbf16>
      %77 = vector.shape_cast %76 : vector<1x1x8x384xbf16> to vector<8x384xbf16>
      %c80 = arith.constant 80 : index
      %c0_80 = arith.constant 0 : index
      %78 = vector.load %arg12[%c80, %c0_80] : memref<432x384xbf16, #tpu.memory_space<vmem>>, vector<8x384xbf16>
      tpu.vector_store %arg12[%c80, %c0_80], %77 {strides = array<i32>} : memref<432x384xbf16, #tpu.memory_space<vmem>>, vector<8x384xbf16>,
      %c1_i32_81 = arith.constant 1 : i32
      %79 = arith.addi %23, %c1_i32_81 : i32
      %c0_82 = arith.constant 0 : index
      %80 = arith.index_cast %79 : i32 to index
      %c0_83 = arith.constant 0 : index
      %c2_84 = arith.constant 2 : index
      %81 = vector.load %arg1[%c0_82, %80, %c0_83, %c2_84] : memref<1x18x8x456xbf16, #tpu.memory_space<vmem>>, vector<1x1x8x384xbf16>
      %82 = vector.shape_cast %81 : vector<1x1x8x384xbf16> to vector<8x384xbf16>
      %c88 = arith.constant 88 : index
      %c0_85 = arith.constant 0 : index
      %83 = vector.load %arg12[%c88, %c0_85] : memref<432x384xbf16, #tpu.memory_space<vmem>>, vector<8x384xbf16>
      tpu.vector_store %arg12[%c88, %c0_85], %82 {strides = array<i32>} : memref<432x384xbf16, #tpu.memory_space<vmem>>, vector<8x384xbf16>,
      %c1_i32_86 = arith.constant 1 : i32
      %84 = arith.addi %23, %c1_i32_86 : i32
      %c0_87 = arith.constant 0 : index
      %85 = arith.index_cast %84 : i32 to index
      %c0_88 = arith.constant 0 : index
      %c24_89 = arith.constant 24 : index
      %86 = vector.load %arg1[%c0_87, %85, %c0_88, %c24_89] : memref<1x18x8x456xbf16, #tpu.memory_space<vmem>>, vector<1x1x8x384xbf16>
      %87 = vector.shape_cast %86 : vector<1x1x8x384xbf16> to vector<8x384xbf16>
      %c96 = arith.constant 96 : index
      %c0_90 = arith.constant 0 : index
      %88 = vector.load %arg12[%c96, %c0_90] : memref<432x384xbf16, #tpu.memory_space<vmem>>, vector<8x384xbf16>
      tpu.vector_store %arg12[%c96, %c0_90], %87 {strides = array<i32>} : memref<432x384xbf16, #tpu.memory_space<vmem>>, vector<8x384xbf16>,
      %c1_i32_91 = arith.constant 1 : i32
      %89 = arith.addi %23, %c1_i32_91 : i32
      %c0_92 = arith.constant 0 : index
      %90 = arith.index_cast %89 : i32 to index
      %c0_93 = arith.constant 0 : index
      %c25_94 = arith.constant 25 : index
      %91 = vector.load %arg1[%c0_92, %90, %c0_93, %c25_94] : memref<1x18x8x456xbf16, #tpu.memory_space<vmem>>, vector<1x1x8x384xbf16>
      %92 = vector.shape_cast %91 : vector<1x1x8x384xbf16> to vector<8x384xbf16>
      %c104 = arith.constant 104 : index
      %c0_95 = arith.constant 0 : index
      %93 = vector.load %arg12[%c104, %c0_95] : memref<432x384xbf16, #tpu.memory_space<vmem>>, vector<8x384xbf16>
      tpu.vector_store %arg12[%c104, %c0_95], %92 {strides = array<i32>} : memref<432x384xbf16, #tpu.memory_space<vmem>>, vector<8x384xbf16>,
      %c1_i32_96 = arith.constant 1 : i32
      %94 = arith.addi %23, %c1_i32_96 : i32
      %c0_97 = arith.constant 0 : index
      %95 = arith.index_cast %94 : i32 to index
      %c0_98 = arith.constant 0 : index
      %c26_99 = arith.constant 26 : index
      %96 = vector.load %arg1[%c0_97, %95, %c0_98, %c26_99] : memref<1x18x8x456xbf16, #tpu.memory_space<vmem>>, vector<1x1x8x384xbf16>
      %97 = vector.shape_cast %96 : vector<1x1x8x384xbf16> to vector<8x384xbf16>
      %c112 = arith.constant 112 : index
      %c0_100 = arith.constant 0 : index
      %98 = vector.load %arg12[%c112, %c0_100] : memref<432x384xbf16, #tpu.memory_space<vmem>>, vector<8x384xbf16>
      tpu.vector_store %arg12[%c112, %c0_100], %97 {strides = array<i32>} : memref<432x384xbf16, #tpu.memory_space<vmem>>, vector<8x384xbf16>,
      %c1_i32_101 = arith.constant 1 : i32
      %99 = arith.addi %23, %c1_i32_101 : i32
      %c0_102 = arith.constant 0 : index
      %100 = arith.index_cast %99 : i32 to index
      %c0_103 = arith.constant 0 : index
      %c48_104 = arith.constant 48 : index
      %101 = vector.load %arg1[%c0_102, %100, %c0_103, %c48_104] : memref<1x18x8x456xbf16, #tpu.memory_space<vmem>>, vector<1x1x8x384xbf16>
      %102 = vector.shape_cast %101 : vector<1x1x8x384xbf16> to vector<8x384xbf16>
      %c120 = arith.constant 120 : index
      %c0_105 = arith.constant 0 : index
      %103 = vector.load %arg12[%c120, %c0_105] : memref<432x384xbf16, #tpu.memory_space<vmem>>, vector<8x384xbf16>
      tpu.vector_store %arg12[%c120, %c0_105], %102 {strides = array<i32>} : memref<432x384xbf16, #tpu.memory_space<vmem>>, vector<8x384xbf16>,
      %c1_i32_106 = arith.constant 1 : i32
      %104 = arith.addi %23, %c1_i32_106 : i32
      %c0_107 = arith.constant 0 : index
      %105 = arith.index_cast %104 : i32 to index
      %c0_108 = arith.constant 0 : index
      %c49_109 = arith.constant 49 : index
      %106 = vector.load %arg1[%c0_107, %105, %c0_108, %c49_109] : memref<1x18x8x456xbf16, #tpu.memory_space<vmem>>, vector<1x1x8x384xbf16>
      %107 = vector.shape_cast %106 : vector<1x1x8x384xbf16> to vector<8x384xbf16>
      %c128 = arith.constant 128 : index
      %c0_110 = arith.constant 0 : index
      %108 = vector.load %arg12[%c128, %c0_110] : memref<432x384xbf16, #tpu.memory_space<vmem>>, vector<8x384xbf16>
      tpu.vector_store %arg12[%c128, %c0_110], %107 {strides = array<i32>} : memref<432x384xbf16, #tpu.memory_space<vmem>>, vector<8x384xbf16>,
      %c1_i32_111 = arith.constant 1 : i32
      %109 = arith.addi %23, %c1_i32_111 : i32
      %c0_112 = arith.constant 0 : index
      %110 = arith.index_cast %109 : i32 to index
      %c0_113 = arith.constant 0 : index
      %c50_114 = arith.constant 50 : index
      %111 = vector.load %arg1[%c0_112, %110, %c0_113, %c50_114] : memref<1x18x8x456xbf16, #tpu.memory_space<vmem>>, vector<1x1x8x384xbf16>
      %112 = vector.shape_cast %111 : vector<1x1x8x384xbf16> to vector<8x384xbf16>
      %c136 = arith.constant 136 : index
      %c0_115 = arith.constant 0 : index
      %113 = vector.load %arg12[%c136, %c0_115] : memref<432x384xbf16, #tpu.memory_space<vmem>>, vector<8x384xbf16>
      tpu.vector_store %arg12[%c136, %c0_115], %112 {strides = array<i32>} : memref<432x384xbf16, #tpu.memory_space<vmem>>, vector<8x384xbf16>,
      %c2_i32 = arith.constant 2 : i32
      %114 = arith.addi %23, %c2_i32 : i32
      %c0_116 = arith.constant 0 : index
      %115 = arith.index_cast %114 : i32 to index
      %c0_117 = arith.constant 0 : index
      %c0_118 = arith.constant 0 : index
      %116 = vector.load %arg1[%c0_116, %115, %c0_117, %c0_118] : memref<1x18x8x456xbf16, #tpu.memory_space<vmem>>, vector<1x1x8x384xbf16>
      %117 = vector.shape_cast %116 : vector<1x1x8x384xbf16> to vector<8x384xbf16>
      %c144 = arith.constant 144 : index
      %c0_119 = arith.constant 0 : index
      %118 = vector.load %arg12[%c144, %c0_119] : memref<432x384xbf16, #tpu.memory_space<vmem>>, vector<8x384xbf16>
      tpu.vector_store %arg12[%c144, %c0_119], %117 {strides = array<i32>} : memref<432x384xbf16, #tpu.memory_space<vmem>>, vector<8x384xbf16>,
      %c2_i32_120 = arith.constant 2 : i32
      %119 = arith.addi %23, %c2_i32_120 : i32
      %c0_121 = arith.constant 0 : index
      %120 = arith.index_cast %119 : i32 to index
      %c0_122 = arith.constant 0 : index
      %c1_123 = arith.constant 1 : index
      %121 = vector.load %arg1[%c0_121, %120, %c0_122, %c1_123] : memref<1x18x8x456xbf16, #tpu.memory_space<vmem>>, vector<1x1x8x384xbf16>
      %122 = vector.shape_cast %121 : vector<1x1x8x384xbf16> to vector<8x384xbf16>
      %c152 = arith.constant 152 : index
      %c0_124 = arith.constant 0 : index
      %123 = vector.load %arg12[%c152, %c0_124] : memref<432x384xbf16, #tpu.memory_space<vmem>>, vector<8x384xbf16>
      tpu.vector_store %arg12[%c152, %c0_124], %122 {strides = array<i32>} : memref<432x384xbf16, #tpu.memory_space<vmem>>, vector<8x384xbf16>,
      %c2_i32_125 = arith.constant 2 : i32
      %124 = arith.addi %23, %c2_i32_125 : i32
      %c0_126 = arith.constant 0 : index
      %125 = arith.index_cast %124 : i32 to index
      %c0_127 = arith.constant 0 : index
      %c2_128 = arith.constant 2 : index
      %126 = vector.load %arg1[%c0_126, %125, %c0_127, %c2_128] : memref<1x18x8x456xbf16, #tpu.memory_space<vmem>>, vector<1x1x8x384xbf16>
      %127 = vector.shape_cast %126 : vector<1x1x8x384xbf16> to vector<8x384xbf16>
      %c160 = arith.constant 160 : index
      %c0_129 = arith.constant 0 : index
      %128 = vector.load %arg12[%c160, %c0_129] : memref<432x384xbf16, #tpu.memory_space<vmem>>, vector<8x384xbf16>
      tpu.vector_store %arg12[%c160, %c0_129], %127 {strides = array<i32>} : memref<432x384xbf16, #tpu.memory_space<vmem>>, vector<8x384xbf16>,
      %c2_i32_130 = arith.constant 2 : i32
      %129 = arith.addi %23, %c2_i32_130 : i32
      %c0_131 = arith.constant 0 : index
      %130 = arith.index_cast %129 : i32 to index
      %c0_132 = arith.constant 0 : index
      %c24_133 = arith.constant 24 : index
      %131 = vector.load %arg1[%c0_131, %130, %c0_132, %c24_133] : memref<1x18x8x456xbf16, #tpu.memory_space<vmem>>, vector<1x1x8x384xbf16>
      %132 = vector.shape_cast %131 : vector<1x1x8x384xbf16> to vector<8x384xbf16>
      %c168 = arith.constant 168 : index
      %c0_134 = arith.constant 0 : index
      %133 = vector.load %arg12[%c168, %c0_134] : memref<432x384xbf16, #tpu.memory_space<vmem>>, vector<8x384xbf16>
      tpu.vector_store %arg12[%c168, %c0_134], %132 {strides = array<i32>} : memref<432x384xbf16, #tpu.memory_space<vmem>>, vector<8x384xbf16>,
      %c2_i32_135 = arith.constant 2 : i32
      %134 = arith.addi %23, %c2_i32_135 : i32
      %c0_136 = arith.constant 0 : index
      %135 = arith.index_cast %134 : i32 to index
      %c0_137 = arith.constant 0 : index
      %c25_138 = arith.constant 25 : index
      %136 = vector.load %arg1[%c0_136, %135, %c0_137, %c25_138] : memref<1x18x8x456xbf16, #tpu.memory_space<vmem>>, vector<1x1x8x384xbf16>
      %137 = vector.shape_cast %136 : vector<1x1x8x384xbf16> to vector<8x384xbf16>
      %c176 = arith.constant 176 : index
      %c0_139 = arith.constant 0 : index
      %138 = vector.load %arg12[%c176, %c0_139] : memref<432x384xbf16, #tpu.memory_space<vmem>>, vector<8x384xbf16>
      tpu.vector_store %arg12[%c176, %c0_139], %137 {strides = array<i32>} : memref<432x384xbf16, #tpu.memory_space<vmem>>, vector<8x384xbf16>,
      %c2_i32_140 = arith.constant 2 : i32
      %139 = arith.addi %23, %c2_i32_140 : i32
      %c0_141 = arith.constant 0 : index
      %140 = arith.index_cast %139 : i32 to index
      %c0_142 = arith.constant 0 : index
      %c26_143 = arith.constant 26 : index
      %141 = vector.load %arg1[%c0_141, %140, %c0_142, %c26_143] : memref<1x18x8x456xbf16, #tpu.memory_space<vmem>>, vector<1x1x8x384xbf16>
      %142 = vector.shape_cast %141 : vector<1x1x8x384xbf16> to vector<8x384xbf16>
      %c184 = arith.constant 184 : index
      %c0_144 = arith.constant 0 : index
      %143 = vector.load %arg12[%c184, %c0_144] : memref<432x384xbf16, #tpu.memory_space<vmem>>, vector<8x384xbf16>
      tpu.vector_store %arg12[%c184, %c0_144], %142 {strides = array<i32>} : memref<432x384xbf16, #tpu.memory_space<vmem>>, vector<8x384xbf16>,
      %c2_i32_145 = arith.constant 2 : i32
      %144 = arith.addi %23, %c2_i32_145 : i32
      %c0_146 = arith.constant 0 : index
      %145 = arith.index_cast %144 : i32 to index
      %c0_147 = arith.constant 0 : index
      %c48_148 = arith.constant 48 : index
      %146 = vector.load %arg1[%c0_146, %145, %c0_147, %c48_148] : memref<1x18x8x456xbf16, #tpu.memory_space<vmem>>, vector<1x1x8x384xbf16>
      %147 = vector.shape_cast %146 : vector<1x1x8x384xbf16> to vector<8x384xbf16>
      %c192 = arith.constant 192 : index
      %c0_149 = arith.constant 0 : index
      %148 = vector.load %arg12[%c192, %c0_149] : memref<432x384xbf16, #tpu.memory_space<vmem>>, vector<8x384xbf16>
      tpu.vector_store %arg12[%c192, %c0_149], %147 {strides = array<i32>} : memref<432x384xbf16, #tpu.memory_space<vmem>>, vector<8x384xbf16>,
      %c2_i32_150 = arith.constant 2 : i32
      %149 = arith.addi %23, %c2_i32_150 : i32
      %c0_151 = arith.constant 0 : index
      %150 = arith.index_cast %149 : i32 to index
      %c0_152 = arith.constant 0 : index
      %c49_153 = arith.constant 49 : index
      %151 = vector.load %arg1[%c0_151, %150, %c0_152, %c49_153] : memref<1x18x8x456xbf16, #tpu.memory_space<vmem>>, vector<1x1x8x384xbf16>
      %152 = vector.shape_cast %151 : vector<1x1x8x384xbf16> to vector<8x384xbf16>
      %c200 = arith.constant 200 : index
      %c0_154 = arith.constant 0 : index
      %153 = vector.load %arg12[%c200, %c0_154] : memref<432x384xbf16, #tpu.memory_space<vmem>>, vector<8x384xbf16>
      tpu.vector_store %arg12[%c200, %c0_154], %152 {strides = array<i32>} : memref<432x384xbf16, #tpu.memory_space<vmem>>, vector<8x384xbf16>,
      %c2_i32_155 = arith.constant 2 : i32
      %154 = arith.addi %23, %c2_i32_155 : i32
      %c0_156 = arith.constant 0 : index
      %155 = arith.index_cast %154 : i32 to index
      %c0_157 = arith.constant 0 : index
      %c50_158 = arith.constant 50 : index
      %156 = vector.load %arg1[%c0_156, %155, %c0_157, %c50_158] : memref<1x18x8x456xbf16, #tpu.memory_space<vmem>>, vector<1x1x8x384xbf16>
      %157 = vector.shape_cast %156 : vector<1x1x8x384xbf16> to vector<8x384xbf16>
      %c208 = arith.constant 208 : index
      %c0_159 = arith.constant 0 : index
      %158 = vector.load %arg12[%c208, %c0_159] : memref<432x384xbf16, #tpu.memory_space<vmem>>, vector<8x384xbf16>
      tpu.vector_store %arg12[%c208, %c0_159], %157 {strides = array<i32>} : memref<432x384xbf16, #tpu.memory_space<vmem>>, vector<8x384xbf16>,
      %c0_i32_160 = arith.constant 0 : i32
      %159 = arith.addi %23, %c0_i32_160 : i32
      %160 = arith.index_cast %159 : i32 to index
      %c0_161 = arith.constant 0 : index
      %c0_162 = arith.constant 0 : index
      %161 = vector.load %arg11[%160, %c0_161, %c0_162] : memref<18x8x456xbf16, #tpu.memory_space<vmem>>, vector<1x8x384xbf16>
      %162 = vector.shape_cast %161 : vector<1x8x384xbf16> to vector<8x384xbf16>
      %c216 = arith.constant 216 : index
      %c0_163 = arith.constant 0 : index
      %163 = vector.load %arg12[%c216, %c0_163] : memref<432x384xbf16, #tpu.memory_space<vmem>>, vector<8x384xbf16>
      tpu.vector_store %arg12[%c216, %c0_163], %162 {strides = array<i32>} : memref<432x384xbf16, #tpu.memory_space<vmem>>, vector<8x384xbf16>,
      %c0_i32_164 = arith.constant 0 : i32
      %164 = arith.addi %23, %c0_i32_164 : i32
      %165 = arith.index_cast %164 : i32 to index
      %c0_165 = arith.constant 0 : index
      %c1_166 = arith.constant 1 : index
      %166 = vector.load %arg11[%165, %c0_165, %c1_166] : memref<18x8x456xbf16, #tpu.memory_space<vmem>>, vector<1x8x384xbf16>
      %167 = vector.shape_cast %166 : vector<1x8x384xbf16> to vector<8x384xbf16>
      %c224 = arith.constant 224 : index
      %c0_167 = arith.constant 0 : index
      %168 = vector.load %arg12[%c224, %c0_167] : memref<432x384xbf16, #tpu.memory_space<vmem>>, vector<8x384xbf16>
      tpu.vector_store %arg12[%c224, %c0_167], %167 {strides = array<i32>} : memref<432x384xbf16, #tpu.memory_space<vmem>>, vector<8x384xbf16>,
      %c0_i32_168 = arith.constant 0 : i32
      %169 = arith.addi %23, %c0_i32_168 : i32
      %170 = arith.index_cast %169 : i32 to index
      %c0_169 = arith.constant 0 : index
      %c2_170 = arith.constant 2 : index
      %171 = vector.load %arg11[%170, %c0_169, %c2_170] : memref<18x8x456xbf16, #tpu.memory_space<vmem>>, vector<1x8x384xbf16>
      %172 = vector.shape_cast %171 : vector<1x8x384xbf16> to vector<8x384xbf16>
      %c232 = arith.constant 232 : index
      %c0_171 = arith.constant 0 : index
      %173 = vector.load %arg12[%c232, %c0_171] : memref<432x384xbf16, #tpu.memory_space<vmem>>, vector<8x384xbf16>
      tpu.vector_store %arg12[%c232, %c0_171], %172 {strides = array<i32>} : memref<432x384xbf16, #tpu.memory_space<vmem>>, vector<8x384xbf16>,
      %c0_i32_172 = arith.constant 0 : i32
      %174 = arith.addi %23, %c0_i32_172 : i32
      %175 = arith.index_cast %174 : i32 to index
      %c0_173 = arith.constant 0 : index
      %c24_174 = arith.constant 24 : index
      %176 = vector.load %arg11[%175, %c0_173, %c24_174] : memref<18x8x456xbf16, #tpu.memory_space<vmem>>, vector<1x8x384xbf16>
      %177 = vector.shape_cast %176 : vector<1x8x384xbf16> to vector<8x384xbf16>
      %c240 = arith.constant 240 : index
      %c0_175 = arith.constant 0 : index
      %178 = vector.load %arg12[%c240, %c0_175] : memref<432x384xbf16, #tpu.memory_space<vmem>>, vector<8x384xbf16>
      tpu.vector_store %arg12[%c240, %c0_175], %177 {strides = array<i32>} : memref<432x384xbf16, #tpu.memory_space<vmem>>, vector<8x384xbf16>,
      %c0_i32_176 = arith.constant 0 : i32
      %179 = arith.addi %23, %c0_i32_176 : i32
      %180 = arith.index_cast %179 : i32 to index
      %c0_177 = arith.constant 0 : index
      %c25_178 = arith.constant 25 : index
      %181 = vector.load %arg11[%180, %c0_177, %c25_178] : memref<18x8x456xbf16, #tpu.memory_space<vmem>>, vector<1x8x384xbf16>
      %182 = vector.shape_cast %181 : vector<1x8x384xbf16> to vector<8x384xbf16>
      %c248 = arith.constant 248 : index
      %c0_179 = arith.constant 0 : index
      %183 = vector.load %arg12[%c248, %c0_179] : memref<432x384xbf16, #tpu.memory_space<vmem>>, vector<8x384xbf16>
      tpu.vector_store %arg12[%c248, %c0_179], %182 {strides = array<i32>} : memref<432x384xbf16, #tpu.memory_space<vmem>>, vector<8x384xbf16>,
      %c0_i32_180 = arith.constant 0 : i32
      %184 = arith.addi %23, %c0_i32_180 : i32
      %185 = arith.index_cast %184 : i32 to index
      %c0_181 = arith.constant 0 : index
      %c26_182 = arith.constant 26 : index
      %186 = vector.load %arg11[%185, %c0_181, %c26_182] : memref<18x8x456xbf16, #tpu.memory_space<vmem>>, vector<1x8x384xbf16>
      %187 = vector.shape_cast %186 : vector<1x8x384xbf16> to vector<8x384xbf16>
      %c256 = arith.constant 256 : index
      %c0_183 = arith.constant 0 : index
      %188 = vector.load %arg12[%c256, %c0_183] : memref<432x384xbf16, #tpu.memory_space<vmem>>, vector<8x384xbf16>
      tpu.vector_store %arg12[%c256, %c0_183], %187 {strides = array<i32>} : memref<432x384xbf16, #tpu.memory_space<vmem>>, vector<8x384xbf16>,
      %c0_i32_184 = arith.constant 0 : i32
      %189 = arith.addi %23, %c0_i32_184 : i32
      %190 = arith.index_cast %189 : i32 to index
      %c0_185 = arith.constant 0 : index
      %c48_186 = arith.constant 48 : index
      %191 = vector.load %arg11[%190, %c0_185, %c48_186] : memref<18x8x456xbf16, #tpu.memory_space<vmem>>, vector<1x8x384xbf16>
      %192 = vector.shape_cast %191 : vector<1x8x384xbf16> to vector<8x384xbf16>
      %c264 = arith.constant 264 : index
      %c0_187 = arith.constant 0 : index
      %193 = vector.load %arg12[%c264, %c0_187] : memref<432x384xbf16, #tpu.memory_space<vmem>>, vector<8x384xbf16>
      tpu.vector_store %arg12[%c264, %c0_187], %192 {strides = array<i32>} : memref<432x384xbf16, #tpu.memory_space<vmem>>, vector<8x384xbf16>,
      %c0_i32_188 = arith.constant 0 : i32
      %194 = arith.addi %23, %c0_i32_188 : i32
      %195 = arith.index_cast %194 : i32 to index
      %c0_189 = arith.constant 0 : index
      %c49_190 = arith.constant 49 : index
      %196 = vector.load %arg11[%195, %c0_189, %c49_190] : memref<18x8x456xbf16, #tpu.memory_space<vmem>>, vector<1x8x384xbf16>
      %197 = vector.shape_cast %196 : vector<1x8x384xbf16> to vector<8x384xbf16>
      %c272 = arith.constant 272 : index
      %c0_191 = arith.constant 0 : index
      %198 = vector.load %arg12[%c272, %c0_191] : memref<432x384xbf16, #tpu.memory_space<vmem>>, vector<8x384xbf16>
      tpu.vector_store %arg12[%c272, %c0_191], %197 {strides = array<i32>} : memref<432x384xbf16, #tpu.memory_space<vmem>>, vector<8x384xbf16>,
      %c0_i32_192 = arith.constant 0 : i32
      %199 = arith.addi %23, %c0_i32_192 : i32
      %200 = arith.index_cast %199 : i32 to index
      %c0_193 = arith.constant 0 : index
      %c50_194 = arith.constant 50 : index
      %201 = vector.load %arg11[%200, %c0_193, %c50_194] : memref<18x8x456xbf16, #tpu.memory_space<vmem>>, vector<1x8x384xbf16>
      %202 = vector.shape_cast %201 : vector<1x8x384xbf16> to vector<8x384xbf16>
      %c280 = arith.constant 280 : index
      %c0_195 = arith.constant 0 : index
      %203 = vector.load %arg12[%c280, %c0_195] : memref<432x384xbf16, #tpu.memory_space<vmem>>, vector<8x384xbf16>
      tpu.vector_store %arg12[%c280, %c0_195], %202 {strides = array<i32>} : memref<432x384xbf16, #tpu.memory_space<vmem>>, vector<8x384xbf16>,
      %c1_i32_196 = arith.constant 1 : i32
      %204 = arith.addi %23, %c1_i32_196 : i32
      %205 = arith.index_cast %204 : i32 to index
      %c0_197 = arith.constant 0 : index
      %c0_198 = arith.constant 0 : index
      %206 = vector.load %arg11[%205, %c0_197, %c0_198] : memref<18x8x456xbf16, #tpu.memory_space<vmem>>, vector<1x8x384xbf16>
      %207 = vector.shape_cast %206 : vector<1x8x384xbf16> to vector<8x384xbf16>
      %c288 = arith.constant 288 : index
      %c0_199 = arith.constant 0 : index
      %208 = vector.load %arg12[%c288, %c0_199] : memref<432x384xbf16, #tpu.memory_space<vmem>>, vector<8x384xbf16>
      tpu.vector_store %arg12[%c288, %c0_199], %207 {strides = array<i32>} : memref<432x384xbf16, #tpu.memory_space<vmem>>, vector<8x384xbf16>,
      %c1_i32_200 = arith.constant 1 : i32
      %209 = arith.addi %23, %c1_i32_200 : i32
      %210 = arith.index_cast %209 : i32 to index
      %c0_201 = arith.constant 0 : index
      %c1_202 = arith.constant 1 : index
      %211 = vector.load %arg11[%210, %c0_201, %c1_202] : memref<18x8x456xbf16, #tpu.memory_space<vmem>>, vector<1x8x384xbf16>
      %212 = vector.shape_cast %211 : vector<1x8x384xbf16> to vector<8x384xbf16>
      %c296 = arith.constant 296 : index
      %c0_203 = arith.constant 0 : index
      %213 = vector.load %arg12[%c296, %c0_203] : memref<432x384xbf16, #tpu.memory_space<vmem>>, vector<8x384xbf16>
      tpu.vector_store %arg12[%c296, %c0_203], %212 {strides = array<i32>} : memref<432x384xbf16, #tpu.memory_space<vmem>>, vector<8x384xbf16>,
      %c1_i32_204 = arith.constant 1 : i32
      %214 = arith.addi %23, %c1_i32_204 : i32
      %215 = arith.index_cast %214 : i32 to index
      %c0_205 = arith.constant 0 : index
      %c2_206 = arith.constant 2 : index
      %216 = vector.load %arg11[%215, %c0_205, %c2_206] : memref<18x8x456xbf16, #tpu.memory_space<vmem>>, vector<1x8x384xbf16>
      %217 = vector.shape_cast %216 : vector<1x8x384xbf16> to vector<8x384xbf16>
      %c304 = arith.constant 304 : index
      %c0_207 = arith.constant 0 : index
      %218 = vector.load %arg12[%c304, %c0_207] : memref<432x384xbf16, #tpu.memory_space<vmem>>, vector<8x384xbf16>
      tpu.vector_store %arg12[%c304, %c0_207], %217 {strides = array<i32>} : memref<432x384xbf16, #tpu.memory_space<vmem>>, vector<8x384xbf16>,
      %c1_i32_208 = arith.constant 1 : i32
      %219 = arith.addi %23, %c1_i32_208 : i32
      %220 = arith.index_cast %219 : i32 to index
      %c0_209 = arith.constant 0 : index
      %c24_210 = arith.constant 24 : index
      %221 = vector.load %arg11[%220, %c0_209, %c24_210] : memref<18x8x456xbf16, #tpu.memory_space<vmem>>, vector<1x8x384xbf16>
      %222 = vector.shape_cast %221 : vector<1x8x384xbf16> to vector<8x384xbf16>
      %c312 = arith.constant 312 : index
      %c0_211 = arith.constant 0 : index
      %223 = vector.load %arg12[%c312, %c0_211] : memref<432x384xbf16, #tpu.memory_space<vmem>>, vector<8x384xbf16>
      tpu.vector_store %arg12[%c312, %c0_211], %222 {strides = array<i32>} : memref<432x384xbf16, #tpu.memory_space<vmem>>, vector<8x384xbf16>,
      %c1_i32_212 = arith.constant 1 : i32
      %224 = arith.addi %23, %c1_i32_212 : i32
      %225 = arith.index_cast %224 : i32 to index
      %c0_213 = arith.constant 0 : index
      %c25_214 = arith.constant 25 : index
      %226 = vector.load %arg11[%225, %c0_213, %c25_214] : memref<18x8x456xbf16, #tpu.memory_space<vmem>>, vector<1x8x384xbf16>
      %227 = vector.shape_cast %226 : vector<1x8x384xbf16> to vector<8x384xbf16>
      %c320 = arith.constant 320 : index
      %c0_215 = arith.constant 0 : index
      %228 = vector.load %arg12[%c320, %c0_215] : memref<432x384xbf16, #tpu.memory_space<vmem>>, vector<8x384xbf16>
      tpu.vector_store %arg12[%c320, %c0_215], %227 {strides = array<i32>} : memref<432x384xbf16, #tpu.memory_space<vmem>>, vector<8x384xbf16>,
      %c1_i32_216 = arith.constant 1 : i32
      %229 = arith.addi %23, %c1_i32_216 : i32
      %230 = arith.index_cast %229 : i32 to index
      %c0_217 = arith.constant 0 : index
      %c26_218 = arith.constant 26 : index
      %231 = vector.load %arg11[%230, %c0_217, %c26_218] : memref<18x8x456xbf16, #tpu.memory_space<vmem>>, vector<1x8x384xbf16>
      %232 = vector.shape_cast %231 : vector<1x8x384xbf16> to vector<8x384xbf16>
      %c328 = arith.constant 328 : index
      %c0_219 = arith.constant 0 : index
      %233 = vector.load %arg12[%c328, %c0_219] : memref<432x384xbf16, #tpu.memory_space<vmem>>, vector<8x384xbf16>
      tpu.vector_store %arg12[%c328, %c0_219], %232 {strides = array<i32>} : memref<432x384xbf16, #tpu.memory_space<vmem>>, vector<8x384xbf16>,
      %c1_i32_220 = arith.constant 1 : i32
      %234 = arith.addi %23, %c1_i32_220 : i32
      %235 = arith.index_cast %234 : i32 to index
      %c0_221 = arith.constant 0 : index
      %c48_222 = arith.constant 48 : index
      %236 = vector.load %arg11[%235, %c0_221, %c48_222] : memref<18x8x456xbf16, #tpu.memory_space<vmem>>, vector<1x8x384xbf16>
      %237 = vector.shape_cast %236 : vector<1x8x384xbf16> to vector<8x384xbf16>
      %c336 = arith.constant 336 : index
      %c0_223 = arith.constant 0 : index
      %238 = vector.load %arg12[%c336, %c0_223] : memref<432x384xbf16, #tpu.memory_space<vmem>>, vector<8x384xbf16>
      tpu.vector_store %arg12[%c336, %c0_223], %237 {strides = array<i32>} : memref<432x384xbf16, #tpu.memory_space<vmem>>, vector<8x384xbf16>,
      %c1_i32_224 = arith.constant 1 : i32
      %239 = arith.addi %23, %c1_i32_224 : i32
      %240 = arith.index_cast %239 : i32 to index
      %c0_225 = arith.constant 0 : index
      %c49_226 = arith.constant 49 : index
      %241 = vector.load %arg11[%240, %c0_225, %c49_226] : memref<18x8x456xbf16, #tpu.memory_space<vmem>>, vector<1x8x384xbf16>
      %242 = vector.shape_cast %241 : vector<1x8x384xbf16> to vector<8x384xbf16>
      %c344 = arith.constant 344 : index
      %c0_227 = arith.constant 0 : index
      %243 = vector.load %arg12[%c344, %c0_227] : memref<432x384xbf16, #tpu.memory_space<vmem>>, vector<8x384xbf16>
      tpu.vector_store %arg12[%c344, %c0_227], %242 {strides = array<i32>} : memref<432x384xbf16, #tpu.memory_space<vmem>>, vector<8x384xbf16>,
      %c1_i32_228 = arith.constant 1 : i32
      %244 = arith.addi %23, %c1_i32_228 : i32
      %245 = arith.index_cast %244 : i32 to index
      %c0_229 = arith.constant 0 : index
      %c50_230 = arith.constant 50 : index
      %246 = vector.load %arg11[%245, %c0_229, %c50_230] : memref<18x8x456xbf16, #tpu.memory_space<vmem>>, vector<1x8x384xbf16>
      %247 = vector.shape_cast %246 : vector<1x8x384xbf16> to vector<8x384xbf16>
      %c352 = arith.constant 352 : index
      %c0_231 = arith.constant 0 : index
      %248 = vector.load %arg12[%c352, %c0_231] : memref<432x384xbf16, #tpu.memory_space<vmem>>, vector<8x384xbf16>
      tpu.vector_store %arg12[%c352, %c0_231], %247 {strides = array<i32>} : memref<432x384xbf16, #tpu.memory_space<vmem>>, vector<8x384xbf16>,
      %c2_i32_232 = arith.constant 2 : i32
      %249 = arith.addi %23, %c2_i32_232 : i32
      %250 = arith.index_cast %249 : i32 to index
      %c0_233 = arith.constant 0 : index
      %c0_234 = arith.constant 0 : index
      %251 = vector.load %arg11[%250, %c0_233, %c0_234] : memref<18x8x456xbf16, #tpu.memory_space<vmem>>, vector<1x8x384xbf16>
      %252 = vector.shape_cast %251 : vector<1x8x384xbf16> to vector<8x384xbf16>
      %c360 = arith.constant 360 : index
      %c0_235 = arith.constant 0 : index
      %253 = vector.load %arg12[%c360, %c0_235] : memref<432x384xbf16, #tpu.memory_space<vmem>>, vector<8x384xbf16>
      tpu.vector_store %arg12[%c360, %c0_235], %252 {strides = array<i32>} : memref<432x384xbf16, #tpu.memory_space<vmem>>, vector<8x384xbf16>,
      %c2_i32_236 = arith.constant 2 : i32
      %254 = arith.addi %23, %c2_i32_236 : i32
      %255 = arith.index_cast %254 : i32 to index
      %c0_237 = arith.constant 0 : index
      %c1_238 = arith.constant 1 : index
      %256 = vector.load %arg11[%255, %c0_237, %c1_238] : memref<18x8x456xbf16, #tpu.memory_space<vmem>>, vector<1x8x384xbf16>
      %257 = vector.shape_cast %256 : vector<1x8x384xbf16> to vector<8x384xbf16>
      %c368 = arith.constant 368 : index
      %c0_239 = arith.constant 0 : index
      %258 = vector.load %arg12[%c368, %c0_239] : memref<432x384xbf16, #tpu.memory_space<vmem>>, vector<8x384xbf16>
      tpu.vector_store %arg12[%c368, %c0_239], %257 {strides = array<i32>} : memref<432x384xbf16, #tpu.memory_space<vmem>>, vector<8x384xbf16>,
      %c2_i32_240 = arith.constant 2 : i32
      %259 = arith.addi %23, %c2_i32_240 : i32
      %260 = arith.index_cast %259 : i32 to index
      %c0_241 = arith.constant 0 : index
      %c2_242 = arith.constant 2 : index
      %261 = vector.load %arg11[%260, %c0_241, %c2_242] : memref<18x8x456xbf16, #tpu.memory_space<vmem>>, vector<1x8x384xbf16>
      %262 = vector.shape_cast %261 : vector<1x8x384xbf16> to vector<8x384xbf16>
      %c376 = arith.constant 376 : index
      %c0_243 = arith.constant 0 : index
      %263 = vector.load %arg12[%c376, %c0_243] : memref<432x384xbf16, #tpu.memory_space<vmem>>, vector<8x384xbf16>
      tpu.vector_store %arg12[%c376, %c0_243], %262 {strides = array<i32>} : memref<432x384xbf16, #tpu.memory_space<vmem>>, vector<8x384xbf16>,
      %c2_i32_244 = arith.constant 2 : i32
      %264 = arith.addi %23, %c2_i32_244 : i32
      %265 = arith.index_cast %264 : i32 to index
      %c0_245 = arith.constant 0 : index
      %c24_246 = arith.constant 24 : index
      %266 = vector.load %arg11[%265, %c0_245, %c24_246] : memref<18x8x456xbf16, #tpu.memory_space<vmem>>, vector<1x8x384xbf16>
      %267 = vector.shape_cast %266 : vector<1x8x384xbf16> to vector<8x384xbf16>
      %c384 = arith.constant 384 : index
      %c0_247 = arith.constant 0 : index
      %268 = vector.load %arg12[%c384, %c0_247] : memref<432x384xbf16, #tpu.memory_space<vmem>>, vector<8x384xbf16>
      tpu.vector_store %arg12[%c384, %c0_247], %267 {strides = array<i32>} : memref<432x384xbf16, #tpu.memory_space<vmem>>, vector<8x384xbf16>,
      %c2_i32_248 = arith.constant 2 : i32
      %269 = arith.addi %23, %c2_i32_248 : i32
      %270 = arith.index_cast %269 : i32 to index
      %c0_249 = arith.constant 0 : index
      %c25_250 = arith.constant 25 : index
      %271 = vector.load %arg11[%270, %c0_249, %c25_250] : memref<18x8x456xbf16, #tpu.memory_space<vmem>>, vector<1x8x384xbf16>
      %272 = vector.shape_cast %271 : vector<1x8x384xbf16> to vector<8x384xbf16>
      %c392 = arith.constant 392 : index
      %c0_251 = arith.constant 0 : index
      %273 = vector.load %arg12[%c392, %c0_251] : memref<432x384xbf16, #tpu.memory_space<vmem>>, vector<8x384xbf16>
      tpu.vector_store %arg12[%c392, %c0_251], %272 {strides = array<i32>} : memref<432x384xbf16, #tpu.memory_space<vmem>>, vector<8x384xbf16>,
      %c2_i32_252 = arith.constant 2 : i32
      %274 = arith.addi %23, %c2_i32_252 : i32
      %275 = arith.index_cast %274 : i32 to index
      %c0_253 = arith.constant 0 : index
      %c26_254 = arith.constant 26 : index
      %276 = vector.load %arg11[%275, %c0_253, %c26_254] : memref<18x8x456xbf16, #tpu.memory_space<vmem>>, vector<1x8x384xbf16>
      %277 = vector.shape_cast %276 : vector<1x8x384xbf16> to vector<8x384xbf16>
      %c400 = arith.constant 400 : index
      %c0_255 = arith.constant 0 : index
      %278 = vector.load %arg12[%c400, %c0_255] : memref<432x384xbf16, #tpu.memory_space<vmem>>, vector<8x384xbf16>
      tpu.vector_store %arg12[%c400, %c0_255], %277 {strides = array<i32>} : memref<432x384xbf16, #tpu.memory_space<vmem>>, vector<8x384xbf16>,
      %c2_i32_256 = arith.constant 2 : i32
      %279 = arith.addi %23, %c2_i32_256 : i32
      %280 = arith.index_cast %279 : i32 to index
      %c0_257 = arith.constant 0 : index
      %c48_258 = arith.constant 48 : index
      %281 = vector.load %arg11[%280, %c0_257, %c48_258] : memref<18x8x456xbf16, #tpu.memory_space<vmem>>, vector<1x8x384xbf16>
      %282 = vector.shape_cast %281 : vector<1x8x384xbf16> to vector<8x384xbf16>
      %c408 = arith.constant 408 : index
      %c0_259 = arith.constant 0 : index
      %283 = vector.load %arg12[%c408, %c0_259] : memref<432x384xbf16, #tpu.memory_space<vmem>>, vector<8x384xbf16>
      tpu.vector_store %arg12[%c408, %c0_259], %282 {strides = array<i32>} : memref<432x384xbf16, #tpu.memory_space<vmem>>, vector<8x384xbf16>,
      %c2_i32_260 = arith.constant 2 : i32
      %284 = arith.addi %23, %c2_i32_260 : i32
      %285 = arith.index_cast %284 : i32 to index
      %c0_261 = arith.constant 0 : index
      %c49_262 = arith.constant 49 : index
      %286 = vector.load %arg11[%285, %c0_261, %c49_262] : memref<18x8x456xbf16, #tpu.memory_space<vmem>>, vector<1x8x384xbf16>
      %287 = vector.shape_cast %286 : vector<1x8x384xbf16> to vector<8x384xbf16>
      %c416 = arith.constant 416 : index
      %c0_263 = arith.constant 0 : index
      %288 = vector.load %arg12[%c416, %c0_263] : memref<432x384xbf16, #tpu.memory_space<vmem>>, vector<8x384xbf16>
      tpu.vector_store %arg12[%c416, %c0_263], %287 {strides = array<i32>} : memref<432x384xbf16, #tpu.memory_space<vmem>>, vector<8x384xbf16>,
      %c2_i32_264 = arith.constant 2 : i32
      %289 = arith.addi %23, %c2_i32_264 : i32
      %290 = arith.index_cast %289 : i32 to index
      %c0_265 = arith.constant 0 : index
      %c50_266 = arith.constant 50 : index
      %291 = vector.load %arg11[%290, %c0_265, %c50_266] : memref<18x8x456xbf16, #tpu.memory_space<vmem>>, vector<1x8x384xbf16>
      %292 = vector.shape_cast %291 : vector<1x8x384xbf16> to vector<8x384xbf16>
      %c424 = arith.constant 424 : index
      %c0_267 = arith.constant 0 : index
      %293 = vector.load %arg12[%c424, %c0_267] : memref<432x384xbf16, #tpu.memory_space<vmem>>, vector<8x384xbf16>
      tpu.vector_store %arg12[%c424, %c0_267], %292 {strides = array<i32>} : memref<432x384xbf16, #tpu.memory_space<vmem>>, vector<8x384xbf16>,
      %c0_268 = arith.constant 0 : index
      %c0_269 = arith.constant 0 : index
      %294 = vector.load %arg7[%c0_268, %c0_269] : memref<8x432xbf16, #tpu.memory_space<vmem>>, vector<8x432xbf16>
      %c0_270 = arith.constant 0 : index
      %c0_271 = arith.constant 0 : index
      %295 = vector.load %arg12[%c0_270, %c0_271] : memref<432x384xbf16, #tpu.memory_space<vmem>>, vector<432x384xbf16>
      %cst_272 = arith.constant dense<0.000000e+00> : vector<8x384xf32>
      %296 = tpu.matmul %294, %295, %cst_272 {dimension_numbers = #tpu.dot_dimension_numbers<[1], [0], [0], [1], [0, 0, 1, 1], [], []>} : vector<8x432xbf16>, vector<432x384xbf16>, vector<8x384xf32> -> vector<8x384xf32>
      %297 = arith.addf %296, %3 : vector<8x384xf32>
      %cst_273 = arith.constant 0.000000e+00 : f32
      %298 = vector.broadcast %cst_273 : f32 to vector<8x384xf32>
      %299 = arith.cmpf oge, %297, %298 : vector<8x384xf32>
      %cst_274 = arith.constant 0.00999999977 : f32
      %300 = vector.broadcast %cst_274 : f32 to vector<8x384xf32>
      %301 = arith.mulf %300, %297 : vector<8x384xf32>
      %302 = arith.select %299, %297, %301 : vector<8x384xi1>, vector<8x384xf32>
      %c0_275 = arith.constant 0 : index
      %303 = arith.index_cast %23 : i32 to index
      %c0_276 = arith.constant 0 : index
      %c0_277 = arith.constant 0 : index
      %304 = vector.load %arg9[%c0_275, %303, %c0_276, %c0_277] : memref<1x16x8x384xf32, #tpu.memory_space<vmem>>, vector<1x1x8x384xf32>
      %305 = vector.shape_cast %304 : vector<1x1x8x384xf32> to vector<8x384xf32>
      %306 = vector.shape_cast %302 : vector<8x384xf32> to vector<1x1x8x384xf32>
      tpu.vector_store %arg9[%c0_275, %303, %c0_276, %c0_277], %306 {strides = array<i32>} : memref<1x16x8x384xf32, #tpu.memory_space<vmem>>, vector<1x1x8x384xf32>,
    }
    %c16_i32_28 = arith.constant 16 : i32
    return
  }
  func.func @transform_0(%arg0: i32) -> (i32, i32, i32, i32) {
    %c0_i32 = arith.constant 0 : i32
    %c0_i32_0 = arith.constant 0 : i32
    %c0_i32_1 = arith.constant 0 : i32
    %c0_i32_2 = arith.constant 0 : i32
    return %arg0, %c0_i32, %c0_i32_0, %c0_i32_1 : i32, i32, i32, i32
  }
  func.func @transform_1(%arg0: i32) -> (i32, i32) {
    %c0_i32 = arith.constant 0 : i32
    %c0_i32_0 = arith.constant 0 : i32
    %c0_i32_1 = arith.constant 0 : i32
    return %c0_i32, %c0_i32_0 : i32, i32
  }
  func.func @transform_2(%arg0: i32) -> (i32, i32) {
    %c0_i32 = arith.constant 0 : i32
    %c0_i32_0 = arith.constant 0 : i32
    %c0_i32_1 = arith.constant 0 : i32
    return %c0_i32, %c0_i32_0 : i32, i32
  }
  func.func @transform_3(%arg0: i32) -> (i32, i32) {
    %c0_i32 = arith.constant 0 : i32
    %c0_i32_0 = arith.constant 0 : i32
    %c0_i32_1 = arith.constant 0 : i32
    return %c0_i32, %c0_i32_0 : i32, i32
  }
  func.func @transform_4(%arg0: i32) -> (i32, i32) {
    %c0_i32 = arith.constant 0 : i32
    %c0_i32_0 = arith.constant 0 : i32
    %c0_i32_1 = arith.constant 0 : i32
    return %c0_i32, %c0_i32_0 : i32, i32
  }
  func.func @transform_5(%arg0: i32) -> (i32, i32) {
    %c0_i32 = arith.constant 0 : i32
    %c0_i32_0 = arith.constant 0 : i32
    %c0_i32_1 = arith.constant 0 : i32
    return %c0_i32, %c0_i32_0 : i32, i32
  }
  func.func @transform_6(%arg0: i32) -> (i32, i32) {
    %c0_i32 = arith.constant 0 : i32
    %c0_i32_0 = arith.constant 0 : i32
    %c0_i32_1 = arith.constant 0 : i32
    return %c0_i32, %c0_i32_0 : i32, i32
  }
  func.func @transform_7(%arg0: i32) -> (i32, i32) {
    %c0_i32 = arith.constant 0 : i32
    %c0_i32_0 = arith.constant 0 : i32
    %c0_i32_1 = arith.constant 0 : i32
    return %c0_i32, %c0_i32_0 : i32, i32
  }
  func.func @transform_8(%arg0: i32) -> (i32, i32, i32, i32) {
    %c0_i32 = arith.constant 0 : i32
    %c0_i32_0 = arith.constant 0 : i32
    %c0_i32_1 = arith.constant 0 : i32
    %c0_i32_2 = arith.constant 0 : i32
    return %arg0, %c0_i32, %c0_i32_0, %c0_i32_1 : i32, i32, i32, i32
  }
}

</mosaic_0001>

<llo_original>
// kernel: residual_block.1
$region0: #{residual_block.1}
  #allocation0 [shape = 'u32[]', space=smem, size = 0x4, offset = 0x4, fixed_abs, tag = 'smem constant byte address 0x4 - core index']
  #allocation1 [shape = 'u32[72,128]{1,0:T(1,128)}', space=vmem, size = 0x9000, scoped, tag = 'internal scratch']
  #allocation2 [shape = 'bf16[18,8,456]{2,1,0:T(8,128)(2,1)}', space=vmem, size = 0x24000, scoped, tag = 'scratch operand']
  #allocation3 [shape = 'bf16[18,8,456]{2,1,0:T(8,128)(2,1)}', space=vmem, size = 0x24000, scoped, tag = 'scratch operand']
  #allocation4 [shape = 'bf16[432,384]{1,0:T(8,128)(2,1)}', space=vmem, size = 0x51000, scoped, tag = 'scratch operand']
  %s0 = inlined_call_operand.vmem [shape: bf16[2,18,8,456], index: 0, kind: input, shape index: {}]
  %s1 = inlined_call_operand.vmem [shape: f32[8,384], index: 1, kind: input, shape index: {}]
  %s2 = inlined_call_operand.vmem [shape: bf16[8,216], index: 2, kind: input, shape index: {}]
  %s3 = inlined_call_operand.vmem [shape: f32[8,384], index: 3, kind: input, shape index: {}]
  %s4 = inlined_call_operand.vmem [shape: bf16[8,216], index: 4, kind: input, shape index: {}]
  %s5 = inlined_call_operand.vmem [shape: f32[8,384], index: 5, kind: input, shape index: {}]
  %s6 = inlined_call_operand.vmem [shape: bf16[8,432], index: 6, kind: input, shape index: {}]
  %s7 = inlined_call_operand.vmem [shape: f32[8,384], index: 7, kind: input, shape index: {}]
  %s8 = inlined_call_operand.vmem [shape: f32[2,16,8,384], index: 8, kind: output, shape index: {}]
  %s9 = sld [smem:[#allocation0]]
  $region86: #{residual_block.1} parent=0
    _
  %s11 = ssub.s32 1, %s9
  %s12 = scalar_select 0, %s11, %s9
  loop: start=0, step=1, limit=4
  $region2: #{residual_block.1} parent=0 // loop_pre_header
    _
  $region3: #{residual_block.1} parent=0 // loop_header
    %s14 = sphi 0, %s18
    %p15 = scmp.ge.s32.totalorder %s14, 4
    %s24 = sphi 0, %s26
    %s27 = sphi 0, %s24
    %s28 = sphi 0, %s27
    %s44 = sphi 0, %s28
    %s48 = sphi 0, %s48
    %s50 = sphi 0, %s48
    %s51 = sphi 0, %s50
    %s65 = sphi 0, %s51
    %s69 = sphi 0, %s69
    %s71 = sphi 0, %s69
    %s72 = sphi 0, %s71
    %s86 = sphi 0, %s72
    %s90 = sphi 0, %s90
    %s92 = sphi 0, %s90
    %s93 = sphi 0, %s92
    %s107 = sphi 0, %s93
    %s111 = sphi 0, %s111
    %s113 = sphi 0, %s111
    %s114 = sphi 0, %s113
    %s128 = sphi 0, %s114
    %s132 = sphi 0, %s132
    %s134 = sphi 0, %s132
    %s135 = sphi 0, %s134
    %s149 = sphi 0, %s135
    %s153 = sphi 0, %s153
    %s155 = sphi 0, %s153
    %s156 = sphi 0, %s155
    %s170 = sphi 0, %s156
    %s174 = sphi 0, %s174
    %s176 = sphi 0, %s174
    %s177 = sphi 0, %s176
    %s191 = sphi 0, %s177
    %s197 = sphi 0, %s199
    %s200 = sphi 0, %s197
    %s201 = sphi 0, %s200
    %s217 = sphi 0, %s201
  $region4: #{residual_block.1} parent=0 // loop_header_branch
    %17 = sbr.rel (%p15) target = $region8
  $region5: #{residual_block.1} parent=0 // loop_body
    %s19 = ssub.s32 %s14, 1
    %s20 = ssub.s32 %s14, 2
    %s21 = sadd.s32 %s14, 1
    %s22 = ssub.s32 %s14, %s21
    %p23 = scmp.eq.s32.totalorder %s22, 0
    %s25 = sadd.s32 %s24, 1
    %s26 = scalar_select %p23, %s24, %s25
    %p29 = pneg %p23
    %p30 = scmp.eq.s32.totalorder %s14, 1
    %p31 = por %p29, %p30
    %p32 = scmp.ne.s32.totalorder %s24, %s27
    %p33 = scmp.eq.s32.totalorder %s14, 0
    %p34 = por %p32, %p33
    %p35 = scmp.ne.s32.totalorder %s24, %s27
    %p36 = scmp.eq.s32.totalorder %s19, 1
    %p37 = por %p35, %p36
    %p38 = scmp.ne.s32.totalorder %s27, %s28
    %p39 = scmp.eq.s32.totalorder %s19, 0
    %p40 = por %p38, %p39
    %p41 = scmp.ne.s32.totalorder %s27, %s28
    %p42 = scmp.eq.s32.totalorder %s20, 1
    %p43 = por %p41, %p42
    %p45 = scmp.ne.s32.totalorder %s28, %s44
    %p46 = scmp.eq.s32.totalorder %s20, 0
    %p47 = por %p45, %p46
    %s49 = sadd.s32 %s48, 1
    %p52 = scmp.eq.s32.totalorder %s14, 1
    %p53 = scmp.ne.s32.totalorder %s48, %s50
    %p54 = scmp.eq.s32.totalorder %s14, 0
    %p55 = por %p53, %p54
    %p56 = scmp.ne.s32.totalorder %s48, %s50
    %p57 = scmp.eq.s32.totalorder %s19, 1
    %p58 = por %p56, %p57
    %p59 = scmp.ne.s32.totalorder %s50, %s51
    %p60 = scmp.eq.s32.totalorder %s19, 0
    %p61 = por %p59, %p60
    %p62 = scmp.ne.s32.totalorder %s50, %s51
    %p63 = scmp.eq.s32.totalorder %s20, 1
    %p64 = por %p62, %p63
    %p66 = scmp.ne.s32.totalorder %s51, %s65
    %p67 = scmp.eq.s32.totalorder %s20, 0
    %p68 = por %p66, %p67
    %s70 = sadd.s32 %s69, 1
    %p73 = scmp.eq.s32.totalorder %s14, 1
    %p74 = scmp.ne.s32.totalorder %s69, %s71
    %p75 = scmp.eq.s32.totalorder %s14, 0
    %p76 = por %p74, %p75
    %p77 = scmp.ne.s32.totalorder %s69, %s71
    %p78 = scmp.eq.s32.totalorder %s19, 1
    %p79 = por %p77, %p78
    %p80 = scmp.ne.s32.totalorder %s71, %s72
    %p81 = scmp.eq.s32.totalorder %s19, 0
    %p82 = por %p80, %p81
    %p83 = scmp.ne.s32.totalorder %s71, %s72
    %p84 = scmp.eq.s32.totalorder %s20, 1
    %p85 = por %p83, %p84
    %p87 = scmp.ne.s32.totalorder %s72, %s86
    %p88 = scmp.eq.s32.totalorder %s20, 0
    %p89 = por %p87, %p88
    %s91 = sadd.s32 %s90, 1
    %p94 = scmp.eq.s32.totalorder %s14, 1
    %p95 = scmp.ne.s32.totalorder %s90, %s92
    %p96 = scmp.eq.s32.totalorder %s14, 0
    %p97 = por %p95, %p96
    %p98 = scmp.ne.s32.totalorder %s90, %s92
    %p99 = scmp.eq.s32.totalorder %s19, 1
    %p100 = por %p98, %p99
    %p101 = scmp.ne.s32.totalorder %s92, %s93
    %p102 = scmp.eq.s32.totalorder %s19, 0
    %p103 = por %p101, %p102
    %p104 = scmp.ne.s32.totalorder %s92, %s93
    %p105 = scmp.eq.s32.totalorder %s20, 1
    %p106 = por %p104, %p105
    %p108 = scmp.ne.s32.totalorder %s93, %s107
    %p109 = scmp.eq.s32.totalorder %s20, 0
    %p110 = por %p108, %p109
    %s112 = sadd.s32 %s111, 1
    %p115 = scmp.eq.s32.totalorder %s14, 1
    %p116 = scmp.ne.s32.totalorder %s111, %s113
    %p117 = scmp.eq.s32.totalorder %s14, 0
    %p118 = por %p116, %p117
    %p119 = scmp.ne.s32.totalorder %s111, %s113
    %p120 = scmp.eq.s32.totalorder %s19, 1
    %p121 = por %p119, %p120
    %p122 = scmp.ne.s32.totalorder %s113, %s114
    %p123 = scmp.eq.s32.totalorder %s19, 0
    %p124 = por %p122, %p123
    %p125 = scmp.ne.s32.totalorder %s113, %s114
    %p126 = scmp.eq.s32.totalorder %s20, 1
    %p127 = por %p125, %p126
    %p129 = scmp.ne.s32.totalorder %s114, %s128
    %p130 = scmp.eq.s32.totalorder %s20, 0
    %p131 = por %p129, %p130
    %s133 = sadd.s32 %s132, 1
    %p136 = scmp.eq.s32.totalorder %s14, 1
    %p137 = scmp.ne.s32.totalorder %s132, %s134
    %p138 = scmp.eq.s32.totalorder %s14, 0
    %p139 = por %p137, %p138
    %p140 = scmp.ne.s32.totalorder %s132, %s134
    %p141 = scmp.eq.s32.totalorder %s19, 1
    %p142 = por %p140, %p141
    %p143 = scmp.ne.s32.totalorder %s134, %s135
    %p144 = scmp.eq.s32.totalorder %s19, 0
    %p145 = por %p143, %p144
    %p146 = scmp.ne.s32.totalorder %s134, %s135
    %p147 = scmp.eq.s32.totalorder %s20, 1
    %p148 = por %p146, %p147
    %p150 = scmp.ne.s32.totalorder %s135, %s149
    %p151 = scmp.eq.s32.totalorder %s20, 0
    %p152 = por %p150, %p151
    %s154 = sadd.s32 %s153, 1
    %p157 = scmp.eq.s32.totalorder %s14, 1
    %p158 = scmp.ne.s32.totalorder %s153, %s155
    %p159 = scmp.eq.s32.totalorder %s14, 0
    %p160 = por %p158, %p159
    %p161 = scmp.ne.s32.totalorder %s153, %s155
    %p162 = scmp.eq.s32.totalorder %s19, 1
    %p163 = por %p161, %p162
    %p164 = scmp.ne.s32.totalorder %s155, %s156
    %p165 = scmp.eq.s32.totalorder %s19, 0
    %p166 = por %p164, %p165
    %p167 = scmp.ne.s32.totalorder %s155, %s156
    %p168 = scmp.eq.s32.totalorder %s20, 1
    %p169 = por %p167, %p168
    %p171 = scmp.ne.s32.totalorder %s156, %s170
    %p172 = scmp.eq.s32.totalorder %s20, 0
    %p173 = por %p171, %p172
    %s175 = sadd.s32 %s174, 1
    %p178 = scmp.eq.s32.totalorder %s14, 1
    %p179 = scmp.ne.s32.totalorder %s174, %s176
    %p180 = scmp.eq.s32.totalorder %s14, 0
    %p181 = por %p179, %p180
    %p182 = scmp.ne.s32.totalorder %s174, %s176
    %p183 = scmp.eq.s32.totalorder %s19, 1
    %p184 = por %p182, %p183
    %p185 = scmp.ne.s32.totalorder %s176, %s177
    %p186 = scmp.eq.s32.totalorder %s19, 0
    %p187 = por %p185, %p186
    %p188 = scmp.ne.s32.totalorder %s176, %s177
    %p189 = scmp.eq.s32.totalorder %s20, 1
    %p190 = por %p188, %p189
    %p192 = scmp.ne.s32.totalorder %s177, %s191
    %p193 = scmp.eq.s32.totalorder %s20, 0
    %p194 = por %p192, %p193
    %s195 = ssub.s32 %s14, %s21
    %p196 = scmp.eq.s32.totalorder %s195, 0
    %s198 = sadd.s32 %s197, 1
    %s199 = scalar_select %p196, %s197, %s198
    %p202 = pneg %p196
    %p203 = scmp.eq.s32.totalorder %s14, 1
    %p204 = por %p202, %p203
    %p205 = scmp.ne.s32.totalorder %s197, %s200
    %p206 = scmp.eq.s32.totalorder %s14, 0
    %p207 = por %p205, %p206
    %p208 = scmp.ne.s32.totalorder %s197, %s200
    %p209 = scmp.eq.s32.totalorder %s19, 1
    %p210 = por %p208, %p209
    %p211 = scmp.ne.s32.totalorder %s200, %s201
    %p212 = scmp.eq.s32.totalorder %s19, 0
    %p213 = por %p211, %p212
    %p214 = scmp.ne.s32.totalorder %s200, %s201
    %p215 = scmp.eq.s32.totalorder %s20, 1
    %p216 = por %p214, %p215
    %p218 = scmp.ne.s32.totalorder %s201, %s217
    %p219 = scmp.eq.s32.totalorder %s20, 0
    %p220 = por %p218, %p219
    %p221 = scmp.le.s32.totalorder 1, %s14
    %p222 = scmp.lt.s32.totalorder %s14, 3
    %p223 = pnand %p221, %p222
    %p224 = pneg %p223
    // Predicated region
    $region9: #{residual_block.1} parent=5 // pred_check
      _
    $region10: #{residual_block.1} parent=5 // pred_check_branch
      %226 = sbr.rel (%p223) target = $region12
    $region11: #{residual_block.1} parent=5 // pred_region
      %s227 = ssub.s32 %s14, 1
      // Predicated region
      $region13: #{residual_block.1} parent=11 // pred_check
        %p228 = pneg %p61
      $region14: #{residual_block.1} parent=11 // pred_check_branch
        %230 = sbr.rel (%p228) target = $region16
      $region15: #{residual_block.1} parent=11 // pred_region
        _
      $region16: #{residual_block.1} parent=11 // pred_fallthru
        _
      // Predicated region
      $region17: #{residual_block.1} parent=11 // pred_check
        %p231 = pneg %p82
      $region18: #{residual_block.1} parent=11 // pred_check_branch
        %233 = sbr.rel (%p231) target = $region20
      $region19: #{residual_block.1} parent=11 // pred_region
        _
      $region20: #{residual_block.1} parent=11 // pred_fallthru
        _
      // Predicated region
      $region21: #{residual_block.1} parent=11 // pred_check
        %p234 = pneg %p103
      $region22: #{residual_block.1} parent=11 // pred_check_branch
        %236 = sbr.rel (%p234) target = $region24
      $region23: #{residual_block.1} parent=11 // pred_region
        _
      $region24: #{residual_block.1} parent=11 // pred_fallthru
        _
      // Predicated region
      $region25: #{residual_block.1} parent=11 // pred_check
        %p237 = pneg %p124
      $region26: #{residual_block.1} parent=11 // pred_check_branch
        %239 = sbr.rel (%p237) target = $region28
      $region27: #{residual_block.1} parent=11 // pred_region
        _
      $region28: #{residual_block.1} parent=11 // pred_fallthru
        _
      // Predicated region
      $region29: #{residual_block.1} parent=11 // pred_check
        %p240 = pneg %p145
      $region30: #{residual_block.1} parent=11 // pred_check_branch
        %242 = sbr.rel (%p240) target = $region32
      $region31: #{residual_block.1} parent=11 // pred_region
        _
      $region32: #{residual_block.1} parent=11 // pred_fallthru
        _
      // Predicated region
      $region33: #{residual_block.1} parent=11 // pred_check
        %p243 = pneg %p166
      $region34: #{residual_block.1} parent=11 // pred_check_branch
        %245 = sbr.rel (%p243) target = $region36
      $region35: #{residual_block.1} parent=11 // pred_region
        _
      $region36: #{residual_block.1} parent=11 // pred_fallthru
        _
      // Predicated region
      $region37: #{residual_block.1} parent=11 // pred_check
        %p246 = pneg %p187
      $region38: #{residual_block.1} parent=11 // pred_check_branch
        %248 = sbr.rel (%p246) target = $region40
      $region39: #{residual_block.1} parent=11 // pred_region
        _
      $region40: #{residual_block.1} parent=11 // pred_fallthru
        _
    $region12: #{residual_block.1} parent=5 // pred_fallthru
      _
    %p249 = scmp.lt.s32.totalorder %s14, 2
    // Predicated region
    $region41: #{residual_block.1} parent=5 // pred_check
      %p250 = pneg %p249
    $region42: #{residual_block.1} parent=5 // pred_check_branch
      %252 = sbr.rel (%p250) target = $region44
    $region43: #{residual_block.1} parent=5 // pred_region
      // Predicated region
      $region45: #{residual_block.1} parent=43 // pred_check
        %p253 = pneg %p34
      $region46: #{residual_block.1} parent=43 // pred_check_branch
        %255 = sbr.rel (%p253) target = $region48
      $region47: #{residual_block.1} parent=43 // pred_region
        %p256 = scmp.lt.s32.totalorder %s14, 1
        %s257 = scalar_select %p256, %s14, 1
        %s258 = smul.addr %s257, 72
        %s259 = smul.addr %s258, 4
        %s260 = scalar_lea.vmem %s0, %s259
      $region48: #{residual_block.1} parent=43 // pred_fallthru
        _
    $region44: #{residual_block.1} parent=5 // pred_fallthru
      _
    %p261 = scmp.le.s32.totalorder 1, %s14
    %p262 = scmp.lt.s32.totalorder %s14, 3
    %p263 = pnand %p261, %p262
    %p264 = pneg %p263
    // Predicated region
    $region49: #{residual_block.1} parent=5 // pred_check
      _
    $region50: #{residual_block.1} parent=5 // pred_check_branch
      %266 = sbr.rel (%p263) target = $region52
    $region51: #{residual_block.1} parent=5 // pred_region
      %s267 = ssub.s32 %s14, 1
      %p268 = scmp.lt.s32.totalorder %s19, 1
      %s269 = scalar_select %p268, %s19, 1
      %s270 = smul.addr %s269, 72
      %s271 = smul.addr %s270, 4
      %s272 = scalar_lea.vmem %s0, %s271
      %p273 = pneg %p40
      %p274 = pneg %p37
      %p275 = pneg %p61
      %p276 = pneg %p58
      %p277 = pneg %p82
      %p278 = pneg %p79
      %p279 = pneg %p103
      %p280 = pneg %p100
      %p281 = pneg %p124
      %p282 = pneg %p121
      %p283 = pneg %p145
      %p284 = pneg %p142
      %p285 = pneg %p166
      %p286 = pneg %p163
      %p287 = pneg %p187
      %p288 = pneg %p184
      %p289 = pneg %p213
      %p290 = pneg %p210
      %p291 = scmp.lt.s32.totalorder %s19, 1
      %s292 = scalar_select %p291, %s19, 1
      %s293 = smul.addr %s292, 48
      %s294 = smul.addr %s293, 8
      %s295 = scalar_lea.vmem %s8, %s294
      %p296 = scmp.lt.s32.totalorder %s19, 1
      %s297 = scalar_select %p296, %s19, 1
      %s298 = smul.addr %s297, 72
      %s299 = smul.addr %s298, 4
      %s300 = scalar_lea.vmem %s0, %s299
      %p301 = scmp.lt.s32.totalorder %s19, 1
      %s302 = scalar_select %p301, %s19, 1
      %s303 = smul.addr %s302, 48
      %s304 = smul.addr %s303, 8
      %s305 = scalar_lea.vmem %s8, %s304
      %v307 = vld [vmem:[%s1] sm:$0xff]
      %v308 = vld [vmem:[%s1 + $0x8] sm:$0xff]
      %v309 = vld [vmem:[%s1 + $0x10] sm:$0xff]
      %v310 = vld [vmem:[%s3] sm:$0xff]
      %v311 = vld [vmem:[%s3 + $0x8] sm:$0xff]
      %v312 = vld [vmem:[%s3 + $0x10] sm:$0xff]
      %v313 = vld [vmem:[%s5] sm:$0xff]
      %v314 = vld [vmem:[%s5 + $0x8] sm:$0xff]
      %v315 = vld [vmem:[%s5 + $0x10] sm:$0xff]
      %v316 = vld [vmem:[%s7] sm:$0xff]
      %v317 = vld [vmem:[%s7 + $0x8] sm:$0xff]
      %v318 = vld [vmem:[%s7 + $0x10] sm:$0xff]
      %319 = vst [vmem:[#allocation2] sm:$0xff] 0
      %vm320 = vcmask 1043456
      %vm321 = vcmask 588804
      %vm322 = vmor %vm321, %vm320
      %323 = vst.msk [vmem:[#allocation2 + $0x8] sm:$0xff] %vm322, 0
      %s324 = scalar_lea.vmem [#allocation2], 272
      %325 = vst [vmem:[%s324] sm:$0xff] 0
      %326 = vst.msk [vmem:[%s324 + $0x8] sm:$0xff] %vm322, 0
      %327 = vst [vmem:[#allocation3] sm:$0xff] 0
      %328 = vst.msk [vmem:[#allocation3 + $0x8] sm:$0xff] %vm322, 0
      %s329 = scalar_lea.vmem [#allocation3], 272
      %330 = vst [vmem:[%s329] sm:$0xff] 0
      %331 = vst.msk [vmem:[%s329 + $0x8] sm:$0xff] %vm322, 0
      loop: start=0, step=1, limit=16
      $region53: #{residual_block.1} parent=51 // loop_pre_header
        _
      $region54: #{residual_block.1} parent=51 // loop_header
        %s333 = sphi 0, %s337
        %p334 = scmp.ge.s32.totalorder %s333, 16
      $region55: #{residual_block.1} parent=51 // loop_header_branch
        %336 = sbr.rel (%p334) target = $region59
      $region56: #{residual_block.1} parent=51 // loop_body
        %s338 = smul.u32 %s333, 4
        %s339 = smul.addr %s338, 4
        %s340 = scalar_lea.vmem %s300, %s339
        %v341 = vld [vmem:[%s340] sm:$0xff]
        %v342 = vld [vmem:[%s340 + $0x8] sm:$0xf]
        %343 = vst [vmem:[#allocation4] sm:$0xff] %v341
        %344 = vst [vmem:[#allocation4 + $0x8] sm:$0xf] %v342
        %v345 = vld [vmem:[%s340] sm:$0xff]
        %v346 = vld [vmem:[%s340 + $0x8] sm:$0xff]
        %349 = vrot.lane.b32.xlu0 %v345, 127
        %v350 = vpop.permute.xlu0 %349
        %351 = vrot.lane.b32.xlu0 %v346, 127
        %v352 = vpop.permute.xlu0 %351
        %v353 = vrot.slane %v350, 4
        %v354 = vrot.slane %v352, 4
        %vm355 = vcmask 1043456
        %v356 = vsel %vm355, %v353, %v354
        %vm357 = vcmask 1039360
        %v358 = vsel %vm357, %v350, %v356
        %v359 = vsel %vm357, %v352, %v354
        %362 = vst [vmem:[#allocation4 + $0xc] sm:$0xff] %v358
        %363 = vst [vmem:[#allocation4 + $0x14] sm:$0xf] %v359
        %v364 = vld [vmem:[%s340] sm:$0xff]
        %v365 = vld [vmem:[%s340 + $0x8] sm:$0xff]
        %368 = vrot.lane.b32.xlu0 %v364, 126
        %v369 = vpop.permute.xlu0 %368
        %370 = vrot.lane.b32.xlu0 %v365, 126
        %v371 = vpop.permute.xlu0 %370
        %v372 = vrot.slane %v369, 4
        %v373 = vrot.slane %v371, 4
        %v374 = vsel %vm355, %v372, %v373
        %vm375 = vcmask 1031168
        %v376 = vsel %vm375, %v369, %v374
        %v377 = vsel %vm375, %v371, %v373
        %380 = vst [vmem:[#allocation4 + $0x18] sm:$0xff] %v376
        %381 = vst [vmem:[#allocation4 + $0x20] sm:$0xf] %v377
        %v382 = vld [vmem:[%s340] sm:$0xff]
        %v383 = vld [vmem:[%s340 + $0x8] sm:$0xff]
        %386 = vrot.lane.b32.xlu0 %v382, 104
        %v387 = vpop.permute.xlu0 %386
        %388 = vrot.lane.b32.xlu0 %v383, 104
        %v389 = vpop.permute.xlu0 %388
        %v390 = vrot.slane %v387, 4
        %v391 = vrot.slane %v389, 4
        %v392 = vsel %vm355, %v390, %v391
        %vm393 = vcmask 850944
        %v394 = vsel %vm393, %v387, %v392
        %v395 = vsel %vm393, %v389, %v391
        %398 = vst [vmem:[#allocation4 + $0x24] sm:$0xff] %v394
        %399 = vst [vmem:[#allocation4 + $0x2c] sm:$0xf] %v395
        %v400 = vld [vmem:[%s340] sm:$0xff]
        %v401 = vld [vmem:[%s340 + $0x8] sm:$0xff]
        %404 = vrot.lane.b32.xlu0 %v400, 103
        %v405 = vpop.permute.xlu0 %404
        %406 = vrot.lane.b32.xlu0 %v401, 103
        %v407 = vpop.permute.xlu0 %406
        %v408 = vrot.slane %v405, 4
        %v409 = vrot.slane %v407, 4
        %v410 = vsel %vm355, %v408, %v409
        %vm411 = vcmask 842752
        %v412 = vsel %vm411, %v405, %v410
        %v413 = vsel %vm411, %v407, %v409
        %416 = vst [vmem:[#allocation4 + $0x30] sm:$0xff] %v412
        %417 = vst [vmem:[#allocation4 + $0x38] sm:$0xf] %v413
        %v418 = vld [vmem:[%s340] sm:$0xff]
        %v419 = vld [vmem:[%s340 + $0x8] sm:$0xff]
        %422 = vrot.lane.b32.xlu0 %v418, 102
        %v423 = vpop.permute.xlu0 %422
        %424 = vrot.lane.b32.xlu0 %v419, 102
        %v425 = vpop.permute.xlu0 %424
        %v426 = vrot.slane %v423, 4
        %v427 = vrot.slane %v425, 4
        %v428 = vsel %vm355, %v426, %v427
        %vm429 = vcmask 834560
        %v430 = vsel %vm429, %v423, %v428
        %v431 = vsel %vm429, %v425, %v427
        %434 = vst [vmem:[#allocation4 + $0x3c] sm:$0xff] %v430
        %435 = vst [vmem:[#allocation4 + $0x44] sm:$0xf] %v431
        %v436 = vld [vmem:[%s340] sm:$0xff]
        %v437 = vld [vmem:[%s340 + $0x8] sm:$0xff]
        %440 = vrot.lane.b32.xlu0 %v436, 80
        %v441 = vpop.permute.xlu0 %440
        %442 = vrot.lane.b32.xlu0 %v437, 80
        %v443 = vpop.permute.xlu0 %442
        %v444 = vrot.slane %v441, 4
        %v445 = vrot.slane %v443, 4
        %v446 = vsel %vm355, %v444, %v445
        %vm447 = vcmask 654336
        %v448 = vsel %vm447, %v441, %v446
        %v449 = vsel %vm447, %v443, %v445
        %452 = vst [vmem:[#allocation4 + $0x48] sm:$0xff] %v448
        %453 = vst [vmem:[#allocation4 + $0x50] sm:$0xf] %v449
        %v454 = vld [vmem:[%s340] sm:$0xff]
        %v455 = vld [vmem:[%s340 + $0x8] sm:$0xff]
        %458 = vrot.lane.b32.xlu0 %v454, 79
        %v459 = vpop.permute.xlu0 %458
        %460 = vrot.lane.b32.xlu0 %v455, 79
        %v461 = vpop.permute.xlu0 %460
        %v462 = vrot.slane %v459, 4
        %v463 = vrot.slane %v461, 4
        %v464 = vsel %vm355, %v462, %v463
        %vm465 = vcmask 646144
        %v466 = vsel %vm465, %v459, %v464
        %v467 = vsel %vm465, %v461, %v463
        %470 = vst [vmem:[#allocation4 + $0x54] sm:$0xff] %v466
        %471 = vst [vmem:[#allocation4 + $0x5c] sm:$0xf] %v467
        %v472 = vld [vmem:[%s340] sm:$0xff]
        %v473 = vld [vmem:[%s340 + $0x8] sm:$0xff]
        %476 = vrot.lane.b32.xlu0 %v472, 78
        %v477 = vpop.permute.xlu0 %476
        %478 = vrot.lane.b32.xlu0 %v473, 78
        %v479 = vpop.permute.xlu0 %478
        %v480 = vrot.slane %v477, 4
        %v481 = vrot.slane %v479, 4
        %v482 = vsel %vm355, %v480, %v481
        %vm483 = vcmask 637952
        %v484 = vsel %vm483, %v477, %v482
        %v485 = vsel %vm483, %v479, %v481
        %488 = vst [vmem:[#allocation4 + $0x60] sm:$0xff] %v484
        %489 = vst [vmem:[#allocation4 + $0x68] sm:$0xf] %v485
        %s490 = sadd.s32 %s333, 1
        %s491 = smul.u32 %s490, 4
        %s492 = smul.addr %s491, 4
        %s493 = scalar_lea.vmem %s300, %s492
        %v494 = vld [vmem:[%s493] sm:$0xff]
        %v495 = vld [vmem:[%s493 + $0x8] sm:$0xf]
        %496 = vst [vmem:[#allocation4 + $0x6c] sm:$0xff] %v494
        %497 = vst [vmem:[#allocation4 + $0x74] sm:$0xf] %v495
        %v498 = vld [vmem:[%s493] sm:$0xff]
        %v499 = vld [vmem:[%s493 + $0x8] sm:$0xff]
        %502 = vrot.lane.b32.xlu0 %v498, 127
        %v503 = vpop.permute.xlu0 %502
        %504 = vrot.lane.b32.xlu0 %v499, 127
        %v505 = vpop.permute.xlu0 %504
        %v506 = vrot.slane %v503, 4
        %v507 = vrot.slane %v505, 4
        %v508 = vsel %vm355, %v506, %v507
        %v509 = vsel %vm357, %v503, %v508
        %v510 = vsel %vm357, %v505, %v507
        %513 = vst [vmem:[#allocation4 + $0x78] sm:$0xff] %v509
        %514 = vst [vmem:[#allocation4 + $0x80] sm:$0xf] %v510
        %v515 = vld [vmem:[%s493] sm:$0xff]
        %v516 = vld [vmem:[%s493 + $0x8] sm:$0xff]
        %519 = vrot.lane.b32.xlu0 %v515, 126
        %v520 = vpop.permute.xlu0 %519
        %521 = vrot.lane.b32.xlu0 %v516, 126
        %v522 = vpop.permute.xlu0 %521
        %v523 = vrot.slane %v520, 4
        %v524 = vrot.slane %v522, 4
        %v525 = vsel %vm355, %v523, %v524
        %v526 = vsel %vm375, %v520, %v525
        %v527 = vsel %vm375, %v522, %v524
        %530 = vst [vmem:[#allocation4 + $0x84] sm:$0xff] %v526
        %531 = vst [vmem:[#allocation4 + $0x8c] sm:$0xf] %v527
        %v532 = vld [vmem:[%s493] sm:$0xff]
        %v533 = vld [vmem:[%s493 + $0x8] sm:$0xff]
        %536 = vrot.lane.b32.xlu0 %v532, 104
        %v537 = vpop.permute.xlu0 %536
        %538 = vrot.lane.b32.xlu0 %v533, 104
        %v539 = vpop.permute.xlu0 %538
        %v540 = vrot.slane %v537, 4
        %v541 = vrot.slane %v539, 4
        %v542 = vsel %vm355, %v540, %v541
        %v543 = vsel %vm393, %v537, %v542
        %v544 = vsel %vm393, %v539, %v541
        %547 = vst [vmem:[#allocation4 + $0x90] sm:$0xff] %v543
        %548 = vst [vmem:[#allocation4 + $0x98] sm:$0xf] %v544
        %v549 = vld [vmem:[%s493] sm:$0xff]
        %v550 = vld [vmem:[%s493 + $0x8] sm:$0xff]
        %553 = vrot.lane.b32.xlu0 %v549, 103
        %v554 = vpop.permute.xlu0 %553
        %555 = vrot.lane.b32.xlu0 %v550, 103
        %v556 = vpop.permute.xlu0 %555
        %v557 = vrot.slane %v554, 4
        %v558 = vrot.slane %v556, 4
        %v559 = vsel %vm355, %v557, %v558
        %v560 = vsel %vm411, %v554, %v559
        %v561 = vsel %vm411, %v556, %v558
        %564 = vst [vmem:[#allocation4 + $0x9c] sm:$0xff] %v560
        %565 = vst [vmem:[#allocation4 + $0xa4] sm:$0xf] %v561
        %v566 = vld [vmem:[%s493] sm:$0xff]
        %v567 = vld [vmem:[%s493 + $0x8] sm:$0xff]
        %570 = vrot.lane.b32.xlu0 %v566, 102
        %v571 = vpop.permute.xlu0 %570
        %572 = vrot.lane.b32.xlu0 %v567, 102
        %v573 = vpop.permute.xlu0 %572
        %v574 = vrot.slane %v571, 4
        %v575 = vrot.slane %v573, 4
        %v576 = vsel %vm355, %v574, %v575
        %v577 = vsel %vm429, %v571, %v576
        %v578 = vsel %vm429, %v573, %v575
        %581 = vst [vmem:[#allocation4 + $0xa8] sm:$0xff] %v577
        %582 = vst [vmem:[#allocation4 + $0xb0] sm:$0xf] %v578
        %v583 = vld [vmem:[%s493] sm:$0xff]
        %v584 = vld [vmem:[%s493 + $0x8] sm:$0xff]
        %587 = vrot.lane.b32.xlu0 %v583, 80
        %v588 = vpop.permute.xlu0 %587
        %589 = vrot.lane.b32.xlu0 %v584, 80
        %v590 = vpop.permute.xlu0 %589
        %v591 = vrot.slane %v588, 4
        %v592 = vrot.slane %v590, 4
        %v593 = vsel %vm355, %v591, %v592
        %v594 = vsel %vm447, %v588, %v593
        %v595 = vsel %vm447, %v590, %v592
        %598 = vst [vmem:[#allocation4 + $0xb4] sm:$0xff] %v594
        %599 = vst [vmem:[#allocation4 + $0xbc] sm:$0xf] %v595
        %v600 = vld [vmem:[%s493] sm:$0xff]
        %v601 = vld [vmem:[%s493 + $0x8] sm:$0xff]
        %604 = vrot.lane.b32.xlu0 %v600, 79
        %v605 = vpop.permute.xlu0 %604
        %606 = vrot.lane.b32.xlu0 %v601, 79
        %v607 = vpop.permute.xlu0 %606
        %v608 = vrot.slane %v605, 4
        %v609 = vrot.slane %v607, 4
        %v610 = vsel %vm355, %v608, %v609
        %v611 = vsel %vm465, %v605, %v610
        %v612 = vsel %vm465, %v607, %v609
        %615 = vst [vmem:[#allocation4 + $0xc0] sm:$0xff] %v611
        %616 = vst [vmem:[#allocation4 + $0xc8] sm:$0xf] %v612
        %v617 = vld [vmem:[%s493] sm:$0xff]
        %v618 = vld [vmem:[%s493 + $0x8] sm:$0xff]
        %621 = vrot.lane.b32.xlu0 %v617, 78
        %v622 = vpop.permute.xlu0 %621
        %623 = vrot.lane.b32.xlu0 %v618, 78
        %v624 = vpop.permute.xlu0 %623
        %v625 = vrot.slane %v622, 4
        %v626 = vrot.slane %v624, 4
        %v627 = vsel %vm355, %v625, %v626
        %v628 = vsel %vm483, %v622, %v627
        %v629 = vsel %vm483, %v624, %v626
        %632 = vst [vmem:[#allocation4 + $0xcc] sm:$0xff] %v628
        %633 = vst [vmem:[#allocation4 + $0xd4] sm:$0xf] %v629
        %s634 = sadd.s32 %s333, 2
        %s635 = smul.u32 %s634, 4
        %s636 = smul.addr %s635, 4
        %s637 = scalar_lea.vmem %s300, %s636
        %v638 = vld [vmem:[%s637] sm:$0xff]
        %v639 = vld [vmem:[%s637 + $0x8] sm:$0xf]
        %640 = vst [vmem:[#allocation4 + $0xd8] sm:$0xff] %v638
        %641 = vst [vmem:[#allocation4 + $0xe0] sm:$0xf] %v639
        %v642 = vld [vmem:[%s637] sm:$0xff]
        %v643 = vld [vmem:[%s637 + $0x8] sm:$0xff]
        %646 = vrot.lane.b32.xlu0 %v642, 127
        %v647 = vpop.permute.xlu0 %646
        %648 = vrot.lane.b32.xlu0 %v643, 127
        %v649 = vpop.permute.xlu0 %648
        %v650 = vrot.slane %v647, 4
        %v651 = vrot.slane %v649, 4
        %v652 = vsel %vm355, %v650, %v651
        %v653 = vsel %vm357, %v647, %v652
        %v654 = vsel %vm357, %v649, %v651
        %657 = vst [vmem:[#allocation4 + $0xe4] sm:$0xff] %v653
        %658 = vst [vmem:[#allocation4 + $0xec] sm:$0xf] %v654
        %v659 = vld [vmem:[%s637] sm:$0xff]
        %v660 = vld [vmem:[%s637 + $0x8] sm:$0xff]
        %663 = vrot.lane.b32.xlu0 %v659, 126
        %v664 = vpop.permute.xlu0 %663
        %665 = vrot.lane.b32.xlu0 %v660, 126
        %v666 = vpop.permute.xlu0 %665
        %v667 = vrot.slane %v664, 4
        %v668 = vrot.slane %v666, 4
        %v669 = vsel %vm355, %v667, %v668
        %v670 = vsel %vm375, %v664, %v669
        %v671 = vsel %vm375, %v666, %v668
        %674 = vst [vmem:[#allocation4 + $0xf0] sm:$0xff] %v670
        %675 = vst [vmem:[#allocation4 + $0xf8] sm:$0xf] %v671
        %v676 = vld [vmem:[%s637] sm:$0xff]
        %v677 = vld [vmem:[%s637 + $0x8] sm:$0xff]
        %680 = vrot.lane.b32.xlu0 %v676, 104
        %v681 = vpop.permute.xlu0 %680
        %682 = vrot.lane.b32.xlu0 %v677, 104
        %v683 = vpop.permute.xlu0 %682
        %v684 = vrot.slane %v681, 4
        %v685 = vrot.slane %v683, 4
        %v686 = vsel %vm355, %v684, %v685
        %v687 = vsel %vm393, %v681, %v686
        %v688 = vsel %vm393, %v683, %v685
        %691 = vst [vmem:[#allocation4 + $0xfc] sm:$0xff] %v687
        %692 = vst [vmem:[#allocation4 + $0x104] sm:$0xf] %v688
        %v693 = vld [vmem:[%s637] sm:$0xff]
        %v694 = vld [vmem:[%s637 + $0x8] sm:$0xff]
        %697 = vrot.lane.b32.xlu0 %v693, 103
        %v698 = vpop.permute.xlu0 %697
        %699 = vrot.lane.b32.xlu0 %v694, 103
        %v700 = vpop.permute.xlu0 %699
        %v701 = vrot.slane %v698, 4
        %v702 = vrot.slane %v700, 4
        %v703 = vsel %vm355, %v701, %v702
        %v704 = vsel %vm411, %v698, %v703
        %v705 = vsel %vm411, %v700, %v702
        %708 = vst [vmem:[#allocation4 + $0x108] sm:$0xff] %v704
        %709 = vst [vmem:[#allocation4 + $0x110] sm:$0xf] %v705
        %v710 = vld [vmem:[%s637] sm:$0xff]
        %v711 = vld [vmem:[%s637 + $0x8] sm:$0xff]
        %714 = vrot.lane.b32.xlu0 %v710, 102
        %v715 = vpop.permute.xlu0 %714
        %716 = vrot.lane.b32.xlu0 %v711, 102
        %v717 = vpop.permute.xlu0 %716
        %v718 = vrot.slane %v715, 4
        %v719 = vrot.slane %v717, 4
        %v720 = vsel %vm355, %v718, %v719
        %v721 = vsel %vm429, %v715, %v720
        %v722 = vsel %vm429, %v717, %v719
        %725 = vst [vmem:[#allocation4 + $0x114] sm:$0xff] %v721
        %726 = vst [vmem:[#allocation4 + $0x11c] sm:$0xf] %v722
        %v727 = vld [vmem:[%s637] sm:$0xff]
        %v728 = vld [vmem:[%s637 + $0x8] sm:$0xff]
        %731 = vrot.lane.b32.xlu0 %v727, 80
        %v732 = vpop.permute.xlu0 %731
        %733 = vrot.lane.b32.xlu0 %v728, 80
        %v734 = vpop.permute.xlu0 %733
        %v735 = vrot.slane %v732, 4
        %v736 = vrot.slane %v734, 4
        %v737 = vsel %vm355, %v735, %v736
        %v738 = vsel %vm447, %v732, %v737
        %v739 = vsel %vm447, %v734, %v736
        %742 = vst [vmem:[#allocation4 + $0x120] sm:$0xff] %v738
        %743 = vst [vmem:[#allocation4 + $0x128] sm:$0xf] %v739
        %v744 = vld [vmem:[%s637] sm:$0xff]
        %v745 = vld [vmem:[%s637 + $0x8] sm:$0xff]
        %748 = vrot.lane.b32.xlu0 %v744, 79
        %v749 = vpop.permute.xlu0 %748
        %750 = vrot.lane.b32.xlu0 %v745, 79
        %v751 = vpop.permute.xlu0 %750
        %v752 = vrot.slane %v749, 4
        %v753 = vrot.slane %v751, 4
        %v754 = vsel %vm355, %v752, %v753
        %v755 = vsel %vm465, %v749, %v754
        %v756 = vsel %vm465, %v751, %v753
        %759 = vst [vmem:[#allocation4 + $0x12c] sm:$0xff] %v755
        %760 = vst [vmem:[#allocation4 + $0x134] sm:$0xf] %v756
        %v761 = vld [vmem:[%s637] sm:$0xff]
        %v762 = vld [vmem:[%s637 + $0x8] sm:$0xff]
        %765 = vrot.lane.b32.xlu0 %v761, 78
        %v766 = vpop.permute.xlu0 %765
        %767 = vrot.lane.b32.xlu0 %v762, 78
        %v768 = vpop.permute.xlu0 %767
        %v769 = vrot.slane %v766, 4
        %v770 = vrot.slane %v768, 4
        %v771 = vsel %vm355, %v769, %v770
        %v772 = vsel %vm483, %v766, %v771
        %v773 = vsel %vm483, %v768, %v770
        %776 = vst [vmem:[#allocation4 + $0x138] sm:$0xff] %v772
        %777 = vst [vmem:[#allocation4 + $0x140] sm:$0xf] %v773
        %v778 = vld [vmem:[%s2] sm:$0xff]
        %v779 = vld [vmem:[#allocation4] sm:$0xff]
        %v780 = vld [vmem:[#allocation4 + $0x8] sm:$0xf]
        %v781 = vld [vmem:[#allocation4 + $0xc] sm:$0xff]
        %v782 = vld [vmem:[#allocation4 + $0x14] sm:$0xf]
        %v783 = vld [vmem:[#allocation4 + $0x18] sm:$0xff]
        %v784 = vld [vmem:[#allocation4 + $0x20] sm:$0xf]
        %v785 = vld [vmem:[#allocation4 + $0x24] sm:$0xff]
        %v786 = vld [vmem:[#allocation4 + $0x2c] sm:$0xf]
        %v787 = vld [vmem:[#allocation4 + $0x30] sm:$0xff]
        %v788 = vld [vmem:[#allocation4 + $0x38] sm:$0xf]
        %v789 = vld [vmem:[#allocation4 + $0x3c] sm:$0xff]
        %v790 = vld [vmem:[#allocation4 + $0x44] sm:$0xf]
        %v791 = vld [vmem:[#allocation4 + $0x48] sm:$0xff]
        %v792 = vld [vmem:[#allocation4 + $0x50] sm:$0xf]
        %v793 = vld [vmem:[#allocation4 + $0x54] sm:$0xff]
        %v794 = vld [vmem:[#allocation4 + $0x5c] sm:$0xf]
        %v795 = vld [vmem:[#allocation4 + $0x60] sm:$0xff]
        %v796 = vld [vmem:[#allocation4 + $0x68] sm:$0xf]
        %v797 = vld [vmem:[#allocation4 + $0x6c] sm:$0xff]
        %v798 = vld [vmem:[#allocation4 + $0x74] sm:$0xf]
        %v799 = vld [vmem:[#allocation4 + $0x78] sm:$0xff]
        %v800 = vld [vmem:[#allocation4 + $0x80] sm:$0xf]
        %v801 = vld [vmem:[#allocation4 + $0x84] sm:$0xff]
        %v802 = vld [vmem:[#allocation4 + $0x8c] sm:$0xf]
        %v803 = vld [vmem:[#allocation4 + $0x90] sm:$0xff]
        %v804 = vld [vmem:[#allocation4 + $0x98] sm:$0xf]
        %v805 = vld [vmem:[#allocation4 + $0x9c] sm:$0xff]
        %v806 = vld [vmem:[#allocation4 + $0xa4] sm:$0xf]
        %v807 = vld [vmem:[#allocation4 + $0xa8] sm:$0xff]
        %v808 = vld [vmem:[#allocation4 + $0xb0] sm:$0xf]
        %v809 = vld [vmem:[#allocation4 + $0xb4] sm:$0xff]
        %v810 = vld [vmem:[#allocation4 + $0xbc] sm:$0xf]
        %v811 = vld [vmem:[#allocation4 + $0xc0] sm:$0xff]
        %v812 = vld [vmem:[#allocation4 + $0xc8] sm:$0xf]
        %v813 = vld [vmem:[#allocation4 + $0xcc] sm:$0xff]
        %v814 = vld [vmem:[#allocation4 + $0xd4] sm:$0xf]
        %v815 = vld [vmem:[#allocation4 + $0xd8] sm:$0xff]
        %v816 = vld [vmem:[#allocation4 + $0xe0] sm:$0xf]
        %v817 = vld [vmem:[#allocation4 + $0xe4] sm:$0xff]
        %v818 = vld [vmem:[#allocation4 + $0xec] sm:$0xf]
        %v819 = vld [vmem:[#allocation4 + $0xf0] sm:$0xff]
        %v820 = vld [vmem:[#allocation4 + $0xf8] sm:$0xf]
        %v821 = vld [vmem:[#allocation4 + $0xfc] sm:$0xff]
        %v822 = vld [vmem:[#allocation4 + $0x104] sm:$0xf]
        %v823 = vld [vmem:[#allocation4 + $0x108] sm:$0xff]
        %v824 = vld [vmem:[#allocation4 + $0x110] sm:$0xf]
        %v825 = vld [vmem:[#allocation4 + $0x114] sm:$0xff]
        %v826 = vld [vmem:[#allocation4 + $0x11c] sm:$0xf]
        %v827 = vld [vmem:[#allocation4 + $0x120] sm:$0xff]
        %v828 = vld [vmem:[#allocation4 + $0x128] sm:$0xf]
        %v829 = vld [vmem:[#allocation4 + $0x12c] sm:$0xff]
        %v830 = vld [vmem:[#allocation4 + $0x134] sm:$0xf]
        %v831 = vld [vmem:[#allocation4 + $0x138] sm:$0xff]
        %v832 = vld [vmem:[#allocation4 + $0x140] sm:$0xf]
        %v834 = vunpack.c.l.b16 %v778
        %v835 = vunpack.c.h.b16 %v778
        %v836 = vpack.c.b16 %v834, %v834
        %v837 = vpack.c.b16 %v835, %v835
        %v893 = vunpack.c.l.b16 %v779
        %v894 = vunpack.c.h.b16 %v779
        %v895 = vunpack.c.l.b16 %v780
        %v896 = vunpack.c.l.b16 %v781
        %v897 = vunpack.c.h.b16 %v781
        %v898 = vunpack.c.l.b16 %v782
        %v899 = vunpack.c.l.b16 %v783
        %v900 = vunpack.c.h.b16 %v783
        %v901 = vunpack.c.l.b16 %v784
        %v902 = vunpack.c.l.b16 %v785
        %v903 = vunpack.c.h.b16 %v785
        %v904 = vunpack.c.l.b16 %v786
        %v905 = vunpack.c.l.b16 %v787
        %v906 = vunpack.c.h.b16 %v787
        %v907 = vunpack.c.l.b16 %v788
        %v908 = vunpack.c.l.b16 %v789
        %v909 = vunpack.c.h.b16 %v789
        %v910 = vunpack.c.l.b16 %v790
        %v911 = vunpack.c.l.b16 %v791
        %v912 = vunpack.c.h.b16 %v791
        %v913 = vunpack.c.l.b16 %v792
        %v914 = vunpack.c.l.b16 %v793
        %v915 = vunpack.c.h.b16 %v793
        %v916 = vunpack.c.l.b16 %v794
        %v917 = vunpack.c.l.b16 %v795
        %v918 = vunpack.c.h.b16 %v795
        %v919 = vunpack.c.l.b16 %v796
        %v920 = vunpack.c.l.b16 %v797
        %v921 = vunpack.c.h.b16 %v797
        %v922 = vunpack.c.l.b16 %v798
        %v923 = vunpack.c.l.b16 %v799
        %v924 = vunpack.c.h.b16 %v799
        %v925 = vunpack.c.l.b16 %v800
        %v926 = vunpack.c.l.b16 %v801
        %v927 = vunpack.c.h.b16 %v801
        %v928 = vunpack.c.l.b16 %v802
        %v929 = vunpack.c.l.b16 %v803
        %v930 = vunpack.c.h.b16 %v803
        %v931 = vunpack.c.l.b16 %v804
        %v932 = vunpack.c.l.b16 %v805
        %v933 = vunpack.c.h.b16 %v805
        %v934 = vunpack.c.l.b16 %v806
        %v935 = vunpack.c.l.b16 %v807
        %v936 = vunpack.c.h.b16 %v807
        %v937 = vunpack.c.l.b16 %v808
        %v938 = vunpack.c.l.b16 %v809
        %v939 = vunpack.c.h.b16 %v809
        %v940 = vunpack.c.l.b16 %v810
        %v941 = vunpack.c.l.b16 %v811
        %v942 = vunpack.c.h.b16 %v811
        %v943 = vunpack.c.l.b16 %v812
        %v944 = vunpack.c.l.b16 %v813
        %v945 = vunpack.c.h.b16 %v813
        %v946 = vunpack.c.l.b16 %v814
        %v947 = vunpack.c.l.b16 %v815
        %v948 = vunpack.c.h.b16 %v815
        %v949 = vunpack.c.l.b16 %v816
        %v950 = vunpack.c.l.b16 %v817
        %v951 = vunpack.c.h.b16 %v817
        %v952 = vunpack.c.l.b16 %v818
        %v953 = vunpack.c.l.b16 %v819
        %v954 = vunpack.c.h.b16 %v819
        %v955 = vunpack.c.l.b16 %v820
        %v956 = vunpack.c.l.b16 %v821
        %v957 = vunpack.c.h.b16 %v821
        %v958 = vunpack.c.l.b16 %v822
        %v959 = vunpack.c.l.b16 %v823
        %v960 = vunpack.c.h.b16 %v823
        %v961 = vunpack.c.l.b16 %v824
        %v962 = vunpack.c.l.b16 %v825
        %v963 = vunpack.c.h.b16 %v825
        %v964 = vunpack.c.l.b16 %v826
        %v965 = vunpack.c.l.b16 %v827
        %v966 = vunpack.c.h.b16 %v827
        %v967 = vunpack.c.l.b16 %v828
        %v968 = vunpack.c.l.b16 %v829
        %v969 = vunpack.c.h.b16 %v829
        %v970 = vunpack.c.l.b16 %v830
        %v971 = vunpack.c.l.b16 %v831
        %v972 = vunpack.c.h.b16 %v831
        %v973 = vunpack.c.l.b16 %v832
        %v974 = vpack.c.b16 %v896, %v893
        %v975 = vpack.c.b16 %v897, %v894
        %v976 = vpack.c.b16 %v898, %v895
        %v977 = vpack.c.b16 %v902, %v899
        %v978 = vpack.c.b16 %v903, %v900
        %v979 = vpack.c.b16 %v904, %v901
        %v980 = vpack.c.b16 %v908, %v905
        %v981 = vpack.c.b16 %v909, %v906
        %v982 = vpack.c.b16 %v910, %v907
        %v983 = vpack.c.b16 %v914, %v911
        %v984 = vpack.c.b16 %v915, %v912
        %v985 = vpack.c.b16 %v916, %v913
        %v986 = vpack.c.b16 %v920, %v917
        %v987 = vpack.c.b16 %v921, %v918
        %v988 = vpack.c.b16 %v922, %v919
        %v989 = vpack.c.b16 %v926, %v923
        %v990 = vpack.c.b16 %v927, %v924
        %v991 = vpack.c.b16 %v928, %v925
        %v992 = vpack.c.b16 %v932, %v929
        %v993 = vpack.c.b16 %v933, %v930
        %v994 = vpack.c.b16 %v934, %v931
        %v995 = vpack.c.b16 %v938, %v935
        %v996 = vpack.c.b16 %v939, %v936
        %v997 = vpack.c.b16 %v940, %v937
        %v998 = vpack.c.b16 %v944, %v941
        %v999 = vpack.c.b16 %v945, %v942
        %v1000 = vpack.c.b16 %v946, %v943
        %v1001 = vpack.c.b16 %v950, %v947
        %v1002 = vpack.c.b16 %v951, %v948
        %v1003 = vpack.c.b16 %v952, %v949
        %v1004 = vpack.c.b16 %v956, %v953
        %v1005 = vpack.c.b16 %v957, %v954
        %v1006 = vpack.c.b16 %v958, %v955
        %v1007 = vpack.c.b16 %v962, %v959
        %v1008 = vpack.c.b16 %v963, %v960
        %v1009 = vpack.c.b16 %v964, %v961
        %v1010 = vpack.c.b16 %v968, %v965
        %v1011 = vpack.c.b16 %v969, %v966
        %v1012 = vpack.c.b16 %v970, %v967
        %v1013 = vpack.c.b16 %v971, %v971
        %v1014 = vpack.c.b16 %v972, %v972
        %v1015 = vpack.c.b16 %v973, %v973
        %vm1055 = vcmask 719872
        %v1057 = vsel %vm1055, %v837, 0
        %v1060 = vsel %vm320, %v1013, 0
        %v1063 = vsel %vm320, %v1014, 0
        %v1066 = vsel %vm320, %v1015, 0
        %1068 = vmatpush.bf16.msra.mxu0 %v995
        %1069 = vmatpush.bf16.msra.mxu0 %v992
        %1070 = vmatpush.bf16.msra.mxu0 %v989
        %1071 = vmatpush.bf16.msra.mxu0 %v986
        %1072 = vmatpush.bf16.msra.mxu0 %v983
        %1073 = vmatpush.bf16.msra.mxu0 %v980
        %1074 = vmatpush.bf16.msra.mxu0 %v977
        %1075 = vmatpush.bf16.msra.mxu0 %v974
        %1076 = vmatmul.bf16.gmra.mxu0 %v836
        %v1077 = vpop.f32.mrf.mxu0
        %v1078 = vadd.f32 %v310, %v1077
        %v1079 = vpop.f32.mrf.mxu0
        %1080 = vdwg.mxu0
        %1081 = vmatpush.bf16.msra.mxu0 0
        %1082 = vmatpush.bf16.msra.mxu0 0
        %1083 = vmatpush.bf16.msra.mxu0 %v1060
        %1084 = vmatpush.bf16.msra.mxu0 %v1010
        %1085 = vmatpush.bf16.msra.mxu0 %v1007
        %1086 = vmatpush.bf16.msra.mxu0 %v1004
        %1087 = vmatpush.bf16.msra.mxu0 %v1001
        %1088 = vmatpush.bf16.msra.mxu0 %v998
        %1089 = vmatmul.bf16.gmra.mxu0 %v1057
        %v1090 = vpop.f32.mrf.mxu0
        %v1091 = vadd.f32 %v1078, %v1090
        %v1092 = vpop.f32.mrf.mxu0
        %1093 = vdwg.mxu0
        %1094 = vmatpush.bf16.msra.mxu0 %v996
        %1095 = vmatpush.bf16.msra.mxu0 %v993
        %1096 = vmatpush.bf16.msra.mxu0 %v990
        %1097 = vmatpush.bf16.msra.mxu0 %v987
        %1098 = vmatpush.bf16.msra.mxu0 %v984
        %1099 = vmatpush.bf16.msra.mxu0 %v981
        %1100 = vmatpush.bf16.msra.mxu0 %v978
        %1101 = vmatpush.bf16.msra.mxu0 %v975
        %1102 = vmatmul.bf16.gmra.mxu0 %v836
        %v1103 = vpop.f32.mrf.mxu0
        %v1104 = vadd.f32 %v311, %v1103
        %v1105 = vpop.f32.mrf.mxu0
        %1106 = vdwg.mxu0
        %1107 = vmatpush.bf16.msra.mxu0 0
        %1108 = vmatpush.bf16.msra.mxu0 0
        %1109 = vmatpush.bf16.msra.mxu0 %v1063
        %1110 = vmatpush.bf16.msra.mxu0 %v1011
        %1111 = vmatpush.bf16.msra.mxu0 %v1008
        %1112 = vmatpush.bf16.msra.mxu0 %v1005
        %1113 = vmatpush.bf16.msra.mxu0 %v1002
        %1114 = vmatpush.bf16.msra.mxu0 %v999
        %1115 = vmatmul.bf16.gmra.mxu0 %v1057
        %v1116 = vpop.f32.mrf.mxu0
        %v1117 = vadd.f32 %v1104, %v1116
        %v1118 = vpop.f32.mrf.mxu0
        %1119 = vdwg.mxu0
        %1120 = vmatpush.bf16.msra.mxu0 %v997
        %1121 = vmatpush.bf16.msra.mxu0 %v994
        %1122 = vmatpush.bf16.msra.mxu0 %v991
        %1123 = vmatpush.bf16.msra.mxu0 %v988
        %1124 = vmatpush.bf16.msra.mxu0 %v985
        %1125 = vmatpush.bf16.msra.mxu0 %v982
        %1126 = vmatpush.bf16.msra.mxu0 %v979
        %1127 = vmatpush.bf16.msra.mxu0 %v976
        %1128 = vmatmul.bf16.gmra.mxu0 %v836
        %v1129 = vpop.f32.mrf.mxu0
        %v1130 = vadd.f32 %v312, %v1129
        %v1131 = vpop.f32.mrf.mxu0
        %1132 = vdwg.mxu0
        %1133 = vmatpush.bf16.msra.mxu0 0
        %1134 = vmatpush.bf16.msra.mxu0 0
        %1135 = vmatpush.bf16.msra.mxu0 %v1066
        %1136 = vmatpush.bf16.msra.mxu0 %v1012
        %1137 = vmatpush.bf16.msra.mxu0 %v1009
        %1138 = vmatpush.bf16.msra.mxu0 %v1006
        %1139 = vmatpush.bf16.msra.mxu0 %v1003
        %1140 = vmatpush.bf16.msra.mxu0 %v1000
        %1141 = vmatmul.bf16.gmra.mxu0 %v1057
        %v1142 = vpop.f32.mrf.mxu0
        %v1143 = vadd.f32 %v1130, %v1142
        %v1144 = vpop.f32.mrf.mxu0
        %1145 = vdwg.mxu0
        %vm1146 = vcmp.ge.f32.partialorder %v1091, 0.0
        %vm1147 = vcmp.ge.f32.partialorder %v1117, 0.0
        %vm1148 = vcmp.ge.f32.partialorder %v1143, 0.0
        %v1149 = vmul.f32 %v1091, 0.01
        %v1150 = vmul.f32 %v1117, 0.01
        %v1151 = vmul.f32 %v1143, 0.01
        %v1152 = vsel %vm1146, %v1091, %v1149
        %v1153 = vsel %vm1147, %v1117, %v1150
        %v1154 = vsel %vm1148, %v1143, %v1151
        %v1155 = vmul.f32 %v1152, %v307
        %v1156 = vmul.f32 %v1153, %v308
        %v1157 = vmul.f32 %v1154, %v309
        %s1158 = smul.addr %s491, 4
        %s1159 = scalar_lea.vmem [#allocation2], %s1158
        %vm1160 = vcmask 199680
        %1161 = vst.msk [vmem:[%s1159] sm:$0xf] %vm1160, 0
        %v1162 = vpack.c.bf16 %v1156, %v1155
        %v1163 = vpack.c.bf16 %v1157, %v1157
        %1166 = vrot.lane.b32.xlu0 %v1162, 25
        %v1167 = vpop.permute.xlu0 %1166
        %1168 = vrot.lane.b32.xlu0 %v1163, 25
        %v1169 = vpop.permute.xlu0 %1168
        %v1170 = vrot.slane %v1167, 4
        %v1171 = vrot.slane %v1169, 4
        %vm1172 = vcmask 203776
        %v1173 = vsel %vm1172, %v1170, %v1167
        %v1174 = vsel %vm355, %v1170, %v1171
        %v1175 = vsel %vm1172, %v1174, %v1169
        %vm1178 = vcmask 1043656
        %vm1179 = vcmask 1047556
        %vm1180 = vmor %vm1179, %vm1178
        %1181 = vst.msk [vmem:[%s1159] sm:$0xff] %vm1180, %v1173
        %vm1182 = vcmask 203780
        %vm1183 = vmor %vm1182, %vm320
        %1184 = vst.msk [vmem:[%s1159 + $0x8] sm:$0xff] %vm1183, %v1175
        %vm1185 = vcmask 584904
        %1186 = vst.msk [vmem:[%s1159 + $0xc] sm:$0xf] %vm1185, 0
      $region57: #{residual_block.1} parent=51 // loop_footer
        %s337 = sadd.s32 1, %s333
      $region58: #{residual_block.1} parent=51 // loop_footer_branch
        %332 = sbr.rel target = $region54
      $region59: #{residual_block.1} parent=51 // loop_exit
        _
      loop: start=0, step=1, limit=16
      $region60: #{residual_block.1} parent=51 // loop_pre_header
        _
      $region61: #{residual_block.1} parent=51 // loop_header
        %s1188 = sphi 0, %s1192
        %p1189 = scmp.ge.s32.totalorder %s1188, 16
      $region62: #{residual_block.1} parent=51 // loop_header_branch
        %1191 = sbr.rel (%p1189) target = $region66
      $region63: #{residual_block.1} parent=51 // loop_body
        %s1193 = smul.u32 %s1188, 4
        %s1194 = smul.addr %s1193, 4
        %s1195 = scalar_lea.vmem [#allocation2], %s1194
        %v1196 = vld [vmem:[%s1195] sm:$0xff]
        %v1197 = vld [vmem:[%s1195 + $0x8] sm:$0xf]
        %1198 = vst [vmem:[#allocation4] sm:$0xff] %v1196
        %1199 = vst [vmem:[#allocation4 + $0x8] sm:$0xf] %v1197
        %v1200 = vld [vmem:[%s1195] sm:$0xff]
        %v1201 = vld [vmem:[%s1195 + $0x8] sm:$0xff]
        %1204 = vrot.lane.b32.xlu0 %v1200, 127
        %v1205 = vpop.permute.xlu0 %1204
        %1206 = vrot.lane.b32.xlu0 %v1201, 127
        %v1207 = vpop.permute.xlu0 %1206
        %v1208 = vrot.slane %v1205, 4
        %v1209 = vrot.slane %v1207, 4
        %vm1210 = vcmask 1043456
        %v1211 = vsel %vm1210, %v1208, %v1209
        %vm1212 = vcmask 1039360
        %v1213 = vsel %vm1212, %v1205, %v1211
        %v1214 = vsel %vm1212, %v1207, %v1209
        %1217 = vst [vmem:[#allocation4 + $0xc] sm:$0xff] %v1213
        %1218 = vst [vmem:[#allocation4 + $0x14] sm:$0xf] %v1214
        %v1219 = vld [vmem:[%s1195] sm:$0xff]
        %v1220 = vld [vmem:[%s1195 + $0x8] sm:$0xff]
        %1223 = vrot.lane.b32.xlu0 %v1219, 126
        %v1224 = vpop.permute.xlu0 %1223
        %1225 = vrot.lane.b32.xlu0 %v1220, 126
        %v1226 = vpop.permute.xlu0 %1225
        %v1227 = vrot.slane %v1224, 4
        %v1228 = vrot.slane %v1226, 4
        %v1229 = vsel %vm1210, %v1227, %v1228
        %vm1230 = vcmask 1031168
        %v1231 = vsel %vm1230, %v1224, %v1229
        %v1232 = vsel %vm1230, %v1226, %v1228
        %1235 = vst [vmem:[#allocation4 + $0x18] sm:$0xff] %v1231
        %1236 = vst [vmem:[#allocation4 + $0x20] sm:$0xf] %v1232
        %v1237 = vld [vmem:[%s1195] sm:$0xff]
        %v1238 = vld [vmem:[%s1195 + $0x8] sm:$0xff]
        %1241 = vrot.lane.b32.xlu0 %v1237, 104
        %v1242 = vpop.permute.xlu0 %1241
        %1243 = vrot.lane.b32.xlu0 %v1238, 104
        %v1244 = vpop.permute.xlu0 %1243
        %v1245 = vrot.slane %v1242, 4
        %v1246 = vrot.slane %v1244, 4
        %v1247 = vsel %vm1210, %v1245, %v1246
        %vm1248 = vcmask 850944
        %v1249 = vsel %vm1248, %v1242, %v1247
        %v1250 = vsel %vm1248, %v1244, %v1246
        %1253 = vst [vmem:[#allocation4 + $0x24] sm:$0xff] %v1249
        %1254 = vst [vmem:[#allocation4 + $0x2c] sm:$0xf] %v1250
        %v1255 = vld [vmem:[%s1195] sm:$0xff]
        %v1256 = vld [vmem:[%s1195 + $0x8] sm:$0xff]
        %1259 = vrot.lane.b32.xlu0 %v1255, 103
        %v1260 = vpop.permute.xlu0 %1259
        %1261 = vrot.lane.b32.xlu0 %v1256, 103
        %v1262 = vpop.permute.xlu0 %1261
        %v1263 = vrot.slane %v1260, 4
        %v1264 = vrot.slane %v1262, 4
        %v1265 = vsel %vm1210, %v1263, %v1264
        %vm1266 = vcmask 842752
        %v1267 = vsel %vm1266, %v1260, %v1265
        %v1268 = vsel %vm1266, %v1262, %v1264
        %1271 = vst [vmem:[#allocation4 + $0x30] sm:$0xff] %v1267
        %1272 = vst [vmem:[#allocation4 + $0x38] sm:$0xf] %v1268
        %v1273 = vld [vmem:[%s1195] sm:$0xff]
        %v1274 = vld [vmem:[%s1195 + $0x8] sm:$0xff]
        %1277 = vrot.lane.b32.xlu0 %v1273, 102
        %v1278 = vpop.permute.xlu0 %1277
        %1279 = vrot.lane.b32.xlu0 %v1274, 102
        %v1280 = vpop.permute.xlu0 %1279
        %v1281 = vrot.slane %v1278, 4
        %v1282 = vrot.slane %v1280, 4
        %v1283 = vsel %vm1210, %v1281, %v1282
        %vm1284 = vcmask 834560
        %v1285 = vsel %vm1284, %v1278, %v1283
        %v1286 = vsel %vm1284, %v1280, %v1282
        %1289 = vst [vmem:[#allocation4 + $0x3c] sm:$0xff] %v1285
        %1290 = vst [vmem:[#allocation4 + $0x44] sm:$0xf] %v1286
        %v1291 = vld [vmem:[%s1195] sm:$0xff]
        %v1292 = vld [vmem:[%s1195 + $0x8] sm:$0xff]
        %1295 = vrot.lane.b32.xlu0 %v1291, 80
        %v1296 = vpop.permute.xlu0 %1295
        %1297 = vrot.lane.b32.xlu0 %v1292, 80
        %v1298 = vpop.permute.xlu0 %1297
        %v1299 = vrot.slane %v1296, 4
        %v1300 = vrot.slane %v1298, 4
        %v1301 = vsel %vm1210, %v1299, %v1300
        %vm1302 = vcmask 654336
        %v1303 = vsel %vm1302, %v1296, %v1301
        %v1304 = vsel %vm1302, %v1298, %v1300
        %1307 = vst [vmem:[#allocation4 + $0x48] sm:$0xff] %v1303
        %1308 = vst [vmem:[#allocation4 + $0x50] sm:$0xf] %v1304
        %v1309 = vld [vmem:[%s1195] sm:$0xff]
        %v1310 = vld [vmem:[%s1195 + $0x8] sm:$0xff]
        %1313 = vrot.lane.b32.xlu0 %v1309, 79
        %v1314 = vpop.permute.xlu0 %1313
        %1315 = vrot.lane.b32.xlu0 %v1310, 79
        %v1316 = vpop.permute.xlu0 %1315
        %v1317 = vrot.slane %v1314, 4
        %v1318 = vrot.slane %v1316, 4
        %v1319 = vsel %vm1210, %v1317, %v1318
        %vm1320 = vcmask 646144
        %v1321 = vsel %vm1320, %v1314, %v1319
        %v1322 = vsel %vm1320, %v1316, %v1318
        %1325 = vst [vmem:[#allocation4 + $0x54] sm:$0xff] %v1321
        %1326 = vst [vmem:[#allocation4 + $0x5c] sm:$0xf] %v1322
        %v1327 = vld [vmem:[%s1195] sm:$0xff]
        %v1328 = vld [vmem:[%s1195 + $0x8] sm:$0xff]
        %1331 = vrot.lane.b32.xlu0 %v1327, 78
        %v1332 = vpop.permute.xlu0 %1331
        %1333 = vrot.lane.b32.xlu0 %v1328, 78
        %v1334 = vpop.permute.xlu0 %1333
        %v1335 = vrot.slane %v1332, 4
        %v1336 = vrot.slane %v1334, 4
        %v1337 = vsel %vm1210, %v1335, %v1336
        %vm1338 = vcmask 637952
        %v1339 = vsel %vm1338, %v1332, %v1337
        %v1340 = vsel %vm1338, %v1334, %v1336
        %1343 = vst [vmem:[#allocation4 + $0x60] sm:$0xff] %v1339
        %1344 = vst [vmem:[#allocation4 + $0x68] sm:$0xf] %v1340
        %s1345 = sadd.s32 %s1188, 1
        %s1346 = smul.u32 %s1345, 4
        %s1347 = smul.addr %s1346, 4
        %s1348 = scalar_lea.vmem [#allocation2], %s1347
        %v1349 = vld [vmem:[%s1348] sm:$0xff]
        %v1350 = vld [vmem:[%s1348 + $0x8] sm:$0xf]
        %1351 = vst [vmem:[#allocation4 + $0x6c] sm:$0xff] %v1349
        %1352 = vst [vmem:[#allocation4 + $0x74] sm:$0xf] %v1350
        %v1353 = vld [vmem:[%s1348] sm:$0xff]
        %v1354 = vld [vmem:[%s1348 + $0x8] sm:$0xff]
        %1357 = vrot.lane.b32.xlu0 %v1353, 127
        %v1358 = vpop.permute.xlu0 %1357
        %1359 = vrot.lane.b32.xlu0 %v1354, 127
        %v1360 = vpop.permute.xlu0 %1359
        %v1361 = vrot.slane %v1358, 4
        %v1362 = vrot.slane %v1360, 4
        %v1363 = vsel %vm1210, %v1361, %v1362
        %v1364 = vsel %vm1212, %v1358, %v1363
        %v1365 = vsel %vm1212, %v1360, %v1362
        %1368 = vst [vmem:[#allocation4 + $0x78] sm:$0xff] %v1364
        %1369 = vst [vmem:[#allocation4 + $0x80] sm:$0xf] %v1365
        %v1370 = vld [vmem:[%s1348] sm:$0xff]
        %v1371 = vld [vmem:[%s1348 + $0x8] sm:$0xff]
        %1374 = vrot.lane.b32.xlu0 %v1370, 126
        %v1375 = vpop.permute.xlu0 %1374
        %1376 = vrot.lane.b32.xlu0 %v1371, 126
        %v1377 = vpop.permute.xlu0 %1376
        %v1378 = vrot.slane %v1375, 4
        %v1379 = vrot.slane %v1377, 4
        %v1380 = vsel %vm1210, %v1378, %v1379
        %v1381 = vsel %vm1230, %v1375, %v1380
        %v1382 = vsel %vm1230, %v1377, %v1379
        %1385 = vst [vmem:[#allocation4 + $0x84] sm:$0xff] %v1381
        %1386 = vst [vmem:[#allocation4 + $0x8c] sm:$0xf] %v1382
        %v1387 = vld [vmem:[%s1348] sm:$0xff]
        %v1388 = vld [vmem:[%s1348 + $0x8] sm:$0xff]
        %1391 = vrot.lane.b32.xlu0 %v1387, 104
        %v1392 = vpop.permute.xlu0 %1391
        %1393 = vrot.lane.b32.xlu0 %v1388, 104
        %v1394 = vpop.permute.xlu0 %1393
        %v1395 = vrot.slane %v1392, 4
        %v1396 = vrot.slane %v1394, 4
        %v1397 = vsel %vm1210, %v1395, %v1396
        %v1398 = vsel %vm1248, %v1392, %v1397
        %v1399 = vsel %vm1248, %v1394, %v1396
        %1402 = vst [vmem:[#allocation4 + $0x90] sm:$0xff] %v1398
        %1403 = vst [vmem:[#allocation4 + $0x98] sm:$0xf] %v1399
        %v1404 = vld [vmem:[%s1348] sm:$0xff]
        %v1405 = vld [vmem:[%s1348 + $0x8] sm:$0xff]
        %1408 = vrot.lane.b32.xlu0 %v1404, 103
        %v1409 = vpop.permute.xlu0 %1408
        %1410 = vrot.lane.b32.xlu0 %v1405, 103
        %v1411 = vpop.permute.xlu0 %1410
        %v1412 = vrot.slane %v1409, 4
        %v1413 = vrot.slane %v1411, 4
        %v1414 = vsel %vm1210, %v1412, %v1413
        %v1415 = vsel %vm1266, %v1409, %v1414
        %v1416 = vsel %vm1266, %v1411, %v1413
        %1419 = vst [vmem:[#allocation4 + $0x9c] sm:$0xff] %v1415
        %1420 = vst [vmem:[#allocation4 + $0xa4] sm:$0xf] %v1416
        %v1421 = vld [vmem:[%s1348] sm:$0xff]
        %v1422 = vld [vmem:[%s1348 + $0x8] sm:$0xff]
        %1425 = vrot.lane.b32.xlu0 %v1421, 102
        %v1426 = vpop.permute.xlu0 %1425
        %1427 = vrot.lane.b32.xlu0 %v1422, 102
        %v1428 = vpop.permute.xlu0 %1427
        %v1429 = vrot.slane %v1426, 4
        %v1430 = vrot.slane %v1428, 4
        %v1431 = vsel %vm1210, %v1429, %v1430
        %v1432 = vsel %vm1284, %v1426, %v1431
        %v1433 = vsel %vm1284, %v1428, %v1430
        %1436 = vst [vmem:[#allocation4 + $0xa8] sm:$0xff] %v1432
        %1437 = vst [vmem:[#allocation4 + $0xb0] sm:$0xf] %v1433
        %v1438 = vld [vmem:[%s1348] sm:$0xff]
        %v1439 = vld [vmem:[%s1348 + $0x8] sm:$0xff]
        %1442 = vrot.lane.b32.xlu0 %v1438, 80
        %v1443 = vpop.permute.xlu0 %1442
        %1444 = vrot.lane.b32.xlu0 %v1439, 80
        %v1445 = vpop.permute.xlu0 %1444
        %v1446 = vrot.slane %v1443, 4
        %v1447 = vrot.slane %v1445, 4
        %v1448 = vsel %vm1210, %v1446, %v1447
        %v1449 = vsel %vm1302, %v1443, %v1448
        %v1450 = vsel %vm1302, %v1445, %v1447
        %1453 = vst [vmem:[#allocation4 + $0xb4] sm:$0xff] %v1449
        %1454 = vst [vmem:[#allocation4 + $0xbc] sm:$0xf] %v1450
        %v1455 = vld [vmem:[%s1348] sm:$0xff]
        %v1456 = vld [vmem:[%s1348 + $0x8] sm:$0xff]
        %1459 = vrot.lane.b32.xlu0 %v1455, 79
        %v1460 = vpop.permute.xlu0 %1459
        %1461 = vrot.lane.b32.xlu0 %v1456, 79
        %v1462 = vpop.permute.xlu0 %1461
        %v1463 = vrot.slane %v1460, 4
        %v1464 = vrot.slane %v1462, 4
        %v1465 = vsel %vm1210, %v1463, %v1464
        %v1466 = vsel %vm1320, %v1460, %v1465
        %v1467 = vsel %vm1320, %v1462, %v1464
        %1470 = vst [vmem:[#allocation4 + $0xc0] sm:$0xff] %v1466
        %1471 = vst [vmem:[#allocation4 + $0xc8] sm:$0xf] %v1467
        %v1472 = vld [vmem:[%s1348] sm:$0xff]
        %v1473 = vld [vmem:[%s1348 + $0x8] sm:$0xff]
        %1476 = vrot.lane.b32.xlu0 %v1472, 78
        %v1477 = vpop.permute.xlu0 %1476
        %1478 = vrot.lane.b32.xlu0 %v1473, 78
        %v1479 = vpop.permute.xlu0 %1478
        %v1480 = vrot.slane %v1477, 4
        %v1481 = vrot.slane %v1479, 4
        %v1482 = vsel %vm1210, %v1480, %v1481
        %v1483 = vsel %vm1338, %v1477, %v1482
        %v1484 = vsel %vm1338, %v1479, %v1481
        %1487 = vst [vmem:[#allocation4 + $0xcc] sm:$0xff] %v1483
        %1488 = vst [vmem:[#allocation4 + $0xd4] sm:$0xf] %v1484
        %s1489 = sadd.s32 %s1188, 2
        %s1490 = smul.u32 %s1489, 4
        %s1491 = smul.addr %s1490, 4
        %s1492 = scalar_lea.vmem [#allocation2], %s1491
        %v1493 = vld [vmem:[%s1492] sm:$0xff]
        %v1494 = vld [vmem:[%s1492 + $0x8] sm:$0xf]
        %1495 = vst [vmem:[#allocation4 + $0xd8] sm:$0xff] %v1493
        %1496 = vst [vmem:[#allocation4 + $0xe0] sm:$0xf] %v1494
        %v1497 = vld [vmem:[%s1492] sm:$0xff]
        %v1498 = vld [vmem:[%s1492 + $0x8] sm:$0xff]
        %1501 = vrot.lane.b32.xlu0 %v1497, 127
        %v1502 = vpop.permute.xlu0 %1501
        %1503 = vrot.lane.b32.xlu0 %v1498, 127
        %v1504 = vpop.permute.xlu0 %1503
        %v1505 = vrot.slane %v1502, 4
        %v1506 = vrot.slane %v1504, 4
        %v1507 = vsel %vm1210, %v1505, %v1506
        %v1508 = vsel %vm1212, %v1502, %v1507
        %v1509 = vsel %vm1212, %v1504, %v1506
        %1512 = vst [vmem:[#allocation4 + $0xe4] sm:$0xff] %v1508
        %1513 = vst [vmem:[#allocation4 + $0xec] sm:$0xf] %v1509
        %v1514 = vld [vmem:[%s1492] sm:$0xff]
        %v1515 = vld [vmem:[%s1492 + $0x8] sm:$0xff]
        %1518 = vrot.lane.b32.xlu0 %v1514, 126
        %v1519 = vpop.permute.xlu0 %1518
        %1520 = vrot.lane.b32.xlu0 %v1515, 126
        %v1521 = vpop.permute.xlu0 %1520
        %v1522 = vrot.slane %v1519, 4
        %v1523 = vrot.slane %v1521, 4
        %v1524 = vsel %vm1210, %v1522, %v1523
        %v1525 = vsel %vm1230, %v1519, %v1524
        %v1526 = vsel %vm1230, %v1521, %v1523
        %1529 = vst [vmem:[#allocation4 + $0xf0] sm:$0xff] %v1525
        %1530 = vst [vmem:[#allocation4 + $0xf8] sm:$0xf] %v1526
        %v1531 = vld [vmem:[%s1492] sm:$0xff]
        %v1532 = vld [vmem:[%s1492 + $0x8] sm:$0xff]
        %1535 = vrot.lane.b32.xlu0 %v1531, 104
        %v1536 = vpop.permute.xlu0 %1535
        %1537 = vrot.lane.b32.xlu0 %v1532, 104
        %v1538 = vpop.permute.xlu0 %1537
        %v1539 = vrot.slane %v1536, 4
        %v1540 = vrot.slane %v1538, 4
        %v1541 = vsel %vm1210, %v1539, %v1540
        %v1542 = vsel %vm1248, %v1536, %v1541
        %v1543 = vsel %vm1248, %v1538, %v1540
        %1546 = vst [vmem:[#allocation4 + $0xfc] sm:$0xff] %v1542
        %1547 = vst [vmem:[#allocation4 + $0x104] sm:$0xf] %v1543
        %v1548 = vld [vmem:[%s1492] sm:$0xff]
        %v1549 = vld [vmem:[%s1492 + $0x8] sm:$0xff]
        %1552 = vrot.lane.b32.xlu0 %v1548, 103
        %v1553 = vpop.permute.xlu0 %1552
        %1554 = vrot.lane.b32.xlu0 %v1549, 103
        %v1555 = vpop.permute.xlu0 %1554
        %v1556 = vrot.slane %v1553, 4
        %v1557 = vrot.slane %v1555, 4
        %v1558 = vsel %vm1210, %v1556, %v1557
        %v1559 = vsel %vm1266, %v1553, %v1558
        %v1560 = vsel %vm1266, %v1555, %v1557
        %1563 = vst [vmem:[#allocation4 + $0x108] sm:$0xff] %v1559
        %1564 = vst [vmem:[#allocation4 + $0x110] sm:$0xf] %v1560
        %v1565 = vld [vmem:[%s1492] sm:$0xff]
        %v1566 = vld [vmem:[%s1492 + $0x8] sm:$0xff]
        %1569 = vrot.lane.b32.xlu0 %v1565, 102
        %v1570 = vpop.permute.xlu0 %1569
        %1571 = vrot.lane.b32.xlu0 %v1566, 102
        %v1572 = vpop.permute.xlu0 %1571
        %v1573 = vrot.slane %v1570, 4
        %v1574 = vrot.slane %v1572, 4
        %v1575 = vsel %vm1210, %v1573, %v1574
        %v1576 = vsel %vm1284, %v1570, %v1575
        %v1577 = vsel %vm1284, %v1572, %v1574
        %1580 = vst [vmem:[#allocation4 + $0x114] sm:$0xff] %v1576
        %1581 = vst [vmem:[#allocation4 + $0x11c] sm:$0xf] %v1577
        %v1582 = vld [vmem:[%s1492] sm:$0xff]
        %v1583 = vld [vmem:[%s1492 + $0x8] sm:$0xff]
        %1586 = vrot.lane.b32.xlu0 %v1582, 80
        %v1587 = vpop.permute.xlu0 %1586
        %1588 = vrot.lane.b32.xlu0 %v1583, 80
        %v1589 = vpop.permute.xlu0 %1588
        %v1590 = vrot.slane %v1587, 4
        %v1591 = vrot.slane %v1589, 4
        %v1592 = vsel %vm1210, %v1590, %v1591
        %v1593 = vsel %vm1302, %v1587, %v1592
        %v1594 = vsel %vm1302, %v1589, %v1591
        %1597 = vst [vmem:[#allocation4 + $0x120] sm:$0xff] %v1593
        %1598 = vst [vmem:[#allocation4 + $0x128] sm:$0xf] %v1594
        %v1599 = vld [vmem:[%s1492] sm:$0xff]
        %v1600 = vld [vmem:[%s1492 + $0x8] sm:$0xff]
        %1603 = vrot.lane.b32.xlu0 %v1599, 79
        %v1604 = vpop.permute.xlu0 %1603
        %1605 = vrot.lane.b32.xlu0 %v1600, 79
        %v1606 = vpop.permute.xlu0 %1605
        %v1607 = vrot.slane %v1604, 4
        %v1608 = vrot.slane %v1606, 4
        %v1609 = vsel %vm1210, %v1607, %v1608
        %v1610 = vsel %vm1320, %v1604, %v1609
        %v1611 = vsel %vm1320, %v1606, %v1608
        %1614 = vst [vmem:[#allocation4 + $0x12c] sm:$0xff] %v1610
        %1615 = vst [vmem:[#allocation4 + $0x134] sm:$0xf] %v1611
        %v1616 = vld [vmem:[%s1492] sm:$0xff]
        %v1617 = vld [vmem:[%s1492 + $0x8] sm:$0xff]
        %1620 = vrot.lane.b32.xlu0 %v1616, 78
        %v1621 = vpop.permute.xlu0 %1620
        %1622 = vrot.lane.b32.xlu0 %v1617, 78
        %v1623 = vpop.permute.xlu0 %1622
        %v1624 = vrot.slane %v1621, 4
        %v1625 = vrot.slane %v1623, 4
        %v1626 = vsel %vm1210, %v1624, %v1625
        %v1627 = vsel %vm1338, %v1621, %v1626
        %v1628 = vsel %vm1338, %v1623, %v1625
        %1631 = vst [vmem:[#allocation4 + $0x138] sm:$0xff] %v1627
        %1632 = vst [vmem:[#allocation4 + $0x140] sm:$0xf] %v1628
        %v1633 = vld [vmem:[%s4] sm:$0xff]
        %v1634 = vld [vmem:[#allocation4] sm:$0xff]
        %v1635 = vld [vmem:[#allocation4 + $0x8] sm:$0xf]
        %v1636 = vld [vmem:[#allocation4 + $0xc] sm:$0xff]
        %v1637 = vld [vmem:[#allocation4 + $0x14] sm:$0xf]
        %v1638 = vld [vmem:[#allocation4 + $0x18] sm:$0xff]
        %v1639 = vld [vmem:[#allocation4 + $0x20] sm:$0xf]
        %v1640 = vld [vmem:[#allocation4 + $0x24] sm:$0xff]
        %v1641 = vld [vmem:[#allocation4 + $0x2c] sm:$0xf]
        %v1642 = vld [vmem:[#allocation4 + $0x30] sm:$0xff]
        %v1643 = vld [vmem:[#allocation4 + $0x38] sm:$0xf]
        %v1644 = vld [vmem:[#allocation4 + $0x3c] sm:$0xff]
        %v1645 = vld [vmem:[#allocation4 + $0x44] sm:$0xf]
        %v1646 = vld [vmem:[#allocation4 + $0x48] sm:$0xff]
        %v1647 = vld [vmem:[#allocation4 + $0x50] sm:$0xf]
        %v1648 = vld [vmem:[#allocation4 + $0x54] sm:$0xff]
        %v1649 = vld [vmem:[#allocation4 + $0x5c] sm:$0xf]
        %v1650 = vld [vmem:[#allocation4 + $0x60] sm:$0xff]
        %v1651 = vld [vmem:[#allocation4 + $0x68] sm:$0xf]
        %v1652 = vld [vmem:[#allocation4 + $0x6c] sm:$0xff]
        %v1653 = vld [vmem:[#allocation4 + $0x74] sm:$0xf]
        %v1654 = vld [vmem:[#allocation4 + $0x78] sm:$0xff]
        %v1655 = vld [vmem:[#allocation4 + $0x80] sm:$0xf]
        %v1656 = vld [vmem:[#allocation4 + $0x84] sm:$0xff]
        %v1657 = vld [vmem:[#allocation4 + $0x8c] sm:$0xf]
        %v1658 = vld [vmem:[#allocation4 + $0x90] sm:$0xff]
        %v1659 = vld [vmem:[#allocation4 + $0x98] sm:$0xf]
        %v1660 = vld [vmem:[#allocation4 + $0x9c] sm:$0xff]
        %v1661 = vld [vmem:[#allocation4 + $0xa4] sm:$0xf]
        %v1662 = vld [vmem:[#allocation4 + $0xa8] sm:$0xff]
        %v1663 = vld [vmem:[#allocation4 + $0xb0] sm:$0xf]
        %v1664 = vld [vmem:[#allocation4 + $0xb4] sm:$0xff]
        %v1665 = vld [vmem:[#allocation4 + $0xbc] sm:$0xf]
        %v1666 = vld [vmem:[#allocation4 + $0xc0] sm:$0xff]
        %v1667 = vld [vmem:[#allocation4 + $0xc8] sm:$0xf]
        %v1668 = vld [vmem:[#allocation4 + $0xcc] sm:$0xff]
        %v1669 = vld [vmem:[#allocation4 + $0xd4] sm:$0xf]
        %v1670 = vld [vmem:[#allocation4 + $0xd8] sm:$0xff]
        %v1671 = vld [vmem:[#allocation4 + $0xe0] sm:$0xf]
        %v1672 = vld [vmem:[#allocation4 + $0xe4] sm:$0xff]
        %v1673 = vld [vmem:[#allocation4 + $0xec] sm:$0xf]
        %v1674 = vld [vmem:[#allocation4 + $0xf0] sm:$0xff]
        %v1675 = vld [vmem:[#allocation4 + $0xf8] sm:$0xf]
        %v1676 = vld [vmem:[#allocation4 + $0xfc] sm:$0xff]
        %v1677 = vld [vmem:[#allocation4 + $0x104] sm:$0xf]
        %v1678 = vld [vmem:[#allocation4 + $0x108] sm:$0xff]
        %v1679 = vld [vmem:[#allocation4 + $0x110] sm:$0xf]
        %v1680 = vld [vmem:[#allocation4 + $0x114] sm:$0xff]
        %v1681 = vld [vmem:[#allocation4 + $0x11c] sm:$0xf]
        %v1682 = vld [vmem:[#allocation4 + $0x120] sm:$0xff]
        %v1683 = vld [vmem:[#allocation4 + $0x128] sm:$0xf]
        %v1684 = vld [vmem:[#allocation4 + $0x12c] sm:$0xff]
        %v1685 = vld [vmem:[#allocation4 + $0x134] sm:$0xf]
        %v1686 = vld [vmem:[#allocation4 + $0x138] sm:$0xff]
        %v1687 = vld [vmem:[#allocation4 + $0x140] sm:$0xf]
        %v1689 = vunpack.c.l.b16 %v1633
        %v1690 = vunpack.c.h.b16 %v1633
        %v1691 = vpack.c.b16 %v1689, %v1689
        %v1692 = vpack.c.b16 %v1690, %v1690
        %v1748 = vunpack.c.l.b16 %v1634
        %v1749 = vunpack.c.h.b16 %v1634
        %v1750 = vunpack.c.l.b16 %v1635
        %v1751 = vunpack.c.l.b16 %v1636
        %v1752 = vunpack.c.h.b16 %v1636
        %v1753 = vunpack.c.l.b16 %v1637
        %v1754 = vunpack.c.l.b16 %v1638
        %v1755 = vunpack.c.h.b16 %v1638
        %v1756 = vunpack.c.l.b16 %v1639
        %v1757 = vunpack.c.l.b16 %v1640
        %v1758 = vunpack.c.h.b16 %v1640
        %v1759 = vunpack.c.l.b16 %v1641
        %v1760 = vunpack.c.l.b16 %v1642
        %v1761 = vunpack.c.h.b16 %v1642
        %v1762 = vunpack.c.l.b16 %v1643
        %v1763 = vunpack.c.l.b16 %v1644
        %v1764 = vunpack.c.h.b16 %v1644
        %v1765 = vunpack.c.l.b16 %v1645
        %v1766 = vunpack.c.l.b16 %v1646
        %v1767 = vunpack.c.h.b16 %v1646
        %v1768 = vunpack.c.l.b16 %v1647
        %v1769 = vunpack.c.l.b16 %v1648
        %v1770 = vunpack.c.h.b16 %v1648
        %v1771 = vunpack.c.l.b16 %v1649
        %v1772 = vunpack.c.l.b16 %v1650
        %v1773 = vunpack.c.h.b16 %v1650
        %v1774 = vunpack.c.l.b16 %v1651
        %v1775 = vunpack.c.l.b16 %v1652
        %v1776 = vunpack.c.h.b16 %v1652
        %v1777 = vunpack.c.l.b16 %v1653
        %v1778 = vunpack.c.l.b16 %v1654
        %v1779 = vunpack.c.h.b16 %v1654
        %v1780 = vunpack.c.l.b16 %v1655
        %v1781 = vunpack.c.l.b16 %v1656
        %v1782 = vunpack.c.h.b16 %v1656
        %v1783 = vunpack.c.l.b16 %v1657
        %v1784 = vunpack.c.l.b16 %v1658
        %v1785 = vunpack.c.h.b16 %v1658
        %v1786 = vunpack.c.l.b16 %v1659
        %v1787 = vunpack.c.l.b16 %v1660
        %v1788 = vunpack.c.h.b16 %v1660
        %v1789 = vunpack.c.l.b16 %v1661
        %v1790 = vunpack.c.l.b16 %v1662
        %v1791 = vunpack.c.h.b16 %v1662
        %v1792 = vunpack.c.l.b16 %v1663
        %v1793 = vunpack.c.l.b16 %v1664
        %v1794 = vunpack.c.h.b16 %v1664
        %v1795 = vunpack.c.l.b16 %v1665
        %v1796 = vunpack.c.l.b16 %v1666
        %v1797 = vunpack.c.h.b16 %v1666
        %v1798 = vunpack.c.l.b16 %v1667
        %v1799 = vunpack.c.l.b16 %v1668
        %v1800 = vunpack.c.h.b16 %v1668
        %v1801 = vunpack.c.l.b16 %v1669
        %v1802 = vunpack.c.l.b16 %v1670
        %v1803 = vunpack.c.h.b16 %v1670
        %v1804 = vunpack.c.l.b16 %v1671
        %v1805 = vunpack.c.l.b16 %v1672
        %v1806 = vunpack.c.h.b16 %v1672
        %v1807 = vunpack.c.l.b16 %v1673
        %v1808 = vunpack.c.l.b16 %v1674
        %v1809 = vunpack.c.h.b16 %v1674
        %v1810 = vunpack.c.l.b16 %v1675
        %v1811 = vunpack.c.l.b16 %v1676
        %v1812 = vunpack.c.h.b16 %v1676
        %v1813 = vunpack.c.l.b16 %v1677
        %v1814 = vunpack.c.l.b16 %v1678
        %v1815 = vunpack.c.h.b16 %v1678
        %v1816 = vunpack.c.l.b16 %v1679
        %v1817 = vunpack.c.l.b16 %v1680
        %v1818 = vunpack.c.h.b16 %v1680
        %v1819 = vunpack.c.l.b16 %v1681
        %v1820 = vunpack.c.l.b16 %v1682
        %v1821 = vunpack.c.h.b16 %v1682
        %v1822 = vunpack.c.l.b16 %v1683
        %v1823 = vunpack.c.l.b16 %v1684
        %v1824 = vunpack.c.h.b16 %v1684
        %v1825 = vunpack.c.l.b16 %v1685
        %v1826 = vunpack.c.l.b16 %v1686
        %v1827 = vunpack.c.h.b16 %v1686
        %v1828 = vunpack.c.l.b16 %v1687
        %v1829 = vpack.c.b16 %v1751, %v1748
        %v1830 = vpack.c.b16 %v1752, %v1749
        %v1831 = vpack.c.b16 %v1753, %v1750
        %v1832 = vpack.c.b16 %v1757, %v1754
        %v1833 = vpack.c.b16 %v1758, %v1755
        %v1834 = vpack.c.b16 %v1759, %v1756
        %v1835 = vpack.c.b16 %v1763, %v1760
        %v1836 = vpack.c.b16 %v1764, %v1761
        %v1837 = vpack.c.b16 %v1765, %v1762
        %v1838 = vpack.c.b16 %v1769, %v1766
        %v1839 = vpack.c.b16 %v1770, %v1767
        %v1840 = vpack.c.b16 %v1771, %v1768
        %v1841 = vpack.c.b16 %v1775, %v1772
        %v1842 = vpack.c.b16 %v1776, %v1773
        %v1843 = vpack.c.b16 %v1777, %v1774
        %v1844 = vpack.c.b16 %v1781, %v1778
        %v1845 = vpack.c.b16 %v1782, %v1779
        %v1846 = vpack.c.b16 %v1783, %v1780
        %v1847 = vpack.c.b16 %v1787, %v1784
        %v1848 = vpack.c.b16 %v1788, %v1785
        %v1849 = vpack.c.b16 %v1789, %v1786
        %v1850 = vpack.c.b16 %v1793, %v1790
        %v1851 = vpack.c.b16 %v1794, %v1791
        %v1852 = vpack.c.b16 %v1795, %v1792
        %v1853 = vpack.c.b16 %v1799, %v1796
        %v1854 = vpack.c.b16 %v1800, %v1797
        %v1855 = vpack.c.b16 %v1801, %v1798
        %v1856 = vpack.c.b16 %v1805, %v1802
        %v1857 = vpack.c.b16 %v1806, %v1803
        %v1858 = vpack.c.b16 %v1807, %v1804
        %v1859 = vpack.c.b16 %v1811, %v1808
        %v1860 = vpack.c.b16 %v1812, %v1809
        %v1861 = vpack.c.b16 %v1813, %v1810
        %v1862 = vpack.c.b16 %v1817, %v1814
        %v1863 = vpack.c.b16 %v1818, %v1815
        %v1864 = vpack.c.b16 %v1819, %v1816
        %v1865 = vpack.c.b16 %v1823, %v1820
        %v1866 = vpack.c.b16 %v1824, %v1821
        %v1867 = vpack.c.b16 %v1825, %v1822
        %v1868 = vpack.c.b16 %v1826, %v1826
        %v1869 = vpack.c.b16 %v1827, %v1827
        %v1870 = vpack.c.b16 %v1828, %v1828
        %vm1910 = vcmask 719872
        %v1912 = vsel %vm1910, %v1692, 0
        %v1915 = vsel %vm320, %v1868, 0
        %v1918 = vsel %vm320, %v1869, 0
        %v1921 = vsel %vm320, %v1870, 0
        %1923 = vmatpush.bf16.msra.mxu0 %v1850
        %1924 = vmatpush.bf16.msra.mxu0 %v1847
        %1925 = vmatpush.bf16.msra.mxu0 %v1844
        %1926 = vmatpush.bf16.msra.mxu0 %v1841
        %1927 = vmatpush.bf16.msra.mxu0 %v1838
        %1928 = vmatpush.bf16.msra.mxu0 %v1835
        %1929 = vmatpush.bf16.msra.mxu0 %v1832
        %1930 = vmatpush.bf16.msra.mxu0 %v1829
        %1931 = vmatmul.bf16.gmra.mxu0 %v1691
        %v1932 = vpop.f32.mrf.mxu0
        %v1933 = vadd.f32 %v313, %v1932
        %v1934 = vpop.f32.mrf.mxu0
        %1935 = vdwg.mxu0
        %1936 = vmatpush.bf16.msra.mxu0 0
        %1937 = vmatpush.bf16.msra.mxu0 0
        %1938 = vmatpush.bf16.msra.mxu0 %v1915
        %1939 = vmatpush.bf16.msra.mxu0 %v1865
        %1940 = vmatpush.bf16.msra.mxu0 %v1862
        %1941 = vmatpush.bf16.msra.mxu0 %v1859
        %1942 = vmatpush.bf16.msra.mxu0 %v1856
        %1943 = vmatpush.bf16.msra.mxu0 %v1853
        %1944 = vmatmul.bf16.gmra.mxu0 %v1912
        %v1945 = vpop.f32.mrf.mxu0
        %v1946 = vadd.f32 %v1933, %v1945
        %v1947 = vpop.f32.mrf.mxu0
        %1948 = vdwg.mxu0
        %1949 = vmatpush.bf16.msra.mxu0 %v1851
        %1950 = vmatpush.bf16.msra.mxu0 %v1848
        %1951 = vmatpush.bf16.msra.mxu0 %v1845
        %1952 = vmatpush.bf16.msra.mxu0 %v1842
        %1953 = vmatpush.bf16.msra.mxu0 %v1839
        %1954 = vmatpush.bf16.msra.mxu0 %v1836
        %1955 = vmatpush.bf16.msra.mxu0 %v1833
        %1956 = vmatpush.bf16.msra.mxu0 %v1830
        %1957 = vmatmul.bf16.gmra.mxu0 %v1691
        %v1958 = vpop.f32.mrf.mxu0
        %v1959 = vadd.f32 %v314, %v1958
        %v1960 = vpop.f32.mrf.mxu0
        %1961 = vdwg.mxu0
        %1962 = vmatpush.bf16.msra.mxu0 0
        %1963 = vmatpush.bf16.msra.mxu0 0
        %1964 = vmatpush.bf16.msra.mxu0 %v1918
        %1965 = vmatpush.bf16.msra.mxu0 %v1866
        %1966 = vmatpush.bf16.msra.mxu0 %v1863
        %1967 = vmatpush.bf16.msra.mxu0 %v1860
        %1968 = vmatpush.bf16.msra.mxu0 %v1857
        %1969 = vmatpush.bf16.msra.mxu0 %v1854
        %1970 = vmatmul.bf16.gmra.mxu0 %v1912
        %v1971 = vpop.f32.mrf.mxu0
        %v1972 = vadd.f32 %v1959, %v1971
        %v1973 = vpop.f32.mrf.mxu0
        %1974 = vdwg.mxu0
        %1975 = vmatpush.bf16.msra.mxu0 %v1852
        %1976 = vmatpush.bf16.msra.mxu0 %v1849
        %1977 = vmatpush.bf16.msra.mxu0 %v1846
        %1978 = vmatpush.bf16.msra.mxu0 %v1843
        %1979 = vmatpush.bf16.msra.mxu0 %v1840
        %1980 = vmatpush.bf16.msra.mxu0 %v1837
        %1981 = vmatpush.bf16.msra.mxu0 %v1834
        %1982 = vmatpush.bf16.msra.mxu0 %v1831
        %1983 = vmatmul.bf16.gmra.mxu0 %v1691
        %v1984 = vpop.f32.mrf.mxu0
        %v1985 = vadd.f32 %v315, %v1984
        %v1986 = vpop.f32.mrf.mxu0
        %1987 = vdwg.mxu0
        %1988 = vmatpush.bf16.msra.mxu0 0
        %1989 = vmatpush.bf16.msra.mxu0 0
        %1990 = vmatpush.bf16.msra.mxu0 %v1921
        %1991 = vmatpush.bf16.msra.mxu0 %v1867
        %1992 = vmatpush.bf16.msra.mxu0 %v1864
        %1993 = vmatpush.bf16.msra.mxu0 %v1861
        %1994 = vmatpush.bf16.msra.mxu0 %v1858
        %1995 = vmatpush.bf16.msra.mxu0 %v1855
        %1996 = vmatmul.bf16.gmra.mxu0 %v1912
        %v1997 = vpop.f32.mrf.mxu0
        %v1998 = vadd.f32 %v1985, %v1997
        %v1999 = vpop.f32.mrf.mxu0
        %2000 = vdwg.mxu0
        %v2001 = vmul.f32 %v1946, %v307
        %v2002 = vmul.f32 %v1972, %v308
        %v2003 = vmul.f32 %v1998, %v309
        %s2004 = smul.addr %s1346, 4
        %s2005 = scalar_lea.vmem [#allocation3], %s2004
        %vm2006 = vcmask 199680
        %2007 = vst.msk [vmem:[%s2005] sm:$0xf] %vm2006, 0
        %v2008 = vpack.c.bf16 %v2002, %v2001
        %v2009 = vpack.c.bf16 %v2003, %v2003
        %2012 = vrot.lane.b32.xlu0 %v2008, 25
        %v2013 = vpop.permute.xlu0 %2012
        %2014 = vrot.lane.b32.xlu0 %v2009, 25
        %v2015 = vpop.permute.xlu0 %2014
        %v2016 = vrot.slane %v2013, 4
        %v2017 = vrot.slane %v2015, 4
        %vm2018 = vcmask 203776
        %v2019 = vsel %vm2018, %v2016, %v2013
        %v2020 = vsel %vm1210, %v2016, %v2017
        %v2021 = vsel %vm2018, %v2020, %v2015
        %vm2024 = vcmask 1043656
        %vm2025 = vcmask 1047556
        %vm2026 = vmor %vm2025, %vm2024
        %2027 = vst.msk [vmem:[%s2005] sm:$0xff] %vm2026, %v2019
        %vm2028 = vcmask 203780
        %vm2029 = vmor %vm2028, %vm320
        %2030 = vst.msk [vmem:[%s2005 + $0x8] sm:$0xff] %vm2029, %v2021
        %vm2031 = vcmask 584904
        %2032 = vst.msk [vmem:[%s2005 + $0xc] sm:$0xf] %vm2031, 0
      $region64: #{residual_block.1} parent=51 // loop_footer
        %s1192 = sadd.s32 1, %s1188
      $region65: #{residual_block.1} parent=51 // loop_footer_branch
        %1187 = sbr.rel target = $region61
      $region66: #{residual_block.1} parent=51 // loop_exit
        _
      loop: start=0, step=1, limit=16
      $region67: #{residual_block.1} parent=51 // loop_pre_header
        _
      $region68: #{residual_block.1} parent=51 // loop_header
        %s2034 = sphi 0, %s2038
        %p2035 = scmp.ge.s32.totalorder %s2034, 16
      $region69: #{residual_block.1} parent=51 // loop_header_branch
        %2037 = sbr.rel (%p2035) target = $region73
      $region70: #{residual_block.1} parent=51 // loop_body
        %s2039 = smul.u32 %s2034, 4
        %s2040 = smul.addr %s2039, 4
        %s2041 = scalar_lea.vmem %s300, %s2040
        %v2042 = vld [vmem:[%s2041] sm:$0xff]
        %v2043 = vld [vmem:[%s2041 + $0x8] sm:$0xf]
        %2044 = vst [vmem:[#allocation4] sm:$0xff] %v2042
        %2045 = vst [vmem:[#allocation4 + $0x8] sm:$0xf] %v2043
        %v2046 = vld [vmem:[%s2041] sm:$0xff]
        %v2047 = vld [vmem:[%s2041 + $0x8] sm:$0xff]
        %2050 = vrot.lane.b32.xlu0 %v2046, 127
        %v2051 = vpop.permute.xlu0 %2050
        %2052 = vrot.lane.b32.xlu0 %v2047, 127
        %v2053 = vpop.permute.xlu0 %2052
        %v2054 = vrot.slane %v2051, 4
        %v2055 = vrot.slane %v2053, 4
        %vm2056 = vcmask 1043456
        %v2057 = vsel %vm2056, %v2054, %v2055
        %vm2058 = vcmask 1039360
        %v2059 = vsel %vm2058, %v2051, %v2057
        %v2060 = vsel %vm2058, %v2053, %v2055
        %2063 = vst [vmem:[#allocation4 + $0xc] sm:$0xff] %v2059
        %2064 = vst [vmem:[#allocation4 + $0x14] sm:$0xf] %v2060
        %v2065 = vld [vmem:[%s2041] sm:$0xff]
        %v2066 = vld [vmem:[%s2041 + $0x8] sm:$0xff]
        %2069 = vrot.lane.b32.xlu0 %v2065, 126
        %v2070 = vpop.permute.xlu0 %2069
        %2071 = vrot.lane.b32.xlu0 %v2066, 126
        %v2072 = vpop.permute.xlu0 %2071
        %v2073 = vrot.slane %v2070, 4
        %v2074 = vrot.slane %v2072, 4
        %v2075 = vsel %vm2056, %v2073, %v2074
        %vm2076 = vcmask 1031168
        %v2077 = vsel %vm2076, %v2070, %v2075
        %v2078 = vsel %vm2076, %v2072, %v2074
        %2081 = vst [vmem:[#allocation4 + $0x18] sm:$0xff] %v2077
        %2082 = vst [vmem:[#allocation4 + $0x20] sm:$0xf] %v2078
        %v2083 = vld [vmem:[%s2041] sm:$0xff]
        %v2084 = vld [vmem:[%s2041 + $0x8] sm:$0xff]
        %2087 = vrot.lane.b32.xlu0 %v2083, 104
        %v2088 = vpop.permute.xlu0 %2087
        %2089 = vrot.lane.b32.xlu0 %v2084, 104
        %v2090 = vpop.permute.xlu0 %2089
        %v2091 = vrot.slane %v2088, 4
        %v2092 = vrot.slane %v2090, 4
        %v2093 = vsel %vm2056, %v2091, %v2092
        %vm2094 = vcmask 850944
        %v2095 = vsel %vm2094, %v2088, %v2093
        %v2096 = vsel %vm2094, %v2090, %v2092
        %2099 = vst [vmem:[#allocation4 + $0x24] sm:$0xff] %v2095
        %2100 = vst [vmem:[#allocation4 + $0x2c] sm:$0xf] %v2096
        %v2101 = vld [vmem:[%s2041] sm:$0xff]
        %v2102 = vld [vmem:[%s2041 + $0x8] sm:$0xff]
        %2105 = vrot.lane.b32.xlu0 %v2101, 103
        %v2106 = vpop.permute.xlu0 %2105
        %2107 = vrot.lane.b32.xlu0 %v2102, 103
        %v2108 = vpop.permute.xlu0 %2107
        %v2109 = vrot.slane %v2106, 4
        %v2110 = vrot.slane %v2108, 4
        %v2111 = vsel %vm2056, %v2109, %v2110
        %vm2112 = vcmask 842752
        %v2113 = vsel %vm2112, %v2106, %v2111
        %v2114 = vsel %vm2112, %v2108, %v2110
        %2117 = vst [vmem:[#allocation4 + $0x30] sm:$0xff] %v2113
        %2118 = vst [vmem:[#allocation4 + $0x38] sm:$0xf] %v2114
        %v2119 = vld [vmem:[%s2041] sm:$0xff]
        %v2120 = vld [vmem:[%s2041 + $0x8] sm:$0xff]
        %2123 = vrot.lane.b32.xlu0 %v2119, 102
        %v2124 = vpop.permute.xlu0 %2123
        %2125 = vrot.lane.b32.xlu0 %v2120, 102
        %v2126 = vpop.permute.xlu0 %2125
        %v2127 = vrot.slane %v2124, 4
        %v2128 = vrot.slane %v2126, 4
        %v2129 = vsel %vm2056, %v2127, %v2128
        %vm2130 = vcmask 834560
        %v2131 = vsel %vm2130, %v2124, %v2129
        %v2132 = vsel %vm2130, %v2126, %v2128
        %2135 = vst [vmem:[#allocation4 + $0x3c] sm:$0xff] %v2131
        %2136 = vst [vmem:[#allocation4 + $0x44] sm:$0xf] %v2132
        %v2137 = vld [vmem:[%s2041] sm:$0xff]
        %v2138 = vld [vmem:[%s2041 + $0x8] sm:$0xff]
        %2141 = vrot.lane.b32.xlu0 %v2137, 80
        %v2142 = vpop.permute.xlu0 %2141
        %2143 = vrot.lane.b32.xlu0 %v2138, 80
        %v2144 = vpop.permute.xlu0 %2143
        %v2145 = vrot.slane %v2142, 4
        %v2146 = vrot.slane %v2144, 4
        %v2147 = vsel %vm2056, %v2145, %v2146
        %vm2148 = vcmask 654336
        %v2149 = vsel %vm2148, %v2142, %v2147
        %v2150 = vsel %vm2148, %v2144, %v2146
        %2153 = vst [vmem:[#allocation4 + $0x48] sm:$0xff] %v2149
        %2154 = vst [vmem:[#allocation4 + $0x50] sm:$0xf] %v2150
        %v2155 = vld [vmem:[%s2041] sm:$0xff]
        %v2156 = vld [vmem:[%s2041 + $0x8] sm:$0xff]
        %2159 = vrot.lane.b32.xlu0 %v2155, 79
        %v2160 = vpop.permute.xlu0 %2159
        %2161 = vrot.lane.b32.xlu0 %v2156, 79
        %v2162 = vpop.permute.xlu0 %2161
        %v2163 = vrot.slane %v2160, 4
        %v2164 = vrot.slane %v2162, 4
        %v2165 = vsel %vm2056, %v2163, %v2164
        %vm2166 = vcmask 646144
        %v2167 = vsel %vm2166, %v2160, %v2165
        %v2168 = vsel %vm2166, %v2162, %v2164
        %2171 = vst [vmem:[#allocation4 + $0x54] sm:$0xff] %v2167
        %2172 = vst [vmem:[#allocation4 + $0x5c] sm:$0xf] %v2168
        %v2173 = vld [vmem:[%s2041] sm:$0xff]
        %v2174 = vld [vmem:[%s2041 + $0x8] sm:$0xff]
        %2177 = vrot.lane.b32.xlu0 %v2173, 78
        %v2178 = vpop.permute.xlu0 %2177
        %2179 = vrot.lane.b32.xlu0 %v2174, 78
        %v2180 = vpop.permute.xlu0 %2179
        %v2181 = vrot.slane %v2178, 4
        %v2182 = vrot.slane %v2180, 4
        %v2183 = vsel %vm2056, %v2181, %v2182
        %vm2184 = vcmask 637952
        %v2185 = vsel %vm2184, %v2178, %v2183
        %v2186 = vsel %vm2184, %v2180, %v2182
        %2189 = vst [vmem:[#allocation4 + $0x60] sm:$0xff] %v2185
        %2190 = vst [vmem:[#allocation4 + $0x68] sm:$0xf] %v2186
        %s2191 = sadd.s32 %s2034, 1
        %s2192 = smul.u32 %s2191, 4
        %s2193 = smul.addr %s2192, 4
        %s2194 = scalar_lea.vmem %s300, %s2193
        %v2195 = vld [vmem:[%s2194] sm:$0xff]
        %v2196 = vld [vmem:[%s2194 + $0x8] sm:$0xf]
        %2197 = vst [vmem:[#allocation4 + $0x6c] sm:$0xff] %v2195
        %2198 = vst [vmem:[#allocation4 + $0x74] sm:$0xf] %v2196
        %v2199 = vld [vmem:[%s2194] sm:$0xff]
        %v2200 = vld [vmem:[%s2194 + $0x8] sm:$0xff]
        %2203 = vrot.lane.b32.xlu0 %v2199, 127
        %v2204 = vpop.permute.xlu0 %2203
        %2205 = vrot.lane.b32.xlu0 %v2200, 127
        %v2206 = vpop.permute.xlu0 %2205
        %v2207 = vrot.slane %v2204, 4
        %v2208 = vrot.slane %v2206, 4
        %v2209 = vsel %vm2056, %v2207, %v2208
        %v2210 = vsel %vm2058, %v2204, %v2209
        %v2211 = vsel %vm2058, %v2206, %v2208
        %2214 = vst [vmem:[#allocation4 + $0x78] sm:$0xff] %v2210
        %2215 = vst [vmem:[#allocation4 + $0x80] sm:$0xf] %v2211
        %v2216 = vld [vmem:[%s2194] sm:$0xff]
        %v2217 = vld [vmem:[%s2194 + $0x8] sm:$0xff]
        %2220 = vrot.lane.b32.xlu0 %v2216, 126
        %v2221 = vpop.permute.xlu0 %2220
        %2222 = vrot.lane.b32.xlu0 %v2217, 126
        %v2223 = vpop.permute.xlu0 %2222
        %v2224 = vrot.slane %v2221, 4
        %v2225 = vrot.slane %v2223, 4
        %v2226 = vsel %vm2056, %v2224, %v2225
        %v2227 = vsel %vm2076, %v2221, %v2226
        %v2228 = vsel %vm2076, %v2223, %v2225
        %2231 = vst [vmem:[#allocation4 + $0x84] sm:$0xff] %v2227
        %2232 = vst [vmem:[#allocation4 + $0x8c] sm:$0xf] %v2228
        %v2233 = vld [vmem:[%s2194] sm:$0xff]
        %v2234 = vld [vmem:[%s2194 + $0x8] sm:$0xff]
        %2237 = vrot.lane.b32.xlu0 %v2233, 104
        %v2238 = vpop.permute.xlu0 %2237
        %2239 = vrot.lane.b32.xlu0 %v2234, 104
        %v2240 = vpop.permute.xlu0 %2239
        %v2241 = vrot.slane %v2238, 4
        %v2242 = vrot.slane %v2240, 4
        %v2243 = vsel %vm2056, %v2241, %v2242
        %v2244 = vsel %vm2094, %v2238, %v2243
        %v2245 = vsel %vm2094, %v2240, %v2242
        %2248 = vst [vmem:[#allocation4 + $0x90] sm:$0xff] %v2244
        %2249 = vst [vmem:[#allocation4 + $0x98] sm:$0xf] %v2245
        %v2250 = vld [vmem:[%s2194] sm:$0xff]
        %v2251 = vld [vmem:[%s2194 + $0x8] sm:$0xff]
        %2254 = vrot.lane.b32.xlu0 %v2250, 103
        %v2255 = vpop.permute.xlu0 %2254
        %2256 = vrot.lane.b32.xlu0 %v2251, 103
        %v2257 = vpop.permute.xlu0 %2256
        %v2258 = vrot.slane %v2255, 4
        %v2259 = vrot.slane %v2257, 4
        %v2260 = vsel %vm2056, %v2258, %v2259
        %v2261 = vsel %vm2112, %v2255, %v2260
        %v2262 = vsel %vm2112, %v2257, %v2259
        %2265 = vst [vmem:[#allocation4 + $0x9c] sm:$0xff] %v2261
        %2266 = vst [vmem:[#allocation4 + $0xa4] sm:$0xf] %v2262
        %v2267 = vld [vmem:[%s2194] sm:$0xff]
        %v2268 = vld [vmem:[%s2194 + $0x8] sm:$0xff]
        %2271 = vrot.lane.b32.xlu0 %v2267, 102
        %v2272 = vpop.permute.xlu0 %2271
        %2273 = vrot.lane.b32.xlu0 %v2268, 102
        %v2274 = vpop.permute.xlu0 %2273
        %v2275 = vrot.slane %v2272, 4
        %v2276 = vrot.slane %v2274, 4
        %v2277 = vsel %vm2056, %v2275, %v2276
        %v2278 = vsel %vm2130, %v2272, %v2277
        %v2279 = vsel %vm2130, %v2274, %v2276
        %2282 = vst [vmem:[#allocation4 + $0xa8] sm:$0xff] %v2278
        %2283 = vst [vmem:[#allocation4 + $0xb0] sm:$0xf] %v2279
        %v2284 = vld [vmem:[%s2194] sm:$0xff]
        %v2285 = vld [vmem:[%s2194 + $0x8] sm:$0xff]
        %2288 = vrot.lane.b32.xlu0 %v2284, 80
        %v2289 = vpop.permute.xlu0 %2288
        %2290 = vrot.lane.b32.xlu0 %v2285, 80
        %v2291 = vpop.permute.xlu0 %2290
        %v2292 = vrot.slane %v2289, 4
        %v2293 = vrot.slane %v2291, 4
        %v2294 = vsel %vm2056, %v2292, %v2293
        %v2295 = vsel %vm2148, %v2289, %v2294
        %v2296 = vsel %vm2148, %v2291, %v2293
        %2299 = vst [vmem:[#allocation4 + $0xb4] sm:$0xff] %v2295
        %2300 = vst [vmem:[#allocation4 + $0xbc] sm:$0xf] %v2296
        %v2301 = vld [vmem:[%s2194] sm:$0xff]
        %v2302 = vld [vmem:[%s2194 + $0x8] sm:$0xff]
        %2305 = vrot.lane.b32.xlu0 %v2301, 79
        %v2306 = vpop.permute.xlu0 %2305
        %2307 = vrot.lane.b32.xlu0 %v2302, 79
        %v2308 = vpop.permute.xlu0 %2307
        %v2309 = vrot.slane %v2306, 4
        %v2310 = vrot.slane %v2308, 4
        %v2311 = vsel %vm2056, %v2309, %v2310
        %v2312 = vsel %vm2166, %v2306, %v2311
        %v2313 = vsel %vm2166, %v2308, %v2310
        %2316 = vst [vmem:[#allocation4 + $0xc0] sm:$0xff] %v2312
        %2317 = vst [vmem:[#allocation4 + $0xc8] sm:$0xf] %v2313
        %v2318 = vld [vmem:[%s2194] sm:$0xff]
        %v2319 = vld [vmem:[%s2194 + $0x8] sm:$0xff]
        %2322 = vrot.lane.b32.xlu0 %v2318, 78
        %v2323 = vpop.permute.xlu0 %2322
        %2324 = vrot.lane.b32.xlu0 %v2319, 78
        %v2325 = vpop.permute.xlu0 %2324
        %v2326 = vrot.slane %v2323, 4
        %v2327 = vrot.slane %v2325, 4
        %v2328 = vsel %vm2056, %v2326, %v2327
        %v2329 = vsel %vm2184, %v2323, %v2328
        %v2330 = vsel %vm2184, %v2325, %v2327
        %2333 = vst [vmem:[#allocation4 + $0xcc] sm:$0xff] %v2329
        %2334 = vst [vmem:[#allocation4 + $0xd4] sm:$0xf] %v2330
        %s2335 = sadd.s32 %s2034, 2
        %s2336 = smul.u32 %s2335, 4
        %s2337 = smul.addr %s2336, 4
        %s2338 = scalar_lea.vmem %s300, %s2337
        %v2339 = vld [vmem:[%s2338] sm:$0xff]
        %v2340 = vld [vmem:[%s2338 + $0x8] sm:$0xf]
        %2341 = vst [vmem:[#allocation4 + $0xd8] sm:$0xff] %v2339
        %2342 = vst [vmem:[#allocation4 + $0xe0] sm:$0xf] %v2340
        %v2343 = vld [vmem:[%s2338] sm:$0xff]
        %v2344 = vld [vmem:[%s2338 + $0x8] sm:$0xff]
        %2347 = vrot.lane.b32.xlu0 %v2343, 127
        %v2348 = vpop.permute.xlu0 %2347
        %2349 = vrot.lane.b32.xlu0 %v2344, 127
        %v2350 = vpop.permute.xlu0 %2349
        %v2351 = vrot.slane %v2348, 4
        %v2352 = vrot.slane %v2350, 4
        %v2353 = vsel %vm2056, %v2351, %v2352
        %v2354 = vsel %vm2058, %v2348, %v2353
        %v2355 = vsel %vm2058, %v2350, %v2352
        %2358 = vst [vmem:[#allocation4 + $0xe4] sm:$0xff] %v2354
        %2359 = vst [vmem:[#allocation4 + $0xec] sm:$0xf] %v2355
        %v2360 = vld [vmem:[%s2338] sm:$0xff]
        %v2361 = vld [vmem:[%s2338 + $0x8] sm:$0xff]
        %2364 = vrot.lane.b32.xlu0 %v2360, 126
        %v2365 = vpop.permute.xlu0 %2364
        %2366 = vrot.lane.b32.xlu0 %v2361, 126
        %v2367 = vpop.permute.xlu0 %2366
        %v2368 = vrot.slane %v2365, 4
        %v2369 = vrot.slane %v2367, 4
        %v2370 = vsel %vm2056, %v2368, %v2369
        %v2371 = vsel %vm2076, %v2365, %v2370
        %v2372 = vsel %vm2076, %v2367, %v2369
        %2375 = vst [vmem:[#allocation4 + $0xf0] sm:$0xff] %v2371
        %2376 = vst [vmem:[#allocation4 + $0xf8] sm:$0xf] %v2372
        %v2377 = vld [vmem:[%s2338] sm:$0xff]
        %v2378 = vld [vmem:[%s2338 + $0x8] sm:$0xff]
        %2381 = vrot.lane.b32.xlu0 %v2377, 104
        %v2382 = vpop.permute.xlu0 %2381
        %2383 = vrot.lane.b32.xlu0 %v2378, 104
        %v2384 = vpop.permute.xlu0 %2383
        %v2385 = vrot.slane %v2382, 4
        %v2386 = vrot.slane %v2384, 4
        %v2387 = vsel %vm2056, %v2385, %v2386
        %v2388 = vsel %vm2094, %v2382, %v2387
        %v2389 = vsel %vm2094, %v2384, %v2386
        %2392 = vst [vmem:[#allocation4 + $0xfc] sm:$0xff] %v2388
        %2393 = vst [vmem:[#allocation4 + $0x104] sm:$0xf] %v2389
        %v2394 = vld [vmem:[%s2338] sm:$0xff]
        %v2395 = vld [vmem:[%s2338 + $0x8] sm:$0xff]
        %2398 = vrot.lane.b32.xlu0 %v2394, 103
        %v2399 = vpop.permute.xlu0 %2398
        %2400 = vrot.lane.b32.xlu0 %v2395, 103
        %v2401 = vpop.permute.xlu0 %2400
        %v2402 = vrot.slane %v2399, 4
        %v2403 = vrot.slane %v2401, 4
        %v2404 = vsel %vm2056, %v2402, %v2403
        %v2405 = vsel %vm2112, %v2399, %v2404
        %v2406 = vsel %vm2112, %v2401, %v2403
        %2409 = vst [vmem:[#allocation4 + $0x108] sm:$0xff] %v2405
        %2410 = vst [vmem:[#allocation4 + $0x110] sm:$0xf] %v2406
        %v2411 = vld [vmem:[%s2338] sm:$0xff]
        %v2412 = vld [vmem:[%s2338 + $0x8] sm:$0xff]
        %2415 = vrot.lane.b32.xlu0 %v2411, 102
        %v2416 = vpop.permute.xlu0 %2415
        %2417 = vrot.lane.b32.xlu0 %v2412, 102
        %v2418 = vpop.permute.xlu0 %2417
        %v2419 = vrot.slane %v2416, 4
        %v2420 = vrot.slane %v2418, 4
        %v2421 = vsel %vm2056, %v2419, %v2420
        %v2422 = vsel %vm2130, %v2416, %v2421
        %v2423 = vsel %vm2130, %v2418, %v2420
        %2426 = vst [vmem:[#allocation4 + $0x114] sm:$0xff] %v2422
        %2427 = vst [vmem:[#allocation4 + $0x11c] sm:$0xf] %v2423
        %v2428 = vld [vmem:[%s2338] sm:$0xff]
        %v2429 = vld [vmem:[%s2338 + $0x8] sm:$0xff]
        %2432 = vrot.lane.b32.xlu0 %v2428, 80
        %v2433 = vpop.permute.xlu0 %2432
        %2434 = vrot.lane.b32.xlu0 %v2429, 80
        %v2435 = vpop.permute.xlu0 %2434
        %v2436 = vrot.slane %v2433, 4
        %v2437 = vrot.slane %v2435, 4
        %v2438 = vsel %vm2056, %v2436, %v2437
        %v2439 = vsel %vm2148, %v2433, %v2438
        %v2440 = vsel %vm2148, %v2435, %v2437
        %2443 = vst [vmem:[#allocation4 + $0x120] sm:$0xff] %v2439
        %2444 = vst [vmem:[#allocation4 + $0x128] sm:$0xf] %v2440
        %v2445 = vld [vmem:[%s2338] sm:$0xff]
        %v2446 = vld [vmem:[%s2338 + $0x8] sm:$0xff]
        %2449 = vrot.lane.b32.xlu0 %v2445, 79
        %v2450 = vpop.permute.xlu0 %2449
        %2451 = vrot.lane.b32.xlu0 %v2446, 79
        %v2452 = vpop.permute.xlu0 %2451
        %v2453 = vrot.slane %v2450, 4
        %v2454 = vrot.slane %v2452, 4
        %v2455 = vsel %vm2056, %v2453, %v2454
        %v2456 = vsel %vm2166, %v2450, %v2455
        %v2457 = vsel %vm2166, %v2452, %v2454
        %2460 = vst [vmem:[#allocation4 + $0x12c] sm:$0xff] %v2456
        %2461 = vst [vmem:[#allocation4 + $0x134] sm:$0xf] %v2457
        %v2462 = vld [vmem:[%s2338] sm:$0xff]
        %v2463 = vld [vmem:[%s2338 + $0x8] sm:$0xff]
        %2466 = vrot.lane.b32.xlu0 %v2462, 78
        %v2467 = vpop.permute.xlu0 %2466
        %2468 = vrot.lane.b32.xlu0 %v2463, 78
        %v2469 = vpop.permute.xlu0 %2468
        %v2470 = vrot.slane %v2467, 4
        %v2471 = vrot.slane %v2469, 4
        %v2472 = vsel %vm2056, %v2470, %v2471
        %v2473 = vsel %vm2184, %v2467, %v2472
        %v2474 = vsel %vm2184, %v2469, %v2471
        %2477 = vst [vmem:[#allocation4 + $0x138] sm:$0xff] %v2473
        %2478 = vst [vmem:[#allocation4 + $0x140] sm:$0xf] %v2474
        %s2479 = smul.addr %s2039, 4
        %s2480 = scalar_lea.vmem [#allocation3], %s2479
        %v2481 = vld [vmem:[%s2480] sm:$0xff]
        %v2482 = vld [vmem:[%s2480 + $0x8] sm:$0xf]
        %2483 = vst [vmem:[#allocation4 + $0x144] sm:$0xff] %v2481
        %2484 = vst [vmem:[#allocation4 + $0x14c] sm:$0xf] %v2482
        %v2485 = vld [vmem:[%s2480] sm:$0xff]
        %v2486 = vld [vmem:[%s2480 + $0x8] sm:$0xff]
        %2489 = vrot.lane.b32.xlu0 %v2485, 127
        %v2490 = vpop.permute.xlu0 %2489
        %2491 = vrot.lane.b32.xlu0 %v2486, 127
        %v2492 = vpop.permute.xlu0 %2491
        %v2493 = vrot.slane %v2490, 4
        %v2494 = vrot.slane %v2492, 4
        %v2495 = vsel %vm2056, %v2493, %v2494
        %v2496 = vsel %vm2058, %v2490, %v2495
        %v2497 = vsel %vm2058, %v2492, %v2494
        %2500 = vst [vmem:[#allocation4 + $0x150] sm:$0xff] %v2496
        %2501 = vst [vmem:[#allocation4 + $0x158] sm:$0xf] %v2497
        %v2502 = vld [vmem:[%s2480] sm:$0xff]
        %v2503 = vld [vmem:[%s2480 + $0x8] sm:$0xff]
        %2506 = vrot.lane.b32.xlu0 %v2502, 126
        %v2507 = vpop.permute.xlu0 %2506
        %2508 = vrot.lane.b32.xlu0 %v2503, 126
        %v2509 = vpop.permute.xlu0 %2508
        %v2510 = vrot.slane %v2507, 4
        %v2511 = vrot.slane %v2509, 4
        %v2512 = vsel %vm2056, %v2510, %v2511
        %v2513 = vsel %vm2076, %v2507, %v2512
        %v2514 = vsel %vm2076, %v2509, %v2511
        %2517 = vst [vmem:[#allocation4 + $0x15c] sm:$0xff] %v2513
        %2518 = vst [vmem:[#allocation4 + $0x164] sm:$0xf] %v2514
        %v2519 = vld [vmem:[%s2480] sm:$0xff]
        %v2520 = vld [vmem:[%s2480 + $0x8] sm:$0xff]
        %2523 = vrot.lane.b32.xlu0 %v2519, 104
        %v2524 = vpop.permute.xlu0 %2523
        %2525 = vrot.lane.b32.xlu0 %v2520, 104
        %v2526 = vpop.permute.xlu0 %2525
        %v2527 = vrot.slane %v2524, 4
        %v2528 = vrot.slane %v2526, 4
        %v2529 = vsel %vm2056, %v2527, %v2528
        %v2530 = vsel %vm2094, %v2524, %v2529
        %v2531 = vsel %vm2094, %v2526, %v2528
        %2534 = vst [vmem:[#allocation4 + $0x168] sm:$0xff] %v2530
        %2535 = vst [vmem:[#allocation4 + $0x170] sm:$0xf] %v2531
        %v2536 = vld [vmem:[%s2480] sm:$0xff]
        %v2537 = vld [vmem:[%s2480 + $0x8] sm:$0xff]
        %2540 = vrot.lane.b32.xlu0 %v2536, 103
        %v2541 = vpop.permute.xlu0 %2540
        %2542 = vrot.lane.b32.xlu0 %v2537, 103
        %v2543 = vpop.permute.xlu0 %2542
        %v2544 = vrot.slane %v2541, 4
        %v2545 = vrot.slane %v2543, 4
        %v2546 = vsel %vm2056, %v2544, %v2545
        %v2547 = vsel %vm2112, %v2541, %v2546
        %v2548 = vsel %vm2112, %v2543, %v2545
        %2551 = vst [vmem:[#allocation4 + $0x174] sm:$0xff] %v2547
        %2552 = vst [vmem:[#allocation4 + $0x17c] sm:$0xf] %v2548
        %v2553 = vld [vmem:[%s2480] sm:$0xff]
        %v2554 = vld [vmem:[%s2480 + $0x8] sm:$0xff]
        %2557 = vrot.lane.b32.xlu0 %v2553, 102
        %v2558 = vpop.permute.xlu0 %2557
        %2559 = vrot.lane.b32.xlu0 %v2554, 102
        %v2560 = vpop.permute.xlu0 %2559
        %v2561 = vrot.slane %v2558, 4
        %v2562 = vrot.slane %v2560, 4
        %v2563 = vsel %vm2056, %v2561, %v2562
        %v2564 = vsel %vm2130, %v2558, %v2563
        %v2565 = vsel %vm2130, %v2560, %v2562
        %2568 = vst [vmem:[#allocation4 + $0x180] sm:$0xff] %v2564
        %2569 = vst [vmem:[#allocation4 + $0x188] sm:$0xf] %v2565
        %v2570 = vld [vmem:[%s2480] sm:$0xff]
        %v2571 = vld [vmem:[%s2480 + $0x8] sm:$0xff]
        %2574 = vrot.lane.b32.xlu0 %v2570, 80
        %v2575 = vpop.permute.xlu0 %2574
        %2576 = vrot.lane.b32.xlu0 %v2571, 80
        %v2577 = vpop.permute.xlu0 %2576
        %v2578 = vrot.slane %v2575, 4
        %v2579 = vrot.slane %v2577, 4
        %v2580 = vsel %vm2056, %v2578, %v2579
        %v2581 = vsel %vm2148, %v2575, %v2580
        %v2582 = vsel %vm2148, %v2577, %v2579
        %2585 = vst [vmem:[#allocation4 + $0x18c] sm:$0xff] %v2581
        %2586 = vst [vmem:[#allocation4 + $0x194] sm:$0xf] %v2582
        %v2587 = vld [vmem:[%s2480] sm:$0xff]
        %v2588 = vld [vmem:[%s2480 + $0x8] sm:$0xff]
        %2591 = vrot.lane.b32.xlu0 %v2587, 79
        %v2592 = vpop.permute.xlu0 %2591
        %2593 = vrot.lane.b32.xlu0 %v2588, 79
        %v2594 = vpop.permute.xlu0 %2593
        %v2595 = vrot.slane %v2592, 4
        %v2596 = vrot.slane %v2594, 4
        %v2597 = vsel %vm2056, %v2595, %v2596
        %v2598 = vsel %vm2166, %v2592, %v2597
        %v2599 = vsel %vm2166, %v2594, %v2596
        %2602 = vst [vmem:[#allocation4 + $0x198] sm:$0xff] %v2598
        %2603 = vst [vmem:[#allocation4 + $0x1a0] sm:$0xf] %v2599
        %v2604 = vld [vmem:[%s2480] sm:$0xff]
        %v2605 = vld [vmem:[%s2480 + $0x8] sm:$0xff]
        %2608 = vrot.lane.b32.xlu0 %v2604, 78
        %v2609 = vpop.permute.xlu0 %2608
        %2610 = vrot.lane.b32.xlu0 %v2605, 78
        %v2611 = vpop.permute.xlu0 %2610
        %v2612 = vrot.slane %v2609, 4
        %v2613 = vrot.slane %v2611, 4
        %v2614 = vsel %vm2056, %v2612, %v2613
        %v2615 = vsel %vm2184, %v2609, %v2614
        %v2616 = vsel %vm2184, %v2611, %v2613
        %2619 = vst [vmem:[#allocation4 + $0x1a4] sm:$0xff] %v2615
        %2620 = vst [vmem:[#allocation4 + $0x1ac] sm:$0xf] %v2616
        %s2621 = smul.addr %s2192, 4
        %s2622 = scalar_lea.vmem [#allocation3], %s2621
        %v2623 = vld [vmem:[%s2622] sm:$0xff]
        %v2624 = vld [vmem:[%s2622 + $0x8] sm:$0xf]
        %2625 = vst [vmem:[#allocation4 + $0x1b0] sm:$0xff] %v2623
        %2626 = vst [vmem:[#allocation4 + $0x1b8] sm:$0xf] %v2624
        %v2627 = vld [vmem:[%s2622] sm:$0xff]
        %v2628 = vld [vmem:[%s2622 + $0x8] sm:$0xff]
        %2631 = vrot.lane.b32.xlu0 %v2627, 127
        %v2632 = vpop.permute.xlu0 %2631
        %2633 = vrot.lane.b32.xlu0 %v2628, 127
        %v2634 = vpop.permute.xlu0 %2633
        %v2635 = vrot.slane %v2632, 4
        %v2636 = vrot.slane %v2634, 4
        %v2637 = vsel %vm2056, %v2635, %v2636
        %v2638 = vsel %vm2058, %v2632, %v2637
        %v2639 = vsel %vm2058, %v2634, %v2636
        %2642 = vst [vmem:[#allocation4 + $0x1bc] sm:$0xff] %v2638
        %2643 = vst [vmem:[#allocation4 + $0x1c4] sm:$0xf] %v2639
        %v2644 = vld [vmem:[%s2622] sm:$0xff]
        %v2645 = vld [vmem:[%s2622 + $0x8] sm:$0xff]
        %2648 = vrot.lane.b32.xlu0 %v2644, 126
        %v2649 = vpop.permute.xlu0 %2648
        %2650 = vrot.lane.b32.xlu0 %v2645, 126
        %v2651 = vpop.permute.xlu0 %2650
        %v2652 = vrot.slane %v2649, 4
        %v2653 = vrot.slane %v2651, 4
        %v2654 = vsel %vm2056, %v2652, %v2653
        %v2655 = vsel %vm2076, %v2649, %v2654
        %v2656 = vsel %vm2076, %v2651, %v2653
        %2659 = vst [vmem:[#allocation4 + $0x1c8] sm:$0xff] %v2655
        %2660 = vst [vmem:[#allocation4 + $0x1d0] sm:$0xf] %v2656
        %v2661 = vld [vmem:[%s2622] sm:$0xff]
        %v2662 = vld [vmem:[%s2622 + $0x8] sm:$0xff]
        %2665 = vrot.lane.b32.xlu0 %v2661, 104
        %v2666 = vpop.permute.xlu0 %2665
        %2667 = vrot.lane.b32.xlu0 %v2662, 104
        %v2668 = vpop.permute.xlu0 %2667
        %v2669 = vrot.slane %v2666, 4
        %v2670 = vrot.slane %v2668, 4
        %v2671 = vsel %vm2056, %v2669, %v2670
        %v2672 = vsel %vm2094, %v2666, %v2671
        %v2673 = vsel %vm2094, %v2668, %v2670
        %2676 = vst [vmem:[#allocation4 + $0x1d4] sm:$0xff] %v2672
        %2677 = vst [vmem:[#allocation4 + $0x1dc] sm:$0xf] %v2673
        %v2678 = vld [vmem:[%s2622] sm:$0xff]
        %v2679 = vld [vmem:[%s2622 + $0x8] sm:$0xff]
        %2682 = vrot.lane.b32.xlu0 %v2678, 103
        %v2683 = vpop.permute.xlu0 %2682
        %2684 = vrot.lane.b32.xlu0 %v2679, 103
        %v2685 = vpop.permute.xlu0 %2684
        %v2686 = vrot.slane %v2683, 4
        %v2687 = vrot.slane %v2685, 4
        %v2688 = vsel %vm2056, %v2686, %v2687
        %v2689 = vsel %vm2112, %v2683, %v2688
        %v2690 = vsel %vm2112, %v2685, %v2687
        %2693 = vst [vmem:[#allocation4 + $0x1e0] sm:$0xff] %v2689
        %2694 = vst [vmem:[#allocation4 + $0x1e8] sm:$0xf] %v2690
        %v2695 = vld [vmem:[%s2622] sm:$0xff]
        %v2696 = vld [vmem:[%s2622 + $0x8] sm:$0xff]
        %2699 = vrot.lane.b32.xlu0 %v2695, 102
        %v2700 = vpop.permute.xlu0 %2699
        %2701 = vrot.lane.b32.xlu0 %v2696, 102
        %v2702 = vpop.permute.xlu0 %2701
        %v2703 = vrot.slane %v2700, 4
        %v2704 = vrot.slane %v2702, 4
        %v2705 = vsel %vm2056, %v2703, %v2704
        %v2706 = vsel %vm2130, %v2700, %v2705
        %v2707 = vsel %vm2130, %v2702, %v2704
        %2710 = vst [vmem:[#allocation4 + $0x1ec] sm:$0xff] %v2706
        %2711 = vst [vmem:[#allocation4 + $0x1f4] sm:$0xf] %v2707
        %v2712 = vld [vmem:[%s2622] sm:$0xff]
        %v2713 = vld [vmem:[%s2622 + $0x8] sm:$0xff]
        %2716 = vrot.lane.b32.xlu0 %v2712, 80
        %v2717 = vpop.permute.xlu0 %2716
        %2718 = vrot.lane.b32.xlu0 %v2713, 80
        %v2719 = vpop.permute.xlu0 %2718
        %v2720 = vrot.slane %v2717, 4
        %v2721 = vrot.slane %v2719, 4
        %v2722 = vsel %vm2056, %v2720, %v2721
        %v2723 = vsel %vm2148, %v2717, %v2722
        %v2724 = vsel %vm2148, %v2719, %v2721
        %2727 = vst [vmem:[#allocation4 + $0x1f8] sm:$0xff] %v2723
        %2728 = vst [vmem:[#allocation4 + $0x200] sm:$0xf] %v2724
        %v2729 = vld [vmem:[%s2622] sm:$0xff]
        %v2730 = vld [vmem:[%s2622 + $0x8] sm:$0xff]
        %2733 = vrot.lane.b32.xlu0 %v2729, 79
        %v2734 = vpop.permute.xlu0 %2733
        %2735 = vrot.lane.b32.xlu0 %v2730, 79
        %v2736 = vpop.permute.xlu0 %2735
        %v2737 = vrot.slane %v2734, 4
        %v2738 = vrot.slane %v2736, 4
        %v2739 = vsel %vm2056, %v2737, %v2738
        %v2740 = vsel %vm2166, %v2734, %v2739
        %v2741 = vsel %vm2166, %v2736, %v2738
        %2744 = vst [vmem:[#allocation4 + $0x204] sm:$0xff] %v2740
        %2745 = vst [vmem:[#allocation4 + $0x20c] sm:$0xf] %v2741
        %v2746 = vld [vmem:[%s2622] sm:$0xff]
        %v2747 = vld [vmem:[%s2622 + $0x8] sm:$0xff]
        %2750 = vrot.lane.b32.xlu0 %v2746, 78
        %v2751 = vpop.permute.xlu0 %2750
        %2752 = vrot.lane.b32.xlu0 %v2747, 78
        %v2753 = vpop.permute.xlu0 %2752
        %v2754 = vrot.slane %v2751, 4
        %v2755 = vrot.slane %v2753, 4
        %v2756 = vsel %vm2056, %v2754, %v2755
        %v2757 = vsel %vm2184, %v2751, %v2756
        %v2758 = vsel %vm2184, %v2753, %v2755
        %2761 = vst [vmem:[#allocation4 + $0x210] sm:$0xff] %v2757
        %2762 = vst [vmem:[#allocation4 + $0x218] sm:$0xf] %v2758
        %s2763 = smul.addr %s2336, 4
        %s2764 = scalar_lea.vmem [#allocation3], %s2763
        %v2765 = vld [vmem:[%s2764] sm:$0xff]
        %v2766 = vld [vmem:[%s2764 + $0x8] sm:$0xf]
        %2767 = vst [vmem:[#allocation4 + $0x21c] sm:$0xff] %v2765
        %2768 = vst [vmem:[#allocation4 + $0x224] sm:$0xf] %v2766
        %v2769 = vld [vmem:[%s2764] sm:$0xff]
        %v2770 = vld [vmem:[%s2764 + $0x8] sm:$0xff]
        %2773 = vrot.lane.b32.xlu0 %v2769, 127
        %v2774 = vpop.permute.xlu0 %2773
        %2775 = vrot.lane.b32.xlu0 %v2770, 127
        %v2776 = vpop.permute.xlu0 %2775
        %v2777 = vrot.slane %v2774, 4
        %v2778 = vrot.slane %v2776, 4
        %v2779 = vsel %vm2056, %v2777, %v2778
        %v2780 = vsel %vm2058, %v2774, %v2779
        %v2781 = vsel %vm2058, %v2776, %v2778
        %2784 = vst [vmem:[#allocation4 + $0x228] sm:$0xff] %v2780
        %2785 = vst [vmem:[#allocation4 + $0x230] sm:$0xf] %v2781
        %v2786 = vld [vmem:[%s2764] sm:$0xff]
        %v2787 = vld [vmem:[%s2764 + $0x8] sm:$0xff]
        %2790 = vrot.lane.b32.xlu0 %v2786, 126
        %v2791 = vpop.permute.xlu0 %2790
        %2792 = vrot.lane.b32.xlu0 %v2787, 126
        %v2793 = vpop.permute.xlu0 %2792
        %v2794 = vrot.slane %v2791, 4
        %v2795 = vrot.slane %v2793, 4
        %v2796 = vsel %vm2056, %v2794, %v2795
        %v2797 = vsel %vm2076, %v2791, %v2796
        %v2798 = vsel %vm2076, %v2793, %v2795
        %2801 = vst [vmem:[#allocation4 + $0x234] sm:$0xff] %v2797
        %2802 = vst [vmem:[#allocation4 + $0x23c] sm:$0xf] %v2798
        %v2803 = vld [vmem:[%s2764] sm:$0xff]
        %v2804 = vld [vmem:[%s2764 + $0x8] sm:$0xff]
        %2807 = vrot.lane.b32.xlu0 %v2803, 104
        %v2808 = vpop.permute.xlu0 %2807
        %2809 = vrot.lane.b32.xlu0 %v2804, 104
        %v2810 = vpop.permute.xlu0 %2809
        %v2811 = vrot.slane %v2808, 4
        %v2812 = vrot.slane %v2810, 4
        %v2813 = vsel %vm2056, %v2811, %v2812
        %v2814 = vsel %vm2094, %v2808, %v2813
        %v2815 = vsel %vm2094, %v2810, %v2812
        %2818 = vst [vmem:[#allocation4 + $0x240] sm:$0xff] %v2814
        %2819 = vst [vmem:[#allocation4 + $0x248] sm:$0xf] %v2815
        %v2820 = vld [vmem:[%s2764] sm:$0xff]
        %v2821 = vld [vmem:[%s2764 + $0x8] sm:$0xff]
        %2824 = vrot.lane.b32.xlu0 %v2820, 103
        %v2825 = vpop.permute.xlu0 %2824
        %2826 = vrot.lane.b32.xlu0 %v2821, 103
        %v2827 = vpop.permute.xlu0 %2826
        %v2828 = vrot.slane %v2825, 4
        %v2829 = vrot.slane %v2827, 4
        %v2830 = vsel %vm2056, %v2828, %v2829
        %v2831 = vsel %vm2112, %v2825, %v2830
        %v2832 = vsel %vm2112, %v2827, %v2829
        %2835 = vst [vmem:[#allocation4 + $0x24c] sm:$0xff] %v2831
        %2836 = vst [vmem:[#allocation4 + $0x254] sm:$0xf] %v2832
        %v2837 = vld [vmem:[%s2764] sm:$0xff]
        %v2838 = vld [vmem:[%s2764 + $0x8] sm:$0xff]
        %2841 = vrot.lane.b32.xlu0 %v2837, 102
        %v2842 = vpop.permute.xlu0 %2841
        %2843 = vrot.lane.b32.xlu0 %v2838, 102
        %v2844 = vpop.permute.xlu0 %2843
        %v2845 = vrot.slane %v2842, 4
        %v2846 = vrot.slane %v2844, 4
        %v2847 = vsel %vm2056, %v2845, %v2846
        %v2848 = vsel %vm2130, %v2842, %v2847
        %v2849 = vsel %vm2130, %v2844, %v2846
        %2852 = vst [vmem:[#allocation4 + $0x258] sm:$0xff] %v2848
        %2853 = vst [vmem:[#allocation4 + $0x260] sm:$0xf] %v2849
        %v2854 = vld [vmem:[%s2764] sm:$0xff]
        %v2855 = vld [vmem:[%s2764 + $0x8] sm:$0xff]
        %2858 = vrot.lane.b32.xlu0 %v2854, 80
        %v2859 = vpop.permute.xlu0 %2858
        %2860 = vrot.lane.b32.xlu0 %v2855, 80
        %v2861 = vpop.permute.xlu0 %2860
        %v2862 = vrot.slane %v2859, 4
        %v2863 = vrot.slane %v2861, 4
        %v2864 = vsel %vm2056, %v2862, %v2863
        %v2865 = vsel %vm2148, %v2859, %v2864
        %v2866 = vsel %vm2148, %v2861, %v2863
        %2869 = vst [vmem:[#allocation4 + $0x264] sm:$0xff] %v2865
        %2870 = vst [vmem:[#allocation4 + $0x26c] sm:$0xf] %v2866
        %v2871 = vld [vmem:[%s2764] sm:$0xff]
        %v2872 = vld [vmem:[%s2764 + $0x8] sm:$0xff]
        %2875 = vrot.lane.b32.xlu0 %v2871, 79
        %v2876 = vpop.permute.xlu0 %2875
        %2877 = vrot.lane.b32.xlu0 %v2872, 79
        %v2878 = vpop.permute.xlu0 %2877
        %v2879 = vrot.slane %v2876, 4
        %v2880 = vrot.slane %v2878, 4
        %v2881 = vsel %vm2056, %v2879, %v2880
        %v2882 = vsel %vm2166, %v2876, %v2881
        %v2883 = vsel %vm2166, %v2878, %v2880
        %2886 = vst [vmem:[#allocation4 + $0x270] sm:$0xff] %v2882
        %2887 = vst [vmem:[#allocation4 + $0x278] sm:$0xf] %v2883
        %v2888 = vld [vmem:[%s2764] sm:$0xff]
        %v2889 = vld [vmem:[%s2764 + $0x8] sm:$0xff]
        %2892 = vrot.lane.b32.xlu0 %v2888, 78
        %v2893 = vpop.permute.xlu0 %2892
        %2894 = vrot.lane.b32.xlu0 %v2889, 78
        %v2895 = vpop.permute.xlu0 %2894
        %v2896 = vrot.slane %v2893, 4
        %v2897 = vrot.slane %v2895, 4
        %v2898 = vsel %vm2056, %v2896, %v2897
        %v2899 = vsel %vm2184, %v2893, %v2898
        %v2900 = vsel %vm2184, %v2895, %v2897
        %2903 = vst [vmem:[#allocation4 + $0x27c] sm:$0xff] %v2899
        %2904 = vst [vmem:[#allocation4 + $0x284] sm:$0xf] %v2900
        %v2905 = vld [vmem:[%s6] sm:$0xff]
        %v2906 = vld [vmem:[%s6 + $0x8] sm:$0xff]
        %v2907 = vld [vmem:[#allocation4] sm:$0xff]
        %v2908 = vld [vmem:[#allocation4 + $0x8] sm:$0xf]
        %v2909 = vld [vmem:[#allocation4 + $0xc] sm:$0xff]
        %v2910 = vld [vmem:[#allocation4 + $0x14] sm:$0xf]
        %v2911 = vld [vmem:[#allocation4 + $0x18] sm:$0xff]
        %v2912 = vld [vmem:[#allocation4 + $0x20] sm:$0xf]
        %v2913 = vld [vmem:[#allocation4 + $0x24] sm:$0xff]
        %v2914 = vld [vmem:[#allocation4 + $0x2c] sm:$0xf]
        %v2915 = vld [vmem:[#allocation4 + $0x30] sm:$0xff]
        %v2916 = vld [vmem:[#allocation4 + $0x38] sm:$0xf]
        %v2917 = vld [vmem:[#allocation4 + $0x3c] sm:$0xff]
        %v2918 = vld [vmem:[#allocation4 + $0x44] sm:$0xf]
        %v2919 = vld [vmem:[#allocation4 + $0x48] sm:$0xff]
        %v2920 = vld [vmem:[#allocation4 + $0x50] sm:$0xf]
        %v2921 = vld [vmem:[#allocation4 + $0x54] sm:$0xff]
        %v2922 = vld [vmem:[#allocation4 + $0x5c] sm:$0xf]
        %v2923 = vld [vmem:[#allocation4 + $0x60] sm:$0xff]
        %v2924 = vld [vmem:[#allocation4 + $0x68] sm:$0xf]
        %v2925 = vld [vmem:[#allocation4 + $0x6c] sm:$0xff]
        %v2926 = vld [vmem:[#allocation4 + $0x74] sm:$0xf]
        %v2927 = vld [vmem:[#allocation4 + $0x78] sm:$0xff]
        %v2928 = vld [vmem:[#allocation4 + $0x80] sm:$0xf]
        %v2929 = vld [vmem:[#allocation4 + $0x84] sm:$0xff]
        %v2930 = vld [vmem:[#allocation4 + $0x8c] sm:$0xf]
        %v2931 = vld [vmem:[#allocation4 + $0x90] sm:$0xff]
        %v2932 = vld [vmem:[#allocation4 + $0x98] sm:$0xf]
        %v2933 = vld [vmem:[#allocation4 + $0x9c] sm:$0xff]
        %v2934 = vld [vmem:[#allocation4 + $0xa4] sm:$0xf]
        %v2935 = vld [vmem:[#allocation4 + $0xa8] sm:$0xff]
        %v2936 = vld [vmem:[#allocation4 + $0xb0] sm:$0xf]
        %v2937 = vld [vmem:[#allocation4 + $0xb4] sm:$0xff]
        %v2938 = vld [vmem:[#allocation4 + $0xbc] sm:$0xf]
        %v2939 = vld [vmem:[#allocation4 + $0xc0] sm:$0xff]
        %v2940 = vld [vmem:[#allocation4 + $0xc8] sm:$0xf]
        %v2941 = vld [vmem:[#allocation4 + $0xcc] sm:$0xff]
        %v2942 = vld [vmem:[#allocation4 + $0xd4] sm:$0xf]
        %v2943 = vld [vmem:[#allocation4 + $0xd8] sm:$0xff]
        %v2944 = vld [vmem:[#allocation4 + $0xe0] sm:$0xf]
        %v2945 = vld [vmem:[#allocation4 + $0xe4] sm:$0xff]
        %v2946 = vld [vmem:[#allocation4 + $0xec] sm:$0xf]
        %v2947 = vld [vmem:[#allocation4 + $0xf0] sm:$0xff]
        %v2948 = vld [vmem:[#allocation4 + $0xf8] sm:$0xf]
        %v2949 = vld [vmem:[#allocation4 + $0xfc] sm:$0xff]
        %v2950 = vld [vmem:[#allocation4 + $0x104] sm:$0xf]
        %v2951 = vld [vmem:[#allocation4 + $0x108] sm:$0xff]
        %v2952 = vld [vmem:[#allocation4 + $0x110] sm:$0xf]
        %v2953 = vld [vmem:[#allocation4 + $0x114] sm:$0xff]
        %v2954 = vld [vmem:[#allocation4 + $0x11c] sm:$0xf]
        %v2955 = vld [vmem:[#allocation4 + $0x120] sm:$0xff]
        %v2956 = vld [vmem:[#allocation4 + $0x128] sm:$0xf]
        %v2957 = vld [vmem:[#allocation4 + $0x12c] sm:$0xff]
        %v2958 = vld [vmem:[#allocation4 + $0x134] sm:$0xf]
        %v2959 = vld [vmem:[#allocation4 + $0x138] sm:$0xff]
        %v2960 = vld [vmem:[#allocation4 + $0x140] sm:$0xf]
        %v2961 = vld [vmem:[#allocation4 + $0x144] sm:$0xff]
        %v2962 = vld [vmem:[#allocation4 + $0x14c] sm:$0xf]
        %v2963 = vld [vmem:[#allocation4 + $0x150] sm:$0xff]
        %v2964 = vld [vmem:[#allocation4 + $0x158] sm:$0xf]
        %v2965 = vld [vmem:[#allocation4 + $0x15c] sm:$0xff]
        %v2966 = vld [vmem:[#allocation4 + $0x164] sm:$0xf]
        %v2967 = vld [vmem:[#allocation4 + $0x168] sm:$0xff]
        %v2968 = vld [vmem:[#allocation4 + $0x170] sm:$0xf]
        %v2969 = vld [vmem:[#allocation4 + $0x174] sm:$0xff]
        %v2970 = vld [vmem:[#allocation4 + $0x17c] sm:$0xf]
        %v2971 = vld [vmem:[#allocation4 + $0x180] sm:$0xff]
        %v2972 = vld [vmem:[#allocation4 + $0x188] sm:$0xf]
        %v2973 = vld [vmem:[#allocation4 + $0x18c] sm:$0xff]
        %v2974 = vld [vmem:[#allocation4 + $0x194] sm:$0xf]
        %v2975 = vld [vmem:[#allocation4 + $0x198] sm:$0xff]
        %v2976 = vld [vmem:[#allocation4 + $0x1a0] sm:$0xf]
        %v2977 = vld [vmem:[#allocation4 + $0x1a4] sm:$0xff]
        %v2978 = vld [vmem:[#allocation4 + $0x1ac] sm:$0xf]
        %v2979 = vld [vmem:[#allocation4 + $0x1b0] sm:$0xff]
        %v2980 = vld [vmem:[#allocation4 + $0x1b8] sm:$0xf]
        %v2981 = vld [vmem:[#allocation4 + $0x1bc] sm:$0xff]
        %v2982 = vld [vmem:[#allocation4 + $0x1c4] sm:$0xf]
        %v2983 = vld [vmem:[#allocation4 + $0x1c8] sm:$0xff]
        %v2984 = vld [vmem:[#allocation4 + $0x1d0] sm:$0xf]
        %v2985 = vld [vmem:[#allocation4 + $0x1d4] sm:$0xff]
        %v2986 = vld [vmem:[#allocation4 + $0x1dc] sm:$0xf]
        %v2987 = vld [vmem:[#allocation4 + $0x1e0] sm:$0xff]
        %v2988 = vld [vmem:[#allocation4 + $0x1e8] sm:$0xf]
        %v2989 = vld [vmem:[#allocation4 + $0x1ec] sm:$0xff]
        %v2990 = vld [vmem:[#allocation4 + $0x1f4] sm:$0xf]
        %v2991 = vld [vmem:[#allocation4 + $0x1f8] sm:$0xff]
        %v2992 = vld [vmem:[#allocation4 + $0x200] sm:$0xf]
        %v2993 = vld [vmem:[#allocation4 + $0x204] sm:$0xff]
        %v2994 = vld [vmem:[#allocation4 + $0x20c] sm:$0xf]
        %v2995 = vld [vmem:[#allocation4 + $0x210] sm:$0xff]
        %v2996 = vld [vmem:[#allocation4 + $0x218] sm:$0xf]
        %v2997 = vld [vmem:[#allocation4 + $0x21c] sm:$0xff]
        %v2998 = vld [vmem:[#allocation4 + $0x224] sm:$0xf]
        %v2999 = vld [vmem:[#allocation4 + $0x228] sm:$0xff]
        %v3000 = vld [vmem:[#allocation4 + $0x230] sm:$0xf]
        %v3001 = vld [vmem:[#allocation4 + $0x234] sm:$0xff]
        %v3002 = vld [vmem:[#allocation4 + $0x23c] sm:$0xf]
        %v3003 = vld [vmem:[#allocation4 + $0x240] sm:$0xff]
        %v3004 = vld [vmem:[#allocation4 + $0x248] sm:$0xf]
        %v3005 = vld [vmem:[#allocation4 + $0x24c] sm:$0xff]
        %v3006 = vld [vmem:[#allocation4 + $0x254] sm:$0xf]
        %v3007 = vld [vmem:[#allocation4 + $0x258] sm:$0xff]
        %v3008 = vld [vmem:[#allocation4 + $0x260] sm:$0xf]
        %v3009 = vld [vmem:[#allocation4 + $0x264] sm:$0xff]
        %v3010 = vld [vmem:[#allocation4 + $0x26c] sm:$0xf]
        %v3011 = vld [vmem:[#allocation4 + $0x270] sm:$0xff]
        %v3012 = vld [vmem:[#allocation4 + $0x278] sm:$0xf]
        %v3013 = vld [vmem:[#allocation4 + $0x27c] sm:$0xff]
        %v3014 = vld [vmem:[#allocation4 + $0x284] sm:$0xf]
        %v3017 = vunpack.c.l.b16 %v2905
        %v3018 = vunpack.c.h.b16 %v2905
        %v3019 = vunpack.c.l.b16 %v2906
        %v3020 = vunpack.c.h.b16 %v2906
        %v3021 = vpack.c.b16 %v3017, %v3017
        %v3022 = vpack.c.b16 %v3018, %v3018
        %v3023 = vpack.c.b16 %v3019, %v3019
        %v3024 = vpack.c.b16 %v3020, %v3020
        %v3136 = vunpack.c.l.b16 %v2907
        %v3137 = vunpack.c.h.b16 %v2907
        %v3138 = vunpack.c.l.b16 %v2908
        %v3139 = vunpack.c.l.b16 %v2909
        %v3140 = vunpack.c.h.b16 %v2909
        %v3141 = vunpack.c.l.b16 %v2910
        %v3142 = vunpack.c.l.b16 %v2911
        %v3143 = vunpack.c.h.b16 %v2911
        %v3144 = vunpack.c.l.b16 %v2912
        %v3145 = vunpack.c.l.b16 %v2913
        %v3146 = vunpack.c.h.b16 %v2913
        %v3147 = vunpack.c.l.b16 %v2914
        %v3148 = vunpack.c.l.b16 %v2915
        %v3149 = vunpack.c.h.b16 %v2915
        %v3150 = vunpack.c.l.b16 %v2916
        %v3151 = vunpack.c.l.b16 %v2917
        %v3152 = vunpack.c.h.b16 %v2917
        %v3153 = vunpack.c.l.b16 %v2918
        %v3154 = vunpack.c.l.b16 %v2919
        %v3155 = vunpack.c.h.b16 %v2919
        %v3156 = vunpack.c.l.b16 %v2920
        %v3157 = vunpack.c.l.b16 %v2921
        %v3158 = vunpack.c.h.b16 %v2921
        %v3159 = vunpack.c.l.b16 %v2922
        %v3160 = vunpack.c.l.b16 %v2923
        %v3161 = vunpack.c.h.b16 %v2923
        %v3162 = vunpack.c.l.b16 %v2924
        %v3163 = vunpack.c.l.b16 %v2925
        %v3164 = vunpack.c.h.b16 %v2925
        %v3165 = vunpack.c.l.b16 %v2926
        %v3166 = vunpack.c.l.b16 %v2927
        %v3167 = vunpack.c.h.b16 %v2927
        %v3168 = vunpack.c.l.b16 %v2928
        %v3169 = vunpack.c.l.b16 %v2929
        %v3170 = vunpack.c.h.b16 %v2929
        %v3171 = vunpack.c.l.b16 %v2930
        %v3172 = vunpack.c.l.b16 %v2931
        %v3173 = vunpack.c.h.b16 %v2931
        %v3174 = vunpack.c.l.b16 %v2932
        %v3175 = vunpack.c.l.b16 %v2933
        %v3176 = vunpack.c.h.b16 %v2933
        %v3177 = vunpack.c.l.b16 %v2934
        %v3178 = vunpack.c.l.b16 %v2935
        %v3179 = vunpack.c.h.b16 %v2935
        %v3180 = vunpack.c.l.b16 %v2936
        %v3181 = vunpack.c.l.b16 %v2937
        %v3182 = vunpack.c.h.b16 %v2937
        %v3183 = vunpack.c.l.b16 %v2938
        %v3184 = vunpack.c.l.b16 %v2939
        %v3185 = vunpack.c.h.b16 %v2939
        %v3186 = vunpack.c.l.b16 %v2940
        %v3187 = vunpack.c.l.b16 %v2941
        %v3188 = vunpack.c.h.b16 %v2941
        %v3189 = vunpack.c.l.b16 %v2942
        %v3190 = vunpack.c.l.b16 %v2943
        %v3191 = vunpack.c.h.b16 %v2943
        %v3192 = vunpack.c.l.b16 %v2944
        %v3193 = vunpack.c.l.b16 %v2945
        %v3194 = vunpack.c.h.b16 %v2945
        %v3195 = vunpack.c.l.b16 %v2946
        %v3196 = vunpack.c.l.b16 %v2947
        %v3197 = vunpack.c.h.b16 %v2947
        %v3198 = vunpack.c.l.b16 %v2948
        %v3199 = vunpack.c.l.b16 %v2949
        %v3200 = vunpack.c.h.b16 %v2949
        %v3201 = vunpack.c.l.b16 %v2950
        %v3202 = vunpack.c.l.b16 %v2951
        %v3203 = vunpack.c.h.b16 %v2951
        %v3204 = vunpack.c.l.b16 %v2952
        %v3205 = vunpack.c.l.b16 %v2953
        %v3206 = vunpack.c.h.b16 %v2953
        %v3207 = vunpack.c.l.b16 %v2954
        %v3208 = vunpack.c.l.b16 %v2955
        %v3209 = vunpack.c.h.b16 %v2955
        %v3210 = vunpack.c.l.b16 %v2956
        %v3211 = vunpack.c.l.b16 %v2957
        %v3212 = vunpack.c.h.b16 %v2957
        %v3213 = vunpack.c.l.b16 %v2958
        %v3214 = vunpack.c.l.b16 %v2959
        %v3215 = vunpack.c.h.b16 %v2959
        %v3216 = vunpack.c.l.b16 %v2960
        %v3217 = vunpack.c.l.b16 %v2961
        %v3218 = vunpack.c.h.b16 %v2961
        %v3219 = vunpack.c.l.b16 %v2962
        %v3220 = vunpack.c.l.b16 %v2963
        %v3221 = vunpack.c.h.b16 %v2963
        %v3222 = vunpack.c.l.b16 %v2964
        %v3223 = vunpack.c.l.b16 %v2965
        %v3224 = vunpack.c.h.b16 %v2965
        %v3225 = vunpack.c.l.b16 %v2966
        %v3226 = vunpack.c.l.b16 %v2967
        %v3227 = vunpack.c.h.b16 %v2967
        %v3228 = vunpack.c.l.b16 %v2968
        %v3229 = vunpack.c.l.b16 %v2969
        %v3230 = vunpack.c.h.b16 %v2969
        %v3231 = vunpack.c.l.b16 %v2970
        %v3232 = vunpack.c.l.b16 %v2971
        %v3233 = vunpack.c.h.b16 %v2971
        %v3234 = vunpack.c.l.b16 %v2972
        %v3235 = vunpack.c.l.b16 %v2973
        %v3236 = vunpack.c.h.b16 %v2973
        %v3237 = vunpack.c.l.b16 %v2974
        %v3238 = vunpack.c.l.b16 %v2975
        %v3239 = vunpack.c.h.b16 %v2975
        %v3240 = vunpack.c.l.b16 %v2976
        %v3241 = vunpack.c.l.b16 %v2977
        %v3242 = vunpack.c.h.b16 %v2977
        %v3243 = vunpack.c.l.b16 %v2978
        %v3244 = vunpack.c.l.b16 %v2979
        %v3245 = vunpack.c.h.b16 %v2979
        %v3246 = vunpack.c.l.b16 %v2980
        %v3247 = vunpack.c.l.b16 %v2981
        %v3248 = vunpack.c.h.b16 %v2981
        %v3249 = vunpack.c.l.b16 %v2982
        %v3250 = vunpack.c.l.b16 %v2983
        %v3251 = vunpack.c.h.b16 %v2983
        %v3252 = vunpack.c.l.b16 %v2984
        %v3253 = vunpack.c.l.b16 %v2985
        %v3254 = vunpack.c.h.b16 %v2985
        %v3255 = vunpack.c.l.b16 %v2986
        %v3256 = vunpack.c.l.b16 %v2987
        %v3257 = vunpack.c.h.b16 %v2987
        %v3258 = vunpack.c.l.b16 %v2988
        %v3259 = vunpack.c.l.b16 %v2989
        %v3260 = vunpack.c.h.b16 %v2989
        %v3261 = vunpack.c.l.b16 %v2990
        %v3262 = vunpack.c.l.b16 %v2991
        %v3263 = vunpack.c.h.b16 %v2991
        %v3264 = vunpack.c.l.b16 %v2992
        %v3265 = vunpack.c.l.b16 %v2993
        %v3266 = vunpack.c.h.b16 %v2993
        %v3267 = vunpack.c.l.b16 %v2994
        %v3268 = vunpack.c.l.b16 %v2995
        %v3269 = vunpack.c.h.b16 %v2995
        %v3270 = vunpack.c.l.b16 %v2996
        %v3271 = vunpack.c.l.b16 %v2997
        %v3272 = vunpack.c.h.b16 %v2997
        %v3273 = vunpack.c.l.b16 %v2998
        %v3274 = vunpack.c.l.b16 %v2999
        %v3275 = vunpack.c.h.b16 %v2999
        %v3276 = vunpack.c.l.b16 %v3000
        %v3277 = vunpack.c.l.b16 %v3001
        %v3278 = vunpack.c.h.b16 %v3001
        %v3279 = vunpack.c.l.b16 %v3002
        %v3280 = vunpack.c.l.b16 %v3003
        %v3281 = vunpack.c.h.b16 %v3003
        %v3282 = vunpack.c.l.b16 %v3004
        %v3283 = vunpack.c.l.b16 %v3005
        %v3284 = vunpack.c.h.b16 %v3005
        %v3285 = vunpack.c.l.b16 %v3006
        %v3286 = vunpack.c.l.b16 %v3007
        %v3287 = vunpack.c.h.b16 %v3007
        %v3288 = vunpack.c.l.b16 %v3008
        %v3289 = vunpack.c.l.b16 %v3009
        %v3290 = vunpack.c.h.b16 %v3009
        %v3291 = vunpack.c.l.b16 %v3010
        %v3292 = vunpack.c.l.b16 %v3011
        %v3293 = vunpack.c.h.b16 %v3011
        %v3294 = vunpack.c.l.b16 %v3012
        %v3295 = vunpack.c.l.b16 %v3013
        %v3296 = vunpack.c.h.b16 %v3013
        %v3297 = vunpack.c.l.b16 %v3014
        %v3298 = vpack.c.b16 %v3139, %v3136
        %v3299 = vpack.c.b16 %v3140, %v3137
        %v3300 = vpack.c.b16 %v3141, %v3138
        %v3301 = vpack.c.b16 %v3145, %v3142
        %v3302 = vpack.c.b16 %v3146, %v3143
        %v3303 = vpack.c.b16 %v3147, %v3144
        %v3304 = vpack.c.b16 %v3151, %v3148
        %v3305 = vpack.c.b16 %v3152, %v3149
        %v3306 = vpack.c.b16 %v3153, %v3150
        %v3307 = vpack.c.b16 %v3157, %v3154
        %v3308 = vpack.c.b16 %v3158, %v3155
        %v3309 = vpack.c.b16 %v3159, %v3156
        %v3310 = vpack.c.b16 %v3163, %v3160
        %v3311 = vpack.c.b16 %v3164, %v3161
        %v3312 = vpack.c.b16 %v3165, %v3162
        %v3313 = vpack.c.b16 %v3169, %v3166
        %v3314 = vpack.c.b16 %v3170, %v3167
        %v3315 = vpack.c.b16 %v3171, %v3168
        %v3316 = vpack.c.b16 %v3175, %v3172
        %v3317 = vpack.c.b16 %v3176, %v3173
        %v3318 = vpack.c.b16 %v3177, %v3174
        %v3319 = vpack.c.b16 %v3181, %v3178
        %v3320 = vpack.c.b16 %v3182, %v3179
        %v3321 = vpack.c.b16 %v3183, %v3180
        %v3322 = vpack.c.b16 %v3187, %v3184
        %v3323 = vpack.c.b16 %v3188, %v3185
        %v3324 = vpack.c.b16 %v3189, %v3186
        %v3325 = vpack.c.b16 %v3193, %v3190
        %v3326 = vpack.c.b16 %v3194, %v3191
        %v3327 = vpack.c.b16 %v3195, %v3192
        %v3328 = vpack.c.b16 %v3199, %v3196
        %v3329 = vpack.c.b16 %v3200, %v3197
        %v3330 = vpack.c.b16 %v3201, %v3198
        %v3331 = vpack.c.b16 %v3205, %v3202
        %v3332 = vpack.c.b16 %v3206, %v3203
        %v3333 = vpack.c.b16 %v3207, %v3204
        %v3334 = vpack.c.b16 %v3211, %v3208
        %v3335 = vpack.c.b16 %v3212, %v3209
        %v3336 = vpack.c.b16 %v3213, %v3210
        %v3337 = vpack.c.b16 %v3217, %v3214
        %v3338 = vpack.c.b16 %v3218, %v3215
        %v3339 = vpack.c.b16 %v3219, %v3216
        %v3340 = vpack.c.b16 %v3223, %v3220
        %v3341 = vpack.c.b16 %v3224, %v3221
        %v3342 = vpack.c.b16 %v3225, %v3222
        %v3343 = vpack.c.b16 %v3229, %v3226
        %v3344 = vpack.c.b16 %v3230, %v3227
        %v3345 = vpack.c.b16 %v3231, %v3228
        %v3346 = vpack.c.b16 %v3235, %v3232
        %v3347 = vpack.c.b16 %v3236, %v3233
        %v3348 = vpack.c.b16 %v3237, %v3234
        %v3349 = vpack.c.b16 %v3241, %v3238
        %v3350 = vpack.c.b16 %v3242, %v3239
        %v3351 = vpack.c.b16 %v3243, %v3240
        %v3352 = vpack.c.b16 %v3247, %v3244
        %v3353 = vpack.c.b16 %v3248, %v3245
        %v3354 = vpack.c.b16 %v3249, %v3246
        %v3355 = vpack.c.b16 %v3253, %v3250
        %v3356 = vpack.c.b16 %v3254, %v3251
        %v3357 = vpack.c.b16 %v3255, %v3252
        %v3358 = vpack.c.b16 %v3259, %v3256
        %v3359 = vpack.c.b16 %v3260, %v3257
        %v3360 = vpack.c.b16 %v3261, %v3258
        %v3361 = vpack.c.b16 %v3265, %v3262
        %v3362 = vpack.c.b16 %v3266, %v3263
        %v3363 = vpack.c.b16 %v3267, %v3264
        %v3364 = vpack.c.b16 %v3271, %v3268
        %v3365 = vpack.c.b16 %v3272, %v3269
        %v3366 = vpack.c.b16 %v3273, %v3270
        %v3367 = vpack.c.b16 %v3277, %v3274
        %v3368 = vpack.c.b16 %v3278, %v3275
        %v3369 = vpack.c.b16 %v3279, %v3276
        %v3370 = vpack.c.b16 %v3283, %v3280
        %v3371 = vpack.c.b16 %v3284, %v3281
        %v3372 = vpack.c.b16 %v3285, %v3282
        %v3373 = vpack.c.b16 %v3289, %v3286
        %v3374 = vpack.c.b16 %v3290, %v3287
        %v3375 = vpack.c.b16 %v3291, %v3288
        %v3376 = vpack.c.b16 %v3295, %v3292
        %v3377 = vpack.c.b16 %v3296, %v3293
        %v3378 = vpack.c.b16 %v3297, %v3294
        %vm3460 = vcmask 392192
        %v3462 = vsel %vm3460, %v3024, 0
        %3464 = vmatpush.bf16.msra.mxu0 %v3319
        %3465 = vmatpush.bf16.msra.mxu0 %v3316
        %3466 = vmatpush.bf16.msra.mxu0 %v3313
        %3467 = vmatpush.bf16.msra.mxu0 %v3310
        %3468 = vmatpush.bf16.msra.mxu0 %v3307
        %3469 = vmatpush.bf16.msra.mxu0 %v3304
        %3470 = vmatpush.bf16.msra.mxu0 %v3301
        %3471 = vmatpush.bf16.msra.mxu0 %v3298
        %3472 = vmatmul.bf16.gmra.mxu0 %v3021
        %v3473 = vpop.f32.mrf.mxu0
        %v3474 = vadd.f32 %v316, %v3473
        %v3475 = vpop.f32.mrf.mxu0
        %3476 = vdwg.mxu0
        %3477 = vmatpush.bf16.msra.mxu0 %v3343
        %3478 = vmatpush.bf16.msra.mxu0 %v3340
        %3479 = vmatpush.bf16.msra.mxu0 %v3337
        %3480 = vmatpush.bf16.msra.mxu0 %v3334
        %3481 = vmatpush.bf16.msra.mxu0 %v3331
        %3482 = vmatpush.bf16.msra.mxu0 %v3328
        %3483 = vmatpush.bf16.msra.mxu0 %v3325
        %3484 = vmatpush.bf16.msra.mxu0 %v3322
        %3485 = vmatmul.bf16.gmra.mxu0 %v3022
        %v3486 = vpop.f32.mrf.mxu0
        %v3487 = vadd.f32 %v3474, %v3486
        %v3488 = vpop.f32.mrf.mxu0
        %3489 = vdwg.mxu0
        %3490 = vmatpush.bf16.msra.mxu0 %v3367
        %3491 = vmatpush.bf16.msra.mxu0 %v3364
        %3492 = vmatpush.bf16.msra.mxu0 %v3361
        %3493 = vmatpush.bf16.msra.mxu0 %v3358
        %3494 = vmatpush.bf16.msra.mxu0 %v3355
        %3495 = vmatpush.bf16.msra.mxu0 %v3352
        %3496 = vmatpush.bf16.msra.mxu0 %v3349
        %3497 = vmatpush.bf16.msra.mxu0 %v3346
        %3498 = vmatmul.bf16.gmra.mxu0 %v3023
        %v3499 = vpop.f32.mrf.mxu0
        %v3500 = vadd.f32 %v3487, %v3499
        %v3501 = vpop.f32.mrf.mxu0
        %3502 = vdwg.mxu0
        %3503 = vmatpush.bf16.msra.mxu0 0
        %3504 = vmatpush.bf16.msra.mxu0 0
        %3505 = vmatpush.bf16.msra.mxu0 0
        %3506 = vmatpush.bf16.msra.mxu0 0
        %3507 = vmatpush.bf16.msra.mxu0 0
        %3508 = vmatpush.bf16.msra.mxu0 %v3376
        %3509 = vmatpush.bf16.msra.mxu0 %v3373
        %3510 = vmatpush.bf16.msra.mxu0 %v3370
        %3511 = vmatmul.bf16.gmra.mxu0 %v3462
        %v3512 = vpop.f32.mrf.mxu0
        %v3513 = vadd.f32 %v3500, %v3512
        %v3514 = vpop.f32.mrf.mxu0
        %3515 = vdwg.mxu0
        %3516 = vmatpush.bf16.msra.mxu0 %v3320
        %3517 = vmatpush.bf16.msra.mxu0 %v3317
        %3518 = vmatpush.bf16.msra.mxu0 %v3314
        %3519 = vmatpush.bf16.msra.mxu0 %v3311
        %3520 = vmatpush.bf16.msra.mxu0 %v3308
        %3521 = vmatpush.bf16.msra.mxu0 %v3305
        %3522 = vmatpush.bf16.msra.mxu0 %v3302
        %3523 = vmatpush.bf16.msra.mxu0 %v3299
        %3524 = vmatmul.bf16.gmra.mxu0 %v3021
        %v3525 = vpop.f32.mrf.mxu0
        %v3526 = vadd.f32 %v317, %v3525
        %v3527 = vpop.f32.mrf.mxu0
        %3528 = vdwg.mxu0
        %3529 = vmatpush.bf16.msra.mxu0 %v3344
        %3530 = vmatpush.bf16.msra.mxu0 %v3341
        %3531 = vmatpush.bf16.msra.mxu0 %v3338
        %3532 = vmatpush.bf16.msra.mxu0 %v3335
        %3533 = vmatpush.bf16.msra.mxu0 %v3332
        %3534 = vmatpush.bf16.msra.mxu0 %v3329
        %3535 = vmatpush.bf16.msra.mxu0 %v3326
        %3536 = vmatpush.bf16.msra.mxu0 %v3323
        %3537 = vmatmul.bf16.gmra.mxu0 %v3022
        %v3538 = vpop.f32.mrf.mxu0
        %v3539 = vadd.f32 %v3526, %v3538
        %v3540 = vpop.f32.mrf.mxu0
        %3541 = vdwg.mxu0
        %3542 = vmatpush.bf16.msra.mxu0 %v3368
        %3543 = vmatpush.bf16.msra.mxu0 %v3365
        %3544 = vmatpush.bf16.msra.mxu0 %v3362
        %3545 = vmatpush.bf16.msra.mxu0 %v3359
        %3546 = vmatpush.bf16.msra.mxu0 %v3356
        %3547 = vmatpush.bf16.msra.mxu0 %v3353
        %3548 = vmatpush.bf16.msra.mxu0 %v3350
        %3549 = vmatpush.bf16.msra.mxu0 %v3347
        %3550 = vmatmul.bf16.gmra.mxu0 %v3023
        %v3551 = vpop.f32.mrf.mxu0
        %v3552 = vadd.f32 %v3539, %v3551
        %v3553 = vpop.f32.mrf.mxu0
        %3554 = vdwg.mxu0
        %3555 = vmatpush.bf16.msra.mxu0 0
        %3556 = vmatpush.bf16.msra.mxu0 0
        %3557 = vmatpush.bf16.msra.mxu0 0
        %3558 = vmatpush.bf16.msra.mxu0 0
        %3559 = vmatpush.bf16.msra.mxu0 0
        %3560 = vmatpush.bf16.msra.mxu0 %v3377
        %3561 = vmatpush.bf16.msra.mxu0 %v3374
        %3562 = vmatpush.bf16.msra.mxu0 %v3371
        %3563 = vmatmul.bf16.gmra.mxu0 %v3462
        %v3564 = vpop.f32.mrf.mxu0
        %v3565 = vadd.f32 %v3552, %v3564
        %v3566 = vpop.f32.mrf.mxu0
        %3567 = vdwg.mxu0
        %3568 = vmatpush.bf16.msra.mxu0 %v3321
        %3569 = vmatpush.bf16.msra.mxu0 %v3318
        %3570 = vmatpush.bf16.msra.mxu0 %v3315
        %3571 = vmatpush.bf16.msra.mxu0 %v3312
        %3572 = vmatpush.bf16.msra.mxu0 %v3309
        %3573 = vmatpush.bf16.msra.mxu0 %v3306
        %3574 = vmatpush.bf16.msra.mxu0 %v3303
        %3575 = vmatpush.bf16.msra.mxu0 %v3300
        %3576 = vmatmul.bf16.gmra.mxu0 %v3021
        %v3577 = vpop.f32.mrf.mxu0
        %v3578 = vadd.f32 %v318, %v3577
        %v3579 = vpop.f32.mrf.mxu0
        %3580 = vdwg.mxu0
        %3581 = vmatpush.bf16.msra.mxu0 %v3345
        %3582 = vmatpush.bf16.msra.mxu0 %v3342
        %3583 = vmatpush.bf16.msra.mxu0 %v3339
        %3584 = vmatpush.bf16.msra.mxu0 %v3336
        %3585 = vmatpush.bf16.msra.mxu0 %v3333
        %3586 = vmatpush.bf16.msra.mxu0 %v3330
        %3587 = vmatpush.bf16.msra.mxu0 %v3327
        %3588 = vmatpush.bf16.msra.mxu0 %v3324
        %3589 = vmatmul.bf16.gmra.mxu0 %v3022
        %v3590 = vpop.f32.mrf.mxu0
        %v3591 = vadd.f32 %v3578, %v3590
        %v3592 = vpop.f32.mrf.mxu0
        %3593 = vdwg.mxu0
        %3594 = vmatpush.bf16.msra.mxu0 %v3369
        %3595 = vmatpush.bf16.msra.mxu0 %v3366
        %3596 = vmatpush.bf16.msra.mxu0 %v3363
        %3597 = vmatpush.bf16.msra.mxu0 %v3360
        %3598 = vmatpush.bf16.msra.mxu0 %v3357
        %3599 = vmatpush.bf16.msra.mxu0 %v3354
        %3600 = vmatpush.bf16.msra.mxu0 %v3351
        %3601 = vmatpush.bf16.msra.mxu0 %v3348
        %3602 = vmatmul.bf16.gmra.mxu0 %v3023
        %v3603 = vpop.f32.mrf.mxu0
        %v3604 = vadd.f32 %v3591, %v3603
        %v3605 = vpop.f32.mrf.mxu0
        %3606 = vdwg.mxu0
        %3607 = vmatpush.bf16.msra.mxu0 0
        %3608 = vmatpush.bf16.msra.mxu0 0
        %3609 = vmatpush.bf16.msra.mxu0 0
        %3610 = vmatpush.bf16.msra.mxu0 0
        %3611 = vmatpush.bf16.msra.mxu0 0
        %3612 = vmatpush.bf16.msra.mxu0 %v3378
        %3613 = vmatpush.bf16.msra.mxu0 %v3375
        %3614 = vmatpush.bf16.msra.mxu0 %v3372
        %3615 = vmatmul.bf16.gmra.mxu0 %v3462
        %v3616 = vpop.f32.mrf.mxu0
        %v3617 = vadd.f32 %v3604, %v3616
        %v3618 = vpop.f32.mrf.mxu0
        %3619 = vdwg.mxu0
        %vm3620 = vcmp.ge.f32.partialorder %v3513, 0.0
        %vm3621 = vcmp.ge.f32.partialorder %v3565, 0.0
        %vm3622 = vcmp.ge.f32.partialorder %v3617, 0.0
        %v3623 = vmul.f32 %v3513, 0.01
        %v3624 = vmul.f32 %v3565, 0.01
        %v3625 = vmul.f32 %v3617, 0.01
        %v3626 = vsel %vm3620, %v3513, %v3623
        %v3627 = vsel %vm3621, %v3565, %v3624
        %v3628 = vsel %vm3622, %v3617, %v3625
        %s3629 = smul.u32 %s2034, 3
        %s3630 = smul.addr %s3629, 8
        %s3631 = scalar_lea.vmem %s305, %s3630
        %3632 = vst [vmem:[%s3631] sm:$0xff] %v3626
        %3633 = vst [vmem:[%s3631 + $0x8] sm:$0xff] %v3627
        %3634 = vst [vmem:[%s3631 + $0x10] sm:$0xff] %v3628
      $region71: #{residual_block.1} parent=51 // loop_footer
        %s2038 = sadd.s32 1, %s2034
      $region72: #{residual_block.1} parent=51 // loop_footer_branch
        %2033 = sbr.rel target = $region68
      $region73: #{residual_block.1} parent=51 // loop_exit
        _
      %p3635 = scmp.lt.s32.totalorder %s19, 1
      %s3636 = scalar_select %p3635, %s19, 1
      %s3637 = smul.addr %s3636, 48
      %s3638 = smul.addr %s3637, 8
      %s3639 = scalar_lea.vmem %s8, %s3638
      // Predicated region
      $region74: #{residual_block.1} parent=51 // pred_check
        %p3640 = pneg %p210
      $region75: #{residual_block.1} parent=51 // pred_check_branch
        %3642 = sbr.rel (%p3640) target = $region77
      $region76: #{residual_block.1} parent=51 // pred_region
        _
      $region77: #{residual_block.1} parent=51 // pred_fallthru
        _
    $region52: #{residual_block.1} parent=5 // pred_fallthru
      _
    %p3643 = scmp.le.s32.totalorder 2, %s14
    // Predicated region
    $region78: #{residual_block.1} parent=5 // pred_check
      %p3644 = pneg %p3643
    $region79: #{residual_block.1} parent=5 // pred_check_branch
      %3646 = sbr.rel (%p3644) target = $region81
    $region80: #{residual_block.1} parent=5 // pred_region
      %s3647 = ssub.s32 %s14, 2
      // Predicated region
      $region82: #{residual_block.1} parent=80 // pred_check
        %p3648 = pneg %p216
      $region83: #{residual_block.1} parent=80 // pred_check_branch
        %3650 = sbr.rel (%p3648) target = $region85
      $region84: #{residual_block.1} parent=80 // pred_region
        %p3651 = scmp.lt.s32.totalorder %s20, 1
        %s3652 = scalar_select %p3651, %s20, 1
        %s3653 = smul.addr %s3652, 48
        %s3654 = smul.addr %s3653, 8
        %s3655 = scalar_lea.vmem %s8, %s3654
      $region85: #{residual_block.1} parent=80 // pred_fallthru
        _
    $region81: #{residual_block.1} parent=5 // pred_fallthru
      _
  $region6: #{residual_block.1} parent=0 // loop_footer
    %s18 = sadd.s32 1, %s14
  $region7: #{residual_block.1} parent=0 // loop_footer_branch
    %13 = sbr.rel target = $region3
  $region8: #{residual_block.1} parent=0 // loop_exit
    _

</llo_original>
